<compile_context>
chip_gen: v7x
topology: tpu7x:2x2x1
jax: 0.10.0
libtpu: 0.0.40
codegen_flags: <defaults>
</compile_context>

<pallas_src>
import functools

import jax
import jax.numpy as jnp
from jax.experimental import pallas as pl
from jax.experimental.pallas import tpu as pltpu


LANE = 128                       # TPU lane width; feature dims padded to this
MIN_TILE = 256                   # minimum node tile
MAX_TILE = 1024                  # review: 512-1024 amortizes per-step overhead
XWL_RESIDENT_BYTES = 8 * 1024 * 1024   # keep X@Wl fully VMEM-resident below this
VMEM_LIMIT = 48 * 1024 * 1024    # <= v7x 64 MiB physical, > 32 MiB scoped default


def _round_up(x, m):
    return (x + m - 1) // m * m


# ---------------------------------------------------------------------------
# Pallas kernels
# ---------------------------------------------------------------------------

def _feature_proj_kernel(x_ref, w_ref, o_ref):
    """xw = X @ [Wl | Wr] for the first layer (bf16 in, f32 acc, bf16 out)."""
    o_ref[...] = jnp.dot(x_ref[...], w_ref[...],
                         preferred_element_type=jnp.float32).astype(o_ref.dtype)


def _sage_fused_kernel(a_ref, xwl_ref, xwr_ref, dinv_ref, b_ref, wh_ref, bh_ref,
                       o_ref, acc_ref, *, xwl_resident, tk):
    """One fused SAGEConv layer (+ fused next-layer projection / output head).

    grid = (n_pad // tm  [parallel rows],  n_pad // tk  [contraction, last]).

    a_ref    : (tm, tk) bf16   tile of UNNORMALIZED adjacency edge counts
    xwl_ref  : (n_pad, Hp) or (tk, Hp) bf16  X @ Wl (VMEM-resident / k-sliced)
    xwr_ref  : (tm, Hp) bf16   X @ Wr tile (root branch, row-slice)
    dinv_ref : (tm, 1)  f32    per-row 1/deg (mean normalization)
    b_ref    : (1,  Hp) f32    lin_l bias
    wh_ref   : (Hp, O ) bf16   epilogue weight: next layer's [Wl|Wr] or lin_out
    bh_ref   : (1,  O ) f32    epilogue bias (zeros / lin_out bias)
    o_ref    : (tm, O )        (relu((A@XWl)*dinv + XWr + b)) @ Wh + bh
    acc_ref  : (tm, Hp) f32    VMEM accumulator for the A @ XWl contraction
    """
    k = pl.program_id(1)

    @pl.when(k == 0)
    def _():
        acc_ref[...] = jnp.zeros_like(acc_ref)

    # Steady state: pure bf16 MXU work, f32 accumulation.
    if xwl_resident:
        start = pl.multiple_of(k * tk, tk)
        xwl = xwl_ref[pl.ds(start, tk), :]
    else:
        xwl = xwl_ref[...]
    acc_ref[...] += jnp.dot(a_ref[...], xwl, preferred_element_type=jnp.float32)

    # Epilogue only: mean scale + bias + ReLU + fused bf16 projection / head.
    @pl.when(k == pl.num_programs(1) - 1)
    def _():
        h = jnp.maximum(acc_ref[...] * dinv_ref[...]
                        + xwr_ref[...].astype(jnp.float32) + b_ref[...], 0.0)
        o_ref[...] = (jnp.dot(h.astype(jnp.bfloat16), wh_ref[...],
                              preferred_element_type=jnp.float32)
                      + bh_ref[...]).astype(o_ref.dtype)


# ---------------------------------------------------------------------------
# pallas_call wrappers
# ---------------------------------------------------------------------------

def _feature_projection(x_pad, wcat, tm):
    n_pad, f_pad = x_pad.shape
    out_w = wcat.shape[1]
    return pl.pallas_call(
        _feature_proj_kernel,
        out_shape=jax.ShapeDtypeStruct((n_pad, out_w), jnp.bfloat16),
        grid_spec=pltpu.PrefetchScalarGridSpec(
            num_scalar_prefetch=0,
            grid=(n_pad // tm,),
            in_specs=[pl.BlockSpec((tm, f_pad), lambda i: (i, 0)),
                      pl.BlockSpec((f_pad, out_w), lambda i: (0, 0))],
            out_specs=pl.BlockSpec((tm, out_w), lambda i: (i, 0)),
        ),
        compiler_params=pltpu.CompilerParams(
            dimension_semantics=("parallel",),
            vmem_limit_bytes=VMEM_LIMIT),
        cost_estimate=pl.CostEstimate(
            flops=2 * n_pad * f_pad * out_w,
            transcendentals=0,
            bytes_accessed=2 * (n_pad * f_pad + f_pad * out_w + n_pad * out_w)),
    )(x_pad, wcat)


def _sage_fused_layer(a_bf16, xw, dinv, b_l, w_head, b_head, out_dtype, tm, tk):
    n_pad = a_bf16.shape[0]
    hp = xw.shape[1] // 2
    out_w = w_head.shape[1]

    # Small/medium graphs: keep the whole X@Wl slab resident in VMEM and drop
    # the repeated HBM re-read; large graphs stream (tk, Hp) slices per k.
    xwl_resident = (n_pad * hp * 2) <= XWL_RESIDENT_BYTES
    if xwl_resident:
        xwl_spec = pl.BlockSpec((n_pad, hp), lambda i, k: (0, 0))
        xwl_reads = 1
    else:
        xwl_spec = pl.BlockSpec((tk, hp), lambda i, k: (k, 0))
        xwl_reads = n_pad // tm

    kernel = functools.partial(_sage_fused_kernel,
                               xwl_resident=xwl_resident, tk=tk)
    out_bytes = jnp.dtype(out_dtype).itemsize

    return pl.pallas_call(
        kernel,
        out_shape=jax.ShapeDtypeStruct((n_pad, out_w), out_dtype),
        grid_spec=pltpu.PrefetchScalarGridSpec(
            num_scalar_prefetch=0,
            grid=(n_pad // tm, n_pad // tk),
            in_specs=[
                pl.BlockSpec((tm, tk), lambda i, k: (i, k)),      # A counts tile
                xwl_spec,                                         # X@Wl (neighbor)
                pl.BlockSpec((tm, hp), lambda i, k: (i, 1)),      # X@Wr (root)
                pl.BlockSpec((tm, 1), lambda i, k: (i, 0)),       # 1/deg
                pl.BlockSpec((1, hp), lambda i, k: (0, 0)),       # lin_l bias
                pl.BlockSpec((hp, out_w), lambda i, k: (0, 0)),   # fused head W
                pl.BlockSpec((1, out_w), lambda i, k: (0, 0)),    # fused head b
            ],
            out_specs=pl.BlockSpec((tm, out_w), lambda i, k: (i, 0)),
            scratch_shapes=[pltpu.VMEM((tm, hp), jnp.float32)],
        ),
        compiler_params=pltpu.CompilerParams(
            dimension_semantics=("parallel", "arbitrary"),
            vmem_limit_bytes=VMEM_LIMIT),
        cost_estimate=pl.CostEstimate(
            flops=2 * n_pad * n_pad * hp + 2 * n_pad * hp * out_w,
            transcendentals=0,
            bytes_accessed=(2 * n_pad * n_pad                 # A (bf16)
                            + 2 * n_pad * hp * xwl_reads      # X@Wl re-reads
                            + 2 * n_pad * hp                  # X@Wr
                            + 4 * n_pad                       # 1/deg
                            + 2 * hp * out_w + 4 * hp + 4 * out_w
                            + out_bytes * n_pad * out_w)),
    )(a_bf16, xw, xw, dinv, b_l, w_head, b_head)


# ---------------------------------------------------------------------------
# Model glue
# ---------------------------------------------------------------------------

def build_adjacency_counts(edge_index, num_nodes):
    """Dense unnormalized edge counts + per-row 1/deg (scatter-mean aggr).

    counts[i, j] = (# edges j->i); dinv[i] = 1/max(deg_i, 1) so isolated rows
    aggregate to 0, matching PyG's scatter-mean behavior.
    """
    # TODO(synk): for large sparse graphs replace the dense A @ (X@Wl) matmul
    # with a scalar-prefetch CSR gather kernel (O(E*H) instead of O(N^2*H)).
    src = edge_index[0]
    dst = edge_index[1]
    counts = jnp.zeros((num_nodes, num_nodes), jnp.float32).at[dst, src].add(1.0)
    deg = counts.sum(axis=1, keepdims=True)
    dinv = 1.0 / jnp.maximum(deg, 1.0)
    return counts, dinv


def init_params(key, input_size, hidden_size, output_size, num_layers):
    """Deterministic synthetic parameters (uniform fan-in init, like torch)."""
    params = {"convs": []}
    for l in range(num_layers):
        in_size = input_size if l == 0 else hidden_size
        key, k1, k2, k3 = jax.random.split(key, 4)
        bound = 1.0 / jnp.sqrt(jnp.float32(in_size))
        params["convs"].append({
            # stored pre-transposed: (in, out)
            "w_l": jax.random.uniform(k1, (in_size, hidden_size), jnp.float32,
                                      -bound, bound),
            "w_r": jax.random.uniform(k2, (in_size, hidden_size), jnp.float32,
                                      -bound, bound),
            "b_l": jax.random.uniform(k3, (1, hidden_size), jnp.float32,
                                      -bound, bound),
        })
    key, k1, k2 = jax.random.split(key, 3)
    bound = 1.0 / jnp.sqrt(jnp.float32(hidden_size))
    params["lin_out_w"] = jax.random.uniform(k1, (hidden_size, output_size),
                                             jnp.float32, -bound, bound)
    params["lin_out_b"] = jax.random.uniform(k2, (1, output_size),
                                             jnp.float32, -bound, bound)
    return params


def gnn_sage_forward(params, x, edge_index):
    n, f_in = x.shape
    hidden = params["convs"][0]["w_l"].shape[1]
    out_dim = params["lin_out_w"].shape[1]

    tm = tk = min(MAX_TILE, _round_up(n, MIN_TILE))
    n_pad = _round_up(n, tm)
    f_pad = _round_up(f_in, LANE)
    hp = _round_up(hidden, LANE)
    op = _round_up(out_dim, LANE)

    # Dense aggregation operator: bf16 edge COUNTS (exact), reused by all
    # layers; f32 1/deg applied in the epilogue keeps mean precision exact.
    counts, dinv = build_adjacency_counts(edge_index, n)
    a_pad = jnp.pad(counts, ((0, n_pad - n), (0, n_pad - n))).astype(jnp.bfloat16)
    dinv_pad = jnp.pad(dinv, ((0, n_pad - n), (0, 0)), constant_values=1.0)

    x_pad = jnp.pad(x.astype(jnp.float32),
                    ((0, n_pad - n), (0, f_pad - f_in))).astype(jnp.bfloat16)

    # Per-layer padded parameters: wcat = [Wl | Wr] in bf16, biases f32.
    wcats, biases = [], []
    for l, conv in enumerate(params["convs"]):
        in_dim = conv["w_l"].shape[0]
        in_pad = f_pad if l == 0 else hp
        wcat = jnp.zeros((in_pad, 2 * hp), jnp.float32)
        wcat = wcat.at[:in_dim, :hidden].set(conv["w_l"])
        wcat = wcat.at[:in_dim, hp:hp + hidden].set(conv["w_r"])
        wcats.append(wcat.astype(jnp.bfloat16))
        biases.append(
            jnp.zeros((1, hp), jnp.float32).at[:, :hidden].set(conv["b_l"]))

    w_out = jnp.zeros((hp, op), jnp.float32).at[:hidden, :out_dim].set(
        params["lin_out_w"]).astype(jnp.bfloat16)
    b_out = jnp.zeros((1, op), jnp.float32).at[:, :out_dim].set(
        params["lin_out_b"])

    num_layers = len(wcats)
    # xw_0 = X @ [Wl_0 | Wr_0]  (single lane-dense bf16 MXU pass over X)
    xw = _feature_projection(x_pad, wcats[0], tm)
    for l in range(num_layers):
        if l + 1 < num_layers:
            # fuse the NEXT layer's [Wl|Wr] projection into this epilogue
            w_head = wcats[l + 1]
            b_head = jnp.zeros((1, 2 * hp), jnp.float32)
            out_dtype = jnp.bfloat16           # inter-layer activation in bf16
        else:
            # last layer: fuse the output Linear head; f32 output
            w_head, b_head, out_dtype = w_out, b_out, jnp.float32
        xw = _sage_fused_layer(a_pad, xw, dinv_pad, biases[l], w_head, b_head,
                               out_dtype, tm, tk)

    # x = x.to(torch.float32) — final output already f32. Slice off padding.
    return xw[:n, :out_dim]


# ---------------------------------------------------------------------------
# Demo
# ---------------------------------------------------------------------------

if __name__ == "__main__":
    NUM_NODES = 32
    NUM_EDGES = 96
    INPUT_SIZE = 16
    HIDDEN_SIZE = 32
    OUTPUT_SIZE = 8
    NUM_LAYERS = 2

    root = jax.random.PRNGKey(0)
    k_x, k_src, k_dst, k_params = jax.random.split(root, 4)

    x = jax.random.normal(k_x, (NUM_NODES, INPUT_SIZE), jnp.float32)
    edge_index = jnp.stack([
        jax.random.randint(k_src, (NUM_EDGES,), 0, NUM_NODES, dtype=jnp.int32),
        jax.random.randint(k_dst, (NUM_EDGES,), 0, NUM_NODES, dtype=jnp.int32),
    ], axis=0)

    params = init_params(k_params, INPUT_SIZE, HIDDEN_SIZE, OUTPUT_SIZE,
                         NUM_LAYERS)

    fwd = jax.jit(gnn_sage_forward)
    out = fwd(params, x, edge_index)
    jax.block_until_ready(out)

    # Pure-JAX reference mirroring the kernel numerics (bf16 adjacency counts,
    # bf16 activations/weights, f32 accumulation, f32 1/deg in the epilogue).
    counts_ref, dinv_ref = build_adjacency_counts(edge_index, NUM_NODES)
    a_bf = counts_ref.astype(jnp.bfloat16)
    convs = params["convs"]
    xb = x.astype(jnp.bfloat16)
    xwl = jnp.dot(xb, convs[0]["w_l"].astype(jnp.bfloat16),
                  preferred_element_type=jnp.float32).astype(jnp.bfloat16)
    xwr = jnp.dot(xb, convs[0]["w_r"].astype(jnp.bfloat16),
                  preferred_element_type=jnp.float32).astype(jnp.bfloat16)
    ref = None
    for l, conv in enumerate(convs):
        agg = jnp.dot(a_bf, xwl, preferred_element_type=jnp.float32) * dinv_ref
        h = jnp.maximum(agg + xwr.astype(jnp.float32) + conv["b_l"], 0.0)
        hb = h.astype(jnp.bfloat16)
        if l + 1 < len(convs):
            nxt = convs[l + 1]
            xwl = jnp.dot(hb, nxt["w_l"].astype(jnp.bfloat16),
                          preferred_element_type=jnp.float32).astype(jnp.bfloat16)
            xwr = jnp.dot(hb, nxt["w_r"].astype(jnp.bfloat16),
                          preferred_element_type=jnp.float32).astype(jnp.bfloat16)
        else:
            ref = jnp.dot(hb, params["lin_out_w"].astype(jnp.bfloat16),
                          preferred_element_type=jnp.float32) + params["lin_out_b"]

    assert out.shape == (NUM_NODES, OUTPUT_SIZE)
    assert jnp.allclose(out, ref, atol=2e-2, rtol=2e-2), float(
        jnp.max(jnp.abs(out - ref)))

    print("KERNEL_OK")
</pallas_src>

<mosaic_0001>
module attributes {stable_mosaic.version = 11 : i64} {
  func.func private @main(%arg0: i32) attributes {dimension_semantics = [#tpu.dimension_semantics<core_parallel>], iteration_bounds = array<i64: 2>, tpu.core_type = #tpu.core_type<sc_scalar_subcore>, window_params = []} {
    return
  }
}

module attributes {stable_mosaic.version = 11 : i64} {
  func.func private @main(%arg0: i32) attributes {dimension_semantics = [#tpu.dimension_semantics<core_parallel>], iteration_bounds = array<i64: 2>, tpu.core_type = #tpu.core_type<sc_scalar_subcore>, window_params = []} {
    return
  }
}

module attributes {stable_mosaic.version = 11 : i64} {
  func.func @_feature_proj_kernel(%arg0: i32, %arg1: memref<256x128xbf16, #tpu.memory_space<vmem>>, %arg2: memref<128x256xbf16, #tpu.memory_space<vmem>>, %arg3: memref<256x256xbf16, #tpu.memory_space<vmem>>) attributes {dimension_semantics = [#tpu.dimension_semantics<parallel>], iteration_bounds = array<i64: 1>, scalar_prefetch = 0 : i64, scratch_operands = 0 : i64, tpu.core_type = #tpu.core_type<tc>, window_params = [{transform_indices = @transform_0, window_bounds = array<i64: 256, 128>}, {pipeline_mode = #tpu.pipeline_mode<synchronous>, transform_indices = @transform_1, window_bounds = array<i64: 128, 256>}, {transform_indices = @transform_2, window_bounds = array<i64: 256, 256>}]} {
    %c0 = arith.constant 0 : index
    %c0_0 = arith.constant 0 : index
    %0 = vector.load %arg1[%c0, %c0_0] : memref<256x128xbf16, #tpu.memory_space<vmem>>, vector<256x128xbf16>
    %c0_1 = arith.constant 0 : index
    %c0_2 = arith.constant 0 : index
    %1 = vector.load %arg2[%c0_1, %c0_2] : memref<128x256xbf16, #tpu.memory_space<vmem>>, vector<128x256xbf16>
    %cst = arith.constant dense<0.000000e+00> : vector<256x256xf32>
    %2 = tpu.matmul %0, %1, %cst {dimension_numbers = #tpu.dot_dimension_numbers<[1], [0], [0], [1], [0, 0, 1, 1], [], []>} : vector<256x128xbf16>, vector<128x256xbf16>, vector<256x256xf32> -> vector<256x256xf32>
    %3 = arith.truncf %2 : vector<256x256xf32> to vector<256x256xbf16>
    %c0_3 = arith.constant 0 : index
    %c0_4 = arith.constant 0 : index
    %4 = vector.load %arg3[%c0_3, %c0_4] : memref<256x256xbf16, #tpu.memory_space<vmem>>, vector<256x256xbf16>
    tpu.vector_store %arg3[%c0_3, %c0_4], %3 {strides = array<i32>} : memref<256x256xbf16, #tpu.memory_space<vmem>>, vector<256x256xbf16>,
    return
  }
  func.func @transform_0(%arg0: i32) -> (i32, i32) {
    %c0_i32 = arith.constant 0 : i32
    %c0_i32_0 = arith.constant 0 : i32
    return %arg0, %c0_i32 : i32, i32
  }
  func.func @transform_1(%arg0: i32) -> (i32, i32) {
    %c0_i32 = arith.constant 0 : i32
    %c0_i32_0 = arith.constant 0 : i32
    %c0_i32_1 = arith.constant 0 : i32
    return %c0_i32, %c0_i32_0 : i32, i32
  }
  func.func @transform_2(%arg0: i32) -> (i32, i32) {
    %c0_i32 = arith.constant 0 : i32
    %c0_i32_0 = arith.constant 0 : i32
    return %arg0, %c0_i32 : i32, i32
  }
}

module attributes {stable_mosaic.version = 11 : i64} {
  func.func @_sage_fused_kernel(%arg0: i32, %arg1: i32, %arg2: memref<256x256xbf16, #tpu.memory_space<vmem>>, %arg3: memref<256x128xbf16, #tpu.memory_space<vmem>>, %arg4: memref<256x128xbf16, #tpu.memory_space<vmem>>, %arg5: memref<256x1xf32, #tpu.memory_space<vmem>>, %arg6: memref<1x128xf32, #tpu.memory_space<vmem>>, %arg7: memref<128x128xbf16, #tpu.memory_space<vmem>>, %arg8: memref<1x128xf32, #tpu.memory_space<vmem>>, %arg9: memref<256x128xf32, #tpu.memory_space<vmem>>, %arg10: memref<256x128xf32, #tpu.memory_space<vmem>>) attributes {dimension_semantics = [#tpu.dimension_semantics<parallel>, #tpu.dimension_semantics<arbitrary>], iteration_bounds = array<i64: 1, 1>, scalar_prefetch = 0 : i64, scratch_operands = 1 : i64, tpu.core_type = #tpu.core_type<tc>, window_params = [{transform_indices = @transform_0, window_bounds = array<i64: 256, 256>}, {transform_indices = @transform_1, window_bounds = array<i64: 256, 128>}, {transform_indices = @transform_2, window_bounds = array<i64: 256, 128>}, {transform_indices = @transform_3, window_bounds = array<i64: 256, 1>}, {pipeline_mode = #tpu.pipeline_mode<synchronous>, transform_indices = @transform_4, window_bounds = array<i64: 1, 128>}, {pipeline_mode = #tpu.pipeline_mode<synchronous>, transform_indices = @transform_5, window_bounds = array<i64: 128, 128>}, {pipeline_mode = #tpu.pipeline_mode<synchronous>, transform_indices = @transform_6, window_bounds = array<i64: 1, 128>}, {transform_indices = @transform_7, window_bounds = array<i64: 256, 128>}]} {
    %c0_i32 = arith.constant 0 : i32
    %0 = arith.cmpi eq, %arg1, %c0_i32 : i32
    %1 = arith.extui %0 : i1 to i32
    %c0_i32_0 = arith.constant 0 : i32
    %2 = arith.cmpi ne, %1, %c0_i32_0 : i32
    scf.if %2 {
      %cst_9 = arith.constant 0.000000e+00 : f32
      %15 = vector.broadcast %cst_9 : f32 to vector<256x128xf32>
      %c0_10 = arith.constant 0 : index
      %c0_11 = arith.constant 0 : index
      %16 = vector.load %arg10[%c0_10, %c0_11] : memref<256x128xf32, #tpu.memory_space<vmem>>, vector<256x128xf32>
      tpu.vector_store %arg10[%c0_10, %c0_11], %15 {strides = array<i32>} : memref<256x128xf32, #tpu.memory_space<vmem>>, vector<256x128xf32>,
    } else {
    }
    %c256_i32 = arith.constant 256 : i32
    %3 = arith.muli %arg1, %c256_i32 : i32
    %4 = tpu.assume_multiple %3, 256 : i32
    %5 = arith.index_cast %4 : i32 to index
    %c0 = arith.constant 0 : index
    %6 = vector.load %arg3[%5, %c0] : memref<256x128xbf16, #tpu.memory_space<vmem>>, vector<256x128xbf16>
    %c0_1 = arith.constant 0 : index
    %c0_2 = arith.constant 0 : index
    %7 = vector.load %arg10[%c0_1, %c0_2] : memref<256x128xf32, #tpu.memory_space<vmem>>, vector<256x128xf32>
    %c0_3 = arith.constant 0 : index
    %c0_4 = arith.constant 0 : index
    %8 = vector.load %arg2[%c0_3, %c0_4] : memref<256x256xbf16, #tpu.memory_space<vmem>>, vector<256x256xbf16>
    %cst = arith.constant dense<0.000000e+00> : vector<256x128xf32>
    %9 = tpu.matmul %8, %6, %cst {dimension_numbers = #tpu.dot_dimension_numbers<[1], [0], [0], [1], [0, 0, 1, 1], [], []>} : vector<256x256xbf16>, vector<256x128xbf16>, vector<256x128xf32> -> vector<256x128xf32>
    %10 = arith.addf %7, %9 : vector<256x128xf32>
    %c0_5 = arith.constant 0 : index
    %c0_6 = arith.constant 0 : index
    %11 = vector.load %arg10[%c0_5, %c0_6] : memref<256x128xf32, #tpu.memory_space<vmem>>, vector<256x128xf32>
    tpu.vector_store %arg10[%c0_5, %c0_6], %10 {strides = array<i32>} : memref<256x128xf32, #tpu.memory_space<vmem>>, vector<256x128xf32>,
    %c0_i32_7 = arith.constant 0 : i32
    %12 = arith.cmpi eq, %arg1, %c0_i32_7 : i32
    %13 = arith.extui %12 : i1 to i32
    %c0_i32_8 = arith.constant 0 : i32
    %14 = arith.cmpi ne, %13, %c0_i32_8 : i32
    scf.if %14 {
      %c0_9 = arith.constant 0 : index
      %c0_10 = arith.constant 0 : index
      %15 = vector.load %arg10[%c0_9, %c0_10] : memref<256x128xf32, #tpu.memory_space<vmem>>, vector<256x128xf32>
      %c0_11 = arith.constant 0 : index
      %c0_12 = arith.constant 0 : index
      %16 = vector.load %arg5[%c0_11, %c0_12] : memref<256x1xf32, #tpu.memory_space<vmem>>, vector<256x1xf32>
      %17 = vector.broadcast %16 : vector<256x1xf32> to vector<256x128xf32>
      %18 = arith.mulf %15, %17 : vector<256x128xf32>
      %c0_13 = arith.constant 0 : index
      %c0_14 = arith.constant 0 : index
      %19 = vector.load %arg4[%c0_13, %c0_14] : memref<256x128xbf16, #tpu.memory_space<vmem>>, vector<256x128xbf16>
      %20 = arith.extf %19 : vector<256x128xbf16> to vector<256x128xf32>
      %21 = arith.addf %18, %20 : vector<256x128xf32>
      %c0_15 = arith.constant 0 : index
      %c0_16 = arith.constant 0 : index
      %22 = vector.load %arg6[%c0_15, %c0_16] : memref<1x128xf32, #tpu.memory_space<vmem>>, vector<1x128xf32>
      %23 = vector.broadcast %22 : vector<1x128xf32> to vector<256x128xf32>
      %24 = arith.addf %21, %23 : vector<256x128xf32>
      %cst_17 = arith.constant 0.000000e+00 : f32
      %25 = vector.broadcast %cst_17 : f32 to vector<256x128xf32>
      %26 = arith.maximumf %24, %25 : vector<256x128xf32>
      %27 = arith.truncf %26 : vector<256x128xf32> to vector<256x128xbf16>
      %c0_18 = arith.constant 0 : index
      %c0_19 = arith.constant 0 : index
      %28 = vector.load %arg7[%c0_18, %c0_19] : memref<128x128xbf16, #tpu.memory_space<vmem>>, vector<128x128xbf16>
      %cst_20 = arith.constant dense<0.000000e+00> : vector<256x128xf32>
      %29 = tpu.matmul %27, %28, %cst_20 {dimension_numbers = #tpu.dot_dimension_numbers<[1], [0], [0], [1], [0, 0, 1, 1], [], []>} : vector<256x128xbf16>, vector<128x128xbf16>, vector<256x128xf32> -> vector<256x128xf32>
      %c0_21 = arith.constant 0 : index
      %c0_22 = arith.constant 0 : index
      %30 = vector.load %arg8[%c0_21, %c0_22] : memref<1x128xf32, #tpu.memory_space<vmem>>, vector<1x128xf32>
      %31 = vector.broadcast %30 : vector<1x128xf32> to vector<256x128xf32>
      %32 = arith.addf %29, %31 : vector<256x128xf32>
      %c0_23 = arith.constant 0 : index
      %c0_24 = arith.constant 0 : index
      %33 = vector.load %arg9[%c0_23, %c0_24] : memref<256x128xf32, #tpu.memory_space<vmem>>, vector<256x128xf32>
      tpu.vector_store %arg9[%c0_23, %c0_24], %32 {strides = array<i32>} : memref<256x128xf32, #tpu.memory_space<vmem>>, vector<256x128xf32>,
    } else {
    }
    return
  }
  func.func @transform_0(%arg0: i32, %arg1: i32) -> (i32, i32) {
    %c0_i32 = arith.constant 0 : i32
    return %arg0, %arg1 : i32, i32
  }
  func.func @transform_1(%arg0: i32, %arg1: i32) -> (i32, i32) {
    %c0_i32 = arith.constant 0 : i32
    %c0_i32_0 = arith.constant 0 : i32
    %c0_i32_1 = arith.constant 0 : i32
    return %c0_i32, %c0_i32_0 : i32, i32
  }
  func.func @transform_2(%arg0: i32, %arg1: i32) -> (i32, i32) {
    %c1_i32 = arith.constant 1 : i32
    %c0_i32 = arith.constant 0 : i32
    return %arg0, %c1_i32 : i32, i32
  }
  func.func @transform_3(%arg0: i32, %arg1: i32) -> (i32, i32) {
    %c0_i32 = arith.constant 0 : i32
    %c0_i32_0 = arith.constant 0 : i32
    return %arg0, %c0_i32 : i32, i32
  }
  func.func @transform_4(%arg0: i32, %arg1: i32) -> (i32, i32) {
    %c0_i32 = arith.constant 0 : i32
    %c0_i32_0 = arith.constant 0 : i32
    %c0_i32_1 = arith.constant 0 : i32
    return %c0_i32, %c0_i32_0 : i32, i32
  }
  func.func @transform_5(%arg0: i32, %arg1: i32) -> (i32, i32) {
    %c0_i32 = arith.constant 0 : i32
    %c0_i32_0 = arith.constant 0 : i32
    %c0_i32_1 = arith.constant 0 : i32
    return %c0_i32, %c0_i32_0 : i32, i32
  }
  func.func @transform_6(%arg0: i32, %arg1: i32) -> (i32, i32) {
    %c0_i32 = arith.constant 0 : i32
    %c0_i32_0 = arith.constant 0 : i32
    %c0_i32_1 = arith.constant 0 : i32
    return %c0_i32, %c0_i32_0 : i32, i32
  }
  func.func @transform_7(%arg0: i32, %arg1: i32) -> (i32, i32) {
    %c0_i32 = arith.constant 0 : i32
    %c0_i32_0 = arith.constant 0 : i32
    return %arg0, %c0_i32 : i32, i32
  }
}

module attributes {stable_mosaic.version = 11 : i64} {
  func.func @_sage_fused_kernel(%arg0: i32, %arg1: i32, %arg2: memref<256x256xbf16, #tpu.memory_space<vmem>>, %arg3: memref<256x128xbf16, #tpu.memory_space<vmem>>, %arg4: memref<256x128xbf16, #tpu.memory_space<vmem>>, %arg5: memref<256x1xf32, #tpu.memory_space<vmem>>, %arg6: memref<1x128xf32, #tpu.memory_space<vmem>>, %arg7: memref<128x256xbf16, #tpu.memory_space<vmem>>, %arg8: memref<1x256xf32, #tpu.memory_space<vmem>>, %arg9: memref<256x256xbf16, #tpu.memory_space<vmem>>, %arg10: memref<256x128xf32, #tpu.memory_space<vmem>>) attributes {dimension_semantics = [#tpu.dimension_semantics<parallel>, #tpu.dimension_semantics<arbitrary>], iteration_bounds = array<i64: 1, 1>, scalar_prefetch = 0 : i64, scratch_operands = 1 : i64, tpu.core_type = #tpu.core_type<tc>, window_params = [{transform_indices = @transform_0, window_bounds = array<i64: 256, 256>}, {transform_indices = @transform_1, window_bounds = array<i64: 256, 128>}, {transform_indices = @transform_2, window_bounds = array<i64: 256, 128>}, {transform_indices = @transform_3, window_bounds = array<i64: 256, 1>}, {pipeline_mode = #tpu.pipeline_mode<synchronous>, transform_indices = @transform_4, window_bounds = array<i64: 1, 128>}, {pipeline_mode = #tpu.pipeline_mode<synchronous>, transform_indices = @transform_5, window_bounds = array<i64: 128, 256>}, {pipeline_mode = #tpu.pipeline_mode<synchronous>, transform_indices = @transform_6, window_bounds = array<i64: 1, 256>}, {transform_indices = @transform_7, window_bounds = array<i64: 256, 256>}]} {
    %c0_i32 = arith.constant 0 : i32
    %0 = arith.cmpi eq, %arg1, %c0_i32 : i32
    %1 = arith.extui %0 : i1 to i32
    %c0_i32_0 = arith.constant 0 : i32
    %2 = arith.cmpi ne, %1, %c0_i32_0 : i32
    scf.if %2 {
      %cst_9 = arith.constant 0.000000e+00 : f32
      %15 = vector.broadcast %cst_9 : f32 to vector<256x128xf32>
      %c0_10 = arith.constant 0 : index
      %c0_11 = arith.constant 0 : index
      %16 = vector.load %arg10[%c0_10, %c0_11] : memref<256x128xf32, #tpu.memory_space<vmem>>, vector<256x128xf32>
      tpu.vector_store %arg10[%c0_10, %c0_11], %15 {strides = array<i32>} : memref<256x128xf32, #tpu.memory_space<vmem>>, vector<256x128xf32>,
    } else {
    }
    %c256_i32 = arith.constant 256 : i32
    %3 = arith.muli %arg1, %c256_i32 : i32
    %4 = tpu.assume_multiple %3, 256 : i32
    %5 = arith.index_cast %4 : i32 to index
    %c0 = arith.constant 0 : index
    %6 = vector.load %arg3[%5, %c0] : memref<256x128xbf16, #tpu.memory_space<vmem>>, vector<256x128xbf16>
    %c0_1 = arith.constant 0 : index
    %c0_2 = arith.constant 0 : index
    %7 = vector.load %arg10[%c0_1, %c0_2] : memref<256x128xf32, #tpu.memory_space<vmem>>, vector<256x128xf32>
    %c0_3 = arith.constant 0 : index
    %c0_4 = arith.constant 0 : index
    %8 = vector.load %arg2[%c0_3, %c0_4] : memref<256x256xbf16, #tpu.memory_space<vmem>>, vector<256x256xbf16>
    %cst = arith.constant dense<0.000000e+00> : vector<256x128xf32>
    %9 = tpu.matmul %8, %6, %cst {dimension_numbers = #tpu.dot_dimension_numbers<[1], [0], [0], [1], [0, 0, 1, 1], [], []>} : vector<256x256xbf16>, vector<256x128xbf16>, vector<256x128xf32> -> vector<256x128xf32>
    %10 = arith.addf %7, %9 : vector<256x128xf32>
    %c0_5 = arith.constant 0 : index
    %c0_6 = arith.constant 0 : index
    %11 = vector.load %arg10[%c0_5, %c0_6] : memref<256x128xf32, #tpu.memory_space<vmem>>, vector<256x128xf32>
    tpu.vector_store %arg10[%c0_5, %c0_6], %10 {strides = array<i32>} : memref<256x128xf32, #tpu.memory_space<vmem>>, vector<256x128xf32>,
    %c0_i32_7 = arith.constant 0 : i32
    %12 = arith.cmpi eq, %arg1, %c0_i32_7 : i32
    %13 = arith.extui %12 : i1 to i32
    %c0_i32_8 = arith.constant 0 : i32
    %14 = arith.cmpi ne, %13, %c0_i32_8 : i32
    scf.if %14 {
      %c0_9 = arith.constant 0 : index
      %c0_10 = arith.constant 0 : index
      %15 = vector.load %arg10[%c0_9, %c0_10] : memref<256x128xf32, #tpu.memory_space<vmem>>, vector<256x128xf32>
      %c0_11 = arith.constant 0 : index
      %c0_12 = arith.constant 0 : index
      %16 = vector.load %arg5[%c0_11, %c0_12] : memref<256x1xf32, #tpu.memory_space<vmem>>, vector<256x1xf32>
      %17 = vector.broadcast %16 : vector<256x1xf32> to vector<256x128xf32>
      %18 = arith.mulf %15, %17 : vector<256x128xf32>
      %c0_13 = arith.constant 0 : index
      %c0_14 = arith.constant 0 : index
      %19 = vector.load %arg4[%c0_13, %c0_14] : memref<256x128xbf16, #tpu.memory_space<vmem>>, vector<256x128xbf16>
      %20 = arith.extf %19 : vector<256x128xbf16> to vector<256x128xf32>
      %21 = arith.addf %18, %20 : vector<256x128xf32>
      %c0_15 = arith.constant 0 : index
      %c0_16 = arith.constant 0 : index
      %22 = vector.load %arg6[%c0_15, %c0_16] : memref<1x128xf32, #tpu.memory_space<vmem>>, vector<1x128xf32>
      %23 = vector.broadcast %22 : vector<1x128xf32> to vector<256x128xf32>
      %24 = arith.addf %21, %23 : vector<256x128xf32>
      %cst_17 = arith.constant 0.000000e+00 : f32
      %25 = vector.broadcast %cst_17 : f32 to vector<256x128xf32>
      %26 = arith.maximumf %24, %25 : vector<256x128xf32>
      %27 = arith.truncf %26 : vector<256x128xf32> to vector<256x128xbf16>
      %c0_18 = arith.constant 0 : index
      %c0_19 = arith.constant 0 : index
      %28 = vector.load %arg7[%c0_18, %c0_19] : memref<128x256xbf16, #tpu.memory_space<vmem>>, vector<128x256xbf16>
      %cst_20 = arith.constant dense<0.000000e+00> : vector<256x256xf32>
      %29 = tpu.matmul %27, %28, %cst_20 {dimension_numbers = #tpu.dot_dimension_numbers<[1], [0], [0], [1], [0, 0, 1, 1], [], []>} : vector<256x128xbf16>, vector<128x256xbf16>, vector<256x256xf32> -> vector<256x256xf32>
      %c0_21 = arith.constant 0 : index
      %c0_22 = arith.constant 0 : index
      %30 = vector.load %arg8[%c0_21, %c0_22] : memref<1x256xf32, #tpu.memory_space<vmem>>, vector<1x256xf32>
      %31 = vector.broadcast %30 : vector<1x256xf32> to vector<256x256xf32>
      %32 = arith.addf %29, %31 : vector<256x256xf32>
      %33 = arith.truncf %32 : vector<256x256xf32> to vector<256x256xbf16>
      %c0_23 = arith.constant 0 : index
      %c0_24 = arith.constant 0 : index
      %34 = vector.load %arg9[%c0_23, %c0_24] : memref<256x256xbf16, #tpu.memory_space<vmem>>, vector<256x256xbf16>
      tpu.vector_store %arg9[%c0_23, %c0_24], %33 {strides = array<i32>} : memref<256x256xbf16, #tpu.memory_space<vmem>>, vector<256x256xbf16>,
    } else {
    }
    return
  }
  func.func @transform_0(%arg0: i32, %arg1: i32) -> (i32, i32) {
    %c0_i32 = arith.constant 0 : i32
    return %arg0, %arg1 : i32, i32
  }
  func.func @transform_1(%arg0: i32, %arg1: i32) -> (i32, i32) {
    %c0_i32 = arith.constant 0 : i32
    %c0_i32_0 = arith.constant 0 : i32
    %c0_i32_1 = arith.constant 0 : i32
    return %c0_i32, %c0_i32_0 : i32, i32
  }
  func.func @transform_2(%arg0: i32, %arg1: i32) -> (i32, i32) {
    %c1_i32 = arith.constant 1 : i32
    %c0_i32 = arith.constant 0 : i32
    return %arg0, %c1_i32 : i32, i32
  }
  func.func @transform_3(%arg0: i32, %arg1: i32) -> (i32, i32) {
    %c0_i32 = arith.constant 0 : i32
    %c0_i32_0 = arith.constant 0 : i32
    return %arg0, %c0_i32 : i32, i32
  }
  func.func @transform_4(%arg0: i32, %arg1: i32) -> (i32, i32) {
    %c0_i32 = arith.constant 0 : i32
    %c0_i32_0 = arith.constant 0 : i32
    %c0_i32_1 = arith.constant 0 : i32
    return %c0_i32, %c0_i32_0 : i32, i32
  }
  func.func @transform_5(%arg0: i32, %arg1: i32) -> (i32, i32) {
    %c0_i32 = arith.constant 0 : i32
    %c0_i32_0 = arith.constant 0 : i32
    %c0_i32_1 = arith.constant 0 : i32
    return %c0_i32, %c0_i32_0 : i32, i32
  }
  func.func @transform_6(%arg0: i32, %arg1: i32) -> (i32, i32) {
    %c0_i32 = arith.constant 0 : i32
    %c0_i32_0 = arith.constant 0 : i32
    %c0_i32_1 = arith.constant 0 : i32
    return %c0_i32, %c0_i32_0 : i32, i32
  }
  func.func @transform_7(%arg0: i32, %arg1: i32) -> (i32, i32) {
    %c0_i32 = arith.constant 0 : i32
    %c0_i32_0 = arith.constant 0 : i32
    return %arg0, %c0_i32 : i32, i32
  }
}

</mosaic_0001>

<llo_original>
// kernel: gnn_sage_forward.3
$region0: #{gnn_sage_forward.3}
  #allocation0 [shape = 'u32[]', space=smem, size = 0x4, offset = 0x4, fixed_abs, tag = 'smem constant byte address 0x4 - core index']
  #allocation1 [shape = 'u32[144,128]{1,0:T(1,128)}', space=vmem, size = 0x12000, scoped, tag = 'internal scratch']
  %s0 = inlined_call_operand.vmem [shape: bf16[256,128], index: 0, kind: input, shape index: {}]
  %s1 = inlined_call_operand.vmem [shape: bf16[128,256], index: 1, kind: input, shape index: {}]
  %s2 = inlined_call_operand.vmem [shape: bf16[256,256], index: 2, kind: output, shape index: {}]
  %s3 = sld [smem:[#allocation0]]
  $region18: #{gnn_sage_forward.3} parent=0
    _
  %s5 = ssub.s32 1, %s3
  %s6 = scalar_select 0, %s5, %s3
  // Predicated region
  $region2: #{gnn_sage_forward.3} parent=0 // pred_check
    _
  $region3: #{gnn_sage_forward.3} parent=0 // pred_check_branch
    %8 = sbr.rel (0) target = $region5
  $region4: #{gnn_sage_forward.3} parent=0 // pred_region
    _
  $region5: #{gnn_sage_forward.3} parent=0 // pred_fallthru
    _
  // Predicated region
  $region6: #{gnn_sage_forward.3} parent=0 // pred_check
    _
  $region7: #{gnn_sage_forward.3} parent=0 // pred_check_branch
    %10 = sbr.rel (0) target = $region9
  $region8: #{gnn_sage_forward.3} parent=0 // pred_region
    _
  $region9: #{gnn_sage_forward.3} parent=0 // pred_fallthru
    _
  %v12 = vld [vmem:[%s0] sm:$0xf]
  %v13 = vld [vmem:[%s0 + $0x4] sm:$0xf]
  %v14 = vld [vmem:[%s0 + $0x8] sm:$0xf]
  %v15 = vld [vmem:[%s0 + $0xc] sm:$0xf]
  %v16 = vld [vmem:[%s0 + $0x10] sm:$0xf]
  %v17 = vld [vmem:[%s0 + $0x14] sm:$0xf]
  %v18 = vld [vmem:[%s0 + $0x18] sm:$0xf]
  %v19 = vld [vmem:[%s0 + $0x1c] sm:$0xf]
  %v20 = vld [vmem:[%s0 + $0x20] sm:$0xf]
  %v21 = vld [vmem:[%s0 + $0x24] sm:$0xf]
  %v22 = vld [vmem:[%s0 + $0x28] sm:$0xf]
  %v23 = vld [vmem:[%s0 + $0x2c] sm:$0xf]
  %v24 = vld [vmem:[%s0 + $0x30] sm:$0xf]
  %v25 = vld [vmem:[%s0 + $0x34] sm:$0xf]
  %v26 = vld [vmem:[%s0 + $0x38] sm:$0xf]
  %v27 = vld [vmem:[%s0 + $0x3c] sm:$0xf]
  %v28 = vld [vmem:[%s0 + $0x40] sm:$0xf]
  %v29 = vld [vmem:[%s0 + $0x44] sm:$0xf]
  %v30 = vld [vmem:[%s0 + $0x48] sm:$0xf]
  %v31 = vld [vmem:[%s0 + $0x4c] sm:$0xf]
  %v32 = vld [vmem:[%s0 + $0x50] sm:$0xf]
  %v33 = vld [vmem:[%s0 + $0x54] sm:$0xf]
  %v34 = vld [vmem:[%s0 + $0x58] sm:$0xf]
  %v35 = vld [vmem:[%s0 + $0x5c] sm:$0xf]
  %v36 = vld [vmem:[%s0 + $0x60] sm:$0xf]
  %v37 = vld [vmem:[%s0 + $0x64] sm:$0xf]
  %v38 = vld [vmem:[%s0 + $0x68] sm:$0xf]
  %v39 = vld [vmem:[%s0 + $0x6c] sm:$0xf]
  %v40 = vld [vmem:[%s0 + $0x70] sm:$0xf]
  %v41 = vld [vmem:[%s0 + $0x74] sm:$0xf]
  %v42 = vld [vmem:[%s0 + $0x78] sm:$0xf]
  %v43 = vld [vmem:[%s0 + $0x7c] sm:$0xf]
  %v44 = vld [vmem:[%s1] sm:$0xff]
  %v45 = vld [vmem:[%s1 + $0x8] sm:$0xff]
  %v46 = vld [vmem:[%s1 + $0x10] sm:$0xff]
  %v47 = vld [vmem:[%s1 + $0x18] sm:$0xff]
  %v48 = vld [vmem:[%s1 + $0x20] sm:$0xff]
  %v49 = vld [vmem:[%s1 + $0x28] sm:$0xff]
  %v50 = vld [vmem:[%s1 + $0x30] sm:$0xff]
  %v51 = vld [vmem:[%s1 + $0x38] sm:$0xff]
  %v52 = vld [vmem:[%s1 + $0x40] sm:$0xff]
  %v53 = vld [vmem:[%s1 + $0x48] sm:$0xff]
  %v54 = vld [vmem:[%s1 + $0x50] sm:$0xff]
  %v55 = vld [vmem:[%s1 + $0x58] sm:$0xff]
  %v56 = vld [vmem:[%s1 + $0x60] sm:$0xff]
  %v57 = vld [vmem:[%s1 + $0x68] sm:$0xff]
  %v58 = vld [vmem:[%s1 + $0x70] sm:$0xff]
  %v59 = vld [vmem:[%s1 + $0x78] sm:$0xff]
  %v92 = vunpack.c.l.b16 %v12
  %v93 = vunpack.c.l.b16 %v13
  %v94 = vunpack.c.l.b16 %v14
  %v95 = vunpack.c.l.b16 %v15
  %v96 = vunpack.c.l.b16 %v16
  %v97 = vunpack.c.l.b16 %v17
  %v98 = vunpack.c.l.b16 %v18
  %v99 = vunpack.c.l.b16 %v19
  %v100 = vunpack.c.l.b16 %v20
  %v101 = vunpack.c.l.b16 %v21
  %v102 = vunpack.c.l.b16 %v22
  %v103 = vunpack.c.l.b16 %v23
  %v104 = vunpack.c.l.b16 %v24
  %v105 = vunpack.c.l.b16 %v25
  %v106 = vunpack.c.l.b16 %v26
  %v107 = vunpack.c.l.b16 %v27
  %v108 = vunpack.c.l.b16 %v28
  %v109 = vunpack.c.l.b16 %v29
  %v110 = vunpack.c.l.b16 %v30
  %v111 = vunpack.c.l.b16 %v31
  %v112 = vunpack.c.l.b16 %v32
  %v113 = vunpack.c.l.b16 %v33
  %v114 = vunpack.c.l.b16 %v34
  %v115 = vunpack.c.l.b16 %v35
  %v116 = vunpack.c.l.b16 %v36
  %v117 = vunpack.c.l.b16 %v37
  %v118 = vunpack.c.l.b16 %v38
  %v119 = vunpack.c.l.b16 %v39
  %v120 = vunpack.c.l.b16 %v40
  %v121 = vunpack.c.l.b16 %v41
  %v122 = vunpack.c.l.b16 %v42
  %v123 = vunpack.c.l.b16 %v43
  %v124 = vpack.c.b16 %v93, %v92
  %v125 = vpack.c.b16 %v95, %v94
  %v126 = vpack.c.b16 %v97, %v96
  %v127 = vpack.c.b16 %v99, %v98
  %v128 = vpack.c.b16 %v101, %v100
  %v129 = vpack.c.b16 %v103, %v102
  %v130 = vpack.c.b16 %v105, %v104
  %v131 = vpack.c.b16 %v107, %v106
  %v132 = vpack.c.b16 %v109, %v108
  %v133 = vpack.c.b16 %v111, %v110
  %v134 = vpack.c.b16 %v113, %v112
  %v135 = vpack.c.b16 %v115, %v114
  %v136 = vpack.c.b16 %v117, %v116
  %v137 = vpack.c.b16 %v119, %v118
  %v138 = vpack.c.b16 %v121, %v120
  %v139 = vpack.c.b16 %v123, %v122
  %v172 = vunpack.c.l.b16 %v44
  %v173 = vunpack.c.h.b16 %v44
  %v174 = vunpack.c.l.b16 %v45
  %v175 = vunpack.c.h.b16 %v45
  %v176 = vunpack.c.l.b16 %v46
  %v177 = vunpack.c.h.b16 %v46
  %v178 = vunpack.c.l.b16 %v47
  %v179 = vunpack.c.h.b16 %v47
  %v180 = vunpack.c.l.b16 %v48
  %v181 = vunpack.c.h.b16 %v48
  %v182 = vunpack.c.l.b16 %v49
  %v183 = vunpack.c.h.b16 %v49
  %v184 = vunpack.c.l.b16 %v50
  %v185 = vunpack.c.h.b16 %v50
  %v186 = vunpack.c.l.b16 %v51
  %v187 = vunpack.c.h.b16 %v51
  %v188 = vunpack.c.l.b16 %v52
  %v189 = vunpack.c.h.b16 %v52
  %v190 = vunpack.c.l.b16 %v53
  %v191 = vunpack.c.h.b16 %v53
  %v192 = vunpack.c.l.b16 %v54
  %v193 = vunpack.c.h.b16 %v54
  %v194 = vunpack.c.l.b16 %v55
  %v195 = vunpack.c.h.b16 %v55
  %v196 = vunpack.c.l.b16 %v56
  %v197 = vunpack.c.h.b16 %v56
  %v198 = vunpack.c.l.b16 %v57
  %v199 = vunpack.c.h.b16 %v57
  %v200 = vunpack.c.l.b16 %v58
  %v201 = vunpack.c.h.b16 %v58
  %v202 = vunpack.c.l.b16 %v59
  %v203 = vunpack.c.h.b16 %v59
  %v204 = vpack.c.b16 %v174, %v172
  %v205 = vpack.c.b16 %v175, %v173
  %v206 = vpack.c.b16 %v178, %v176
  %v207 = vpack.c.b16 %v179, %v177
  %v208 = vpack.c.b16 %v182, %v180
  %v209 = vpack.c.b16 %v183, %v181
  %v210 = vpack.c.b16 %v186, %v184
  %v211 = vpack.c.b16 %v187, %v185
  %v212 = vpack.c.b16 %v190, %v188
  %v213 = vpack.c.b16 %v191, %v189
  %v214 = vpack.c.b16 %v194, %v192
  %v215 = vpack.c.b16 %v195, %v193
  %v216 = vpack.c.b16 %v198, %v196
  %v217 = vpack.c.b16 %v199, %v197
  %v218 = vpack.c.b16 %v202, %v200
  %v219 = vpack.c.b16 %v203, %v201
  %236 = vmatprep.subr.bf16.mxu0 %v205
  %237 = vmatpush1.bf16.msra.mxu0 %v204
  %238 = vmatprep.subr.bf16.mxu0 %v207
  %239 = vmatpush1.bf16.msra.mxu0 %v206
  %240 = vmatprep.subr.bf16.mxu0 %v209
  %241 = vmatpush1.bf16.msra.mxu0 %v208
  %242 = vmatprep.subr.bf16.mxu0 %v211
  %243 = vmatpush1.bf16.msra.mxu0 %v210
  %244 = vmatprep.subr.bf16.mxu0 %v213
  %245 = vmatpush1.bf16.msra.mxu0 %v212
  %246 = vmatprep.subr.bf16.mxu0 %v215
  %247 = vmatpush1.bf16.msra.mxu0 %v214
  %248 = vmatprep.subr.bf16.mxu0 %v217
  %249 = vmatpush1.bf16.msra.mxu0 %v216
  %250 = vmatprep.subr.bf16.mxu0 %v219
  %251 = vmatpush1.bf16.msra.mxu0 %v218
  %252 = vmatprep.subr.bf16.mxu0 0
  %253 = vmatpush1.bf16.msra.mxu0 0
  %254 = vmatprep.subr.bf16.mxu0 0
  %255 = vmatpush1.bf16.msra.mxu0 0
  %256 = vmatprep.subr.bf16.mxu0 0
  %257 = vmatpush1.bf16.msra.mxu0 0
  %258 = vmatprep.subr.bf16.mxu0 0
  %259 = vmatpush1.bf16.msra.mxu0 0
  %260 = vmatprep.subr.bf16.mxu0 0
  %261 = vmatpush1.bf16.msra.mxu0 0
  %262 = vmatprep.subr.bf16.mxu0 0
  %263 = vmatpush1.bf16.msra.mxu0 0
  %264 = vmatprep.subr.bf16.mxu0 0
  %265 = vmatpush1.bf16.msra.mxu0 0
  %266 = vmatprep.subr.bf16.mxu0 0
  %267 = vmatpush1.bf16.msra.mxu0 0
  %268 = vmatprep.mubr.bf16.mxu0 0
  %269 = vmatmul.mubr.bf16.gmra.mrb[0].mxu0 %v124
  %v270 = vpop.f32.mrb[0].mxu0
  %v271 = vadd.f32 0.0, %v270
  %v272 = vpop.f32.mrb[0].mxu0
  %v273 = vadd.f32 0.0, %v272
  %v274 = vpop.f32.mrb[0].mxu0
  %v275 = vadd.f32 0.0, %v274
  %v276 = vpop.f32.mrb[0].mxu0
  %v277 = vadd.f32 0.0, %v276
  %278 = vmatprep.mubr.bf16.mxu0 0
  %279 = vmatmul.mubr.bf16.gmra.mrb[0].mxu0 %v125
  %v280 = vpop.f32.mrb[0].mxu0
  %v281 = vadd.f32 0.0, %v280
  %v282 = vpop.f32.mrb[0].mxu0
  %v283 = vadd.f32 0.0, %v282
  %v284 = vpop.f32.mrb[0].mxu0
  %v285 = vadd.f32 0.0, %v284
  %v286 = vpop.f32.mrb[0].mxu0
  %v287 = vadd.f32 0.0, %v286
  %288 = vmatprep.mubr.bf16.mxu0 0
  %289 = vmatmul.mubr.bf16.gmra.mrb[0].mxu0 %v126
  %v290 = vpop.f32.mrb[0].mxu0
  %v291 = vadd.f32 0.0, %v290
  %v292 = vpop.f32.mrb[0].mxu0
  %v293 = vadd.f32 0.0, %v292
  %v294 = vpop.f32.mrb[0].mxu0
  %v295 = vadd.f32 0.0, %v294
  %v296 = vpop.f32.mrb[0].mxu0
  %v297 = vadd.f32 0.0, %v296
  %298 = vmatprep.mubr.bf16.mxu0 0
  %299 = vmatmul.mubr.bf16.gmra.mrb[0].mxu0 %v127
  %v300 = vpop.f32.mrb[0].mxu0
  %v301 = vadd.f32 0.0, %v300
  %v302 = vpop.f32.mrb[0].mxu0
  %v303 = vadd.f32 0.0, %v302
  %v304 = vpop.f32.mrb[0].mxu0
  %v305 = vadd.f32 0.0, %v304
  %v306 = vpop.f32.mrb[0].mxu0
  %v307 = vadd.f32 0.0, %v306
  %308 = vmatprep.mubr.bf16.mxu0 0
  %309 = vmatmul.mubr.bf16.gmra.mrb[0].mxu0 %v128
  %v310 = vpop.f32.mrb[0].mxu0
  %v311 = vadd.f32 0.0, %v310
  %v312 = vpop.f32.mrb[0].mxu0
  %v313 = vadd.f32 0.0, %v312
  %v314 = vpop.f32.mrb[0].mxu0
  %v315 = vadd.f32 0.0, %v314
  %v316 = vpop.f32.mrb[0].mxu0
  %v317 = vadd.f32 0.0, %v316
  %318 = vmatprep.mubr.bf16.mxu0 0
  %319 = vmatmul.mubr.bf16.gmra.mrb[0].mxu0 %v129
  %v320 = vpop.f32.mrb[0].mxu0
  %v321 = vadd.f32 0.0, %v320
  %v322 = vpop.f32.mrb[0].mxu0
  %v323 = vadd.f32 0.0, %v322
  %v324 = vpop.f32.mrb[0].mxu0
  %v325 = vadd.f32 0.0, %v324
  %v326 = vpop.f32.mrb[0].mxu0
  %v327 = vadd.f32 0.0, %v326
  %328 = vmatprep.mubr.bf16.mxu0 0
  %329 = vmatmul.mubr.bf16.gmra.mrb[0].mxu0 %v130
  %v330 = vpop.f32.mrb[0].mxu0
  %v331 = vadd.f32 0.0, %v330
  %v332 = vpop.f32.mrb[0].mxu0
  %v333 = vadd.f32 0.0, %v332
  %v334 = vpop.f32.mrb[0].mxu0
  %v335 = vadd.f32 0.0, %v334
  %v336 = vpop.f32.mrb[0].mxu0
  %v337 = vadd.f32 0.0, %v336
  %338 = vmatprep.mubr.bf16.mxu0 0
  %339 = vmatmul.mubr.bf16.gmra.mrb[0].mxu0 %v131
  %v340 = vpop.f32.mrb[0].mxu0
  %v341 = vadd.f32 0.0, %v340
  %v342 = vpop.f32.mrb[0].mxu0
  %v343 = vadd.f32 0.0, %v342
  %v344 = vpop.f32.mrb[0].mxu0
  %v345 = vadd.f32 0.0, %v344
  %v346 = vpop.f32.mrb[0].mxu0
  %v347 = vadd.f32 0.0, %v346
  %348 = vmatprep.mubr.bf16.mxu0 0
  %349 = vmatmul.mubr.bf16.gmra.mrb[0].mxu0 %v132
  %v350 = vpop.f32.mrb[0].mxu0
  %v351 = vadd.f32 0.0, %v350
  %v352 = vpop.f32.mrb[0].mxu0
  %v353 = vadd.f32 0.0, %v352
  %v354 = vpop.f32.mrb[0].mxu0
  %v355 = vadd.f32 0.0, %v354
  %v356 = vpop.f32.mrb[0].mxu0
  %v357 = vadd.f32 0.0, %v356
  %358 = vmatprep.mubr.bf16.mxu0 0
  %359 = vmatmul.mubr.bf16.gmra.mrb[0].mxu0 %v133
  %v360 = vpop.f32.mrb[0].mxu0
  %v361 = vadd.f32 0.0, %v360
  %v362 = vpop.f32.mrb[0].mxu0
  %v363 = vadd.f32 0.0, %v362
  %v364 = vpop.f32.mrb[0].mxu0
  %v365 = vadd.f32 0.0, %v364
  %v366 = vpop.f32.mrb[0].mxu0
  %v367 = vadd.f32 0.0, %v366
  %368 = vmatprep.mubr.bf16.mxu0 0
  %369 = vmatmul.mubr.bf16.gmra.mrb[0].mxu0 %v134
  %v370 = vpop.f32.mrb[0].mxu0
  %v371 = vadd.f32 0.0, %v370
  %v372 = vpop.f32.mrb[0].mxu0
  %v373 = vadd.f32 0.0, %v372
  %v374 = vpop.f32.mrb[0].mxu0
  %v375 = vadd.f32 0.0, %v374
  %v376 = vpop.f32.mrb[0].mxu0
  %v377 = vadd.f32 0.0, %v376
  %378 = vmatprep.mubr.bf16.mxu0 0
  %379 = vmatmul.mubr.bf16.gmra.mrb[0].mxu0 %v135
  %v380 = vpop.f32.mrb[0].mxu0
  %v381 = vadd.f32 0.0, %v380
  %v382 = vpop.f32.mrb[0].mxu0
  %v383 = vadd.f32 0.0, %v382
  %v384 = vpop.f32.mrb[0].mxu0
  %v385 = vadd.f32 0.0, %v384
  %v386 = vpop.f32.mrb[0].mxu0
  %v387 = vadd.f32 0.0, %v386
  %388 = vmatprep.mubr.bf16.mxu0 0
  %389 = vmatmul.mubr.bf16.gmra.mrb[0].mxu0 %v136
  %v390 = vpop.f32.mrb[0].mxu0
  %v391 = vadd.f32 0.0, %v390
  %v392 = vpop.f32.mrb[0].mxu0
  %v393 = vadd.f32 0.0, %v392
  %v394 = vpop.f32.mrb[0].mxu0
  %v395 = vadd.f32 0.0, %v394
  %v396 = vpop.f32.mrb[0].mxu0
  %v397 = vadd.f32 0.0, %v396
  %398 = vmatprep.mubr.bf16.mxu0 0
  %399 = vmatmul.mubr.bf16.gmra.mrb[0].mxu0 %v137
  %v400 = vpop.f32.mrb[0].mxu0
  %v401 = vadd.f32 0.0, %v400
  %v402 = vpop.f32.mrb[0].mxu0
  %v403 = vadd.f32 0.0, %v402
  %v404 = vpop.f32.mrb[0].mxu0
  %v405 = vadd.f32 0.0, %v404
  %v406 = vpop.f32.mrb[0].mxu0
  %v407 = vadd.f32 0.0, %v406
  %408 = vmatprep.mubr.bf16.mxu0 0
  %409 = vmatmul.mubr.bf16.gmra.mrb[0].mxu0 %v138
  %v410 = vpop.f32.mrb[0].mxu0
  %v411 = vadd.f32 0.0, %v410
  %v412 = vpop.f32.mrb[0].mxu0
  %v413 = vadd.f32 0.0, %v412
  %v414 = vpop.f32.mrb[0].mxu0
  %v415 = vadd.f32 0.0, %v414
  %v416 = vpop.f32.mrb[0].mxu0
  %v417 = vadd.f32 0.0, %v416
  %418 = vmatprep.mubr.bf16.mxu0 0
  %419 = vmatmul.mubr.bf16.gmra.mrb[0].mxu0 %v139
  %v420 = vpop.f32.mrb[0].mxu0
  %v421 = vadd.f32 0.0, %v420
  %v422 = vpop.f32.mrb[0].mxu0
  %v423 = vadd.f32 0.0, %v422
  %v424 = vpop.f32.mrb[0].mxu0
  %v425 = vadd.f32 0.0, %v424
  %v426 = vpop.f32.mrb[0].mxu0
  %v427 = vadd.f32 0.0, %v426
  %428 = vdwg.mxu0
  %v429 = vpack.c.bf16 %v275, %v271
  %v430 = vpack.c.bf16 %v277, %v273
  %v431 = vpack.c.bf16 %v285, %v281
  %v432 = vpack.c.bf16 %v287, %v283
  %v433 = vpack.c.bf16 %v295, %v291
  %v434 = vpack.c.bf16 %v297, %v293
  %v435 = vpack.c.bf16 %v305, %v301
  %v436 = vpack.c.bf16 %v307, %v303
  %v437 = vpack.c.bf16 %v315, %v311
  %v438 = vpack.c.bf16 %v317, %v313
  %v439 = vpack.c.bf16 %v325, %v321
  %v440 = vpack.c.bf16 %v327, %v323
  %v441 = vpack.c.bf16 %v335, %v331
  %v442 = vpack.c.bf16 %v337, %v333
  %v443 = vpack.c.bf16 %v345, %v341
  %v444 = vpack.c.bf16 %v347, %v343
  %v445 = vpack.c.bf16 %v355, %v351
  %v446 = vpack.c.bf16 %v357, %v353
  %v447 = vpack.c.bf16 %v365, %v361
  %v448 = vpack.c.bf16 %v367, %v363
  %v449 = vpack.c.bf16 %v375, %v371
  %v450 = vpack.c.bf16 %v377, %v373
  %v451 = vpack.c.bf16 %v385, %v381
  %v452 = vpack.c.bf16 %v387, %v383
  %v453 = vpack.c.bf16 %v395, %v391
  %v454 = vpack.c.bf16 %v397, %v393
  %v455 = vpack.c.bf16 %v405, %v401
  %v456 = vpack.c.bf16 %v407, %v403
  %v457 = vpack.c.bf16 %v415, %v411
  %v458 = vpack.c.bf16 %v417, %v413
  %v459 = vpack.c.bf16 %v425, %v421
  %v460 = vpack.c.bf16 %v427, %v423
  %v493 = vunpack.c.l.b16 %v429
  %v494 = vunpack.c.l.b16 %v430
  %v495 = vunpack.c.h.b16 %v429
  %v496 = vunpack.c.h.b16 %v430
  %v497 = vunpack.c.l.b16 %v431
  %v498 = vunpack.c.l.b16 %v432
  %v499 = vunpack.c.h.b16 %v431
  %v500 = vunpack.c.h.b16 %v432
  %v501 = vunpack.c.l.b16 %v433
  %v502 = vunpack.c.l.b16 %v434
  %v503 = vunpack.c.h.b16 %v433
  %v504 = vunpack.c.h.b16 %v434
  %v505 = vunpack.c.l.b16 %v435
  %v506 = vunpack.c.l.b16 %v436
  %v507 = vunpack.c.h.b16 %v435
  %v508 = vunpack.c.h.b16 %v436
  %v509 = vunpack.c.l.b16 %v437
  %v510 = vunpack.c.l.b16 %v438
  %v511 = vunpack.c.h.b16 %v437
  %v512 = vunpack.c.h.b16 %v438
  %v513 = vunpack.c.l.b16 %v439
  %v514 = vunpack.c.l.b16 %v440
  %v515 = vunpack.c.h.b16 %v439
  %v516 = vunpack.c.h.b16 %v440
  %v517 = vunpack.c.l.b16 %v441
  %v518 = vunpack.c.l.b16 %v442
  %v519 = vunpack.c.h.b16 %v441
  %v520 = vunpack.c.h.b16 %v442
  %v521 = vunpack.c.l.b16 %v443
  %v522 = vunpack.c.l.b16 %v444
  %v523 = vunpack.c.h.b16 %v443
  %v524 = vunpack.c.h.b16 %v444
  %v525 = vunpack.c.l.b16 %v445
  %v526 = vunpack.c.l.b16 %v446
  %v527 = vunpack.c.h.b16 %v445
  %v528 = vunpack.c.h.b16 %v446
  %v529 = vunpack.c.l.b16 %v447
  %v530 = vunpack.c.l.b16 %v448
  %v531 = vunpack.c.h.b16 %v447
  %v532 = vunpack.c.h.b16 %v448
  %v533 = vunpack.c.l.b16 %v449
  %v534 = vunpack.c.l.b16 %v450
  %v535 = vunpack.c.h.b16 %v449
  %v536 = vunpack.c.h.b16 %v450
  %v537 = vunpack.c.l.b16 %v451
  %v538 = vunpack.c.l.b16 %v452
  %v539 = vunpack.c.h.b16 %v451
  %v540 = vunpack.c.h.b16 %v452
  %v541 = vunpack.c.l.b16 %v453
  %v542 = vunpack.c.l.b16 %v454
  %v543 = vunpack.c.h.b16 %v453
  %v544 = vunpack.c.h.b16 %v454
  %v545 = vunpack.c.l.b16 %v455
  %v546 = vunpack.c.l.b16 %v456
  %v547 = vunpack.c.h.b16 %v455
  %v548 = vunpack.c.h.b16 %v456
  %v549 = vunpack.c.l.b16 %v457
  %v550 = vunpack.c.l.b16 %v458
  %v551 = vunpack.c.h.b16 %v457
  %v552 = vunpack.c.h.b16 %v458
  %v553 = vunpack.c.l.b16 %v459
  %v554 = vunpack.c.l.b16 %v460
  %v555 = vunpack.c.h.b16 %v459
  %v556 = vunpack.c.h.b16 %v460
  %v557 = vpack.c.b16 %v494, %v493
  %v558 = vpack.c.b16 %v496, %v495
  %v559 = vpack.c.b16 %v498, %v497
  %v560 = vpack.c.b16 %v500, %v499
  %v561 = vpack.c.b16 %v502, %v501
  %v562 = vpack.c.b16 %v504, %v503
  %v563 = vpack.c.b16 %v506, %v505
  %v564 = vpack.c.b16 %v508, %v507
  %v565 = vpack.c.b16 %v510, %v509
  %v566 = vpack.c.b16 %v512, %v511
  %v567 = vpack.c.b16 %v514, %v513
  %v568 = vpack.c.b16 %v516, %v515
  %v569 = vpack.c.b16 %v518, %v517
  %v570 = vpack.c.b16 %v520, %v519
  %v571 = vpack.c.b16 %v522, %v521
  %v572 = vpack.c.b16 %v524, %v523
  %v573 = vpack.c.b16 %v526, %v525
  %v574 = vpack.c.b16 %v528, %v527
  %v575 = vpack.c.b16 %v530, %v529
  %v576 = vpack.c.b16 %v532, %v531
  %v577 = vpack.c.b16 %v534, %v533
  %v578 = vpack.c.b16 %v536, %v535
  %v579 = vpack.c.b16 %v538, %v537
  %v580 = vpack.c.b16 %v540, %v539
  %v581 = vpack.c.b16 %v542, %v541
  %v582 = vpack.c.b16 %v544, %v543
  %v583 = vpack.c.b16 %v546, %v545
  %v584 = vpack.c.b16 %v548, %v547
  %v585 = vpack.c.b16 %v550, %v549
  %v586 = vpack.c.b16 %v552, %v551
  %v587 = vpack.c.b16 %v554, %v553
  %v588 = vpack.c.b16 %v556, %v555
  %621 = vst [vmem:[%s2] sm:$0xff] %v557
  %622 = vst [vmem:[%s2 + $0x8] sm:$0xff] %v558
  %623 = vst [vmem:[%s2 + $0x10] sm:$0xff] %v559
  %624 = vst [vmem:[%s2 + $0x18] sm:$0xff] %v560
  %625 = vst [vmem:[%s2 + $0x20] sm:$0xff] %v561
  %626 = vst [vmem:[%s2 + $0x28] sm:$0xff] %v562
  %627 = vst [vmem:[%s2 + $0x30] sm:$0xff] %v563
  %628 = vst [vmem:[%s2 + $0x38] sm:$0xff] %v564
  %629 = vst [vmem:[%s2 + $0x40] sm:$0xff] %v565
  %630 = vst [vmem:[%s2 + $0x48] sm:$0xff] %v566
  %631 = vst [vmem:[%s2 + $0x50] sm:$0xff] %v567
  %632 = vst [vmem:[%s2 + $0x58] sm:$0xff] %v568
  %633 = vst [vmem:[%s2 + $0x60] sm:$0xff] %v569
  %634 = vst [vmem:[%s2 + $0x68] sm:$0xff] %v570
  %635 = vst [vmem:[%s2 + $0x70] sm:$0xff] %v571
  %636 = vst [vmem:[%s2 + $0x78] sm:$0xff] %v572
  %637 = vst [vmem:[%s2 + $0x80] sm:$0xff] %v573
  %638 = vst [vmem:[%s2 + $0x88] sm:$0xff] %v574
  %639 = vst [vmem:[%s2 + $0x90] sm:$0xff] %v575
  %640 = vst [vmem:[%s2 + $0x98] sm:$0xff] %v576
  %641 = vst [vmem:[%s2 + $0xa0] sm:$0xff] %v577
  %642 = vst [vmem:[%s2 + $0xa8] sm:$0xff] %v578
  %643 = vst [vmem:[%s2 + $0xb0] sm:$0xff] %v579
  %644 = vst [vmem:[%s2 + $0xb8] sm:$0xff] %v580
  %645 = vst [vmem:[%s2 + $0xc0] sm:$0xff] %v581
  %646 = vst [vmem:[%s2 + $0xc8] sm:$0xff] %v582
  %647 = vst [vmem:[%s2 + $0xd0] sm:$0xff] %v583
  %648 = vst [vmem:[%s2 + $0xd8] sm:$0xff] %v584
  %649 = vst [vmem:[%s2 + $0xe0] sm:$0xff] %v585
  %650 = vst [vmem:[%s2 + $0xe8] sm:$0xff] %v586
  %651 = vst [vmem:[%s2 + $0xf0] sm:$0xff] %v587
  %652 = vst [vmem:[%s2 + $0xf8] sm:$0xff] %v588
  // Predicated region
  $region10: #{gnn_sage_forward.3} parent=0 // pred_check
    _
  $region11: #{gnn_sage_forward.3} parent=0 // pred_check_branch
    %654 = sbr.rel (0) target = $region13
  $region12: #{gnn_sage_forward.3} parent=0 // pred_region
    _
  $region13: #{gnn_sage_forward.3} parent=0 // pred_fallthru
    _
  // Predicated region
  $region14: #{gnn_sage_forward.3} parent=0 // pred_check
    _
  $region15: #{gnn_sage_forward.3} parent=0 // pred_check_branch
    %656 = sbr.rel (0) target = $region17
  $region16: #{gnn_sage_forward.3} parent=0 // pred_region
    _
  $region17: #{gnn_sage_forward.3} parent=0 // pred_fallthru
    _

// kernel: gnn_sage_forward.5
$region0: #{gnn_sage_forward.5}
  #allocation0 [shape = 'u32[]', space=smem, size = 0x4, offset = 0x4, fixed_abs, tag = 'smem constant byte address 0x4 - core index']
  #allocation1 [shape = 'u32[144,128]{1,0:T(1,128)}', space=vmem, size = 0x12000, scoped, tag = 'internal scratch']
  #allocation2 [shape = 'f32[256,128]{1,0:T(8,128)}', space=vmem, size = 0x20000, scoped, tag = 'scratch operand']
  %s0 = inlined_call_operand.vmem [shape: bf16[256,256], index: 0, kind: input, shape index: {}]
  %s1 = inlined_call_operand.vmem [shape: bf16[256,256], index: 1, kind: input, shape index: {}, may-alias: {1,2}]
  %s2 = inlined_call_operand.vmem [shape: bf16[256,256], index: 2, kind: input, shape index: {}, may-alias: {1,2}]
  %s3 = inlined_call_operand.vmem [shape: f32[256,1], index: 3, kind: input, shape index: {}]
  %s4 = inlined_call_operand.vmem [shape: f32[1,128], index: 4, kind: input, shape index: {}]
  %s5 = inlined_call_operand.vmem [shape: bf16[128,128], index: 5, kind: input, shape index: {}]
  %s6 = inlined_call_operand.vmem [shape: f32[1,128], index: 6, kind: input, shape index: {}]
  %s7 = inlined_call_operand.vmem [shape: f32[256,128], index: 7, kind: output, shape index: {}]
  %s8 = sld [smem:[#allocation0]]
  $region128: #{gnn_sage_forward.5} parent=0
    _
  %s10 = ssub.s32 1, %s8
  %s11 = scalar_select 0, %s10, %s8
  $region1: #{gnn_sage_forward.5} parent=0
    #allocation3 [shape = 'u8[65536]{0}', space=vmem, size = 0x10000, scoped, tag = 'input window, operand 1, single buffered']
    #allocation4 [shape = 'u8[65536]{0}', space=vmem, size = 0x10000, scoped, tag = 'input window, operand 2, single buffered']
    // Predicated region
    $region2: #{gnn_sage_forward.5} parent=1 // pred_check
      _
    $region3: #{gnn_sage_forward.5} parent=1 // pred_check_branch
      %13 = sbr.rel (0) target = $region5
    $region4: #{gnn_sage_forward.5} parent=1 // pred_region
      _
    $region5: #{gnn_sage_forward.5} parent=1 // pred_fallthru
      _
    // Predicated region
    $region6: #{gnn_sage_forward.5} parent=1 // pred_check
      _
    $region7: #{gnn_sage_forward.5} parent=1 // pred_check_branch
      %15 = sbr.rel (0) target = $region9
    $region8: #{gnn_sage_forward.5} parent=1 // pred_region
      // Predicated region
      $region10: #{gnn_sage_forward.5} parent=8 // pred_check
        _
      $region11: #{gnn_sage_forward.5} parent=8 // pred_check_branch
        %17 = sbr.rel (0) target = $region13
      $region12: #{gnn_sage_forward.5} parent=8 // pred_region
        // Predicated region
        $region14: #{gnn_sage_forward.5} parent=12 // pred_check
          _
        $region15: #{gnn_sage_forward.5} parent=12 // pred_check_branch
          %19 = sbr.rel target = $region17
        $region16: #{gnn_sage_forward.5} parent=12 // pred_region
          // Predicated region
          $region29: #{gnn_sage_forward.5} parent=16 // pred_check
            _
          $region30: #{gnn_sage_forward.5} parent=16 // pred_check_branch
            %96 = sbr.rel (0) target = $region32
          $region31: #{gnn_sage_forward.5} parent=16 // pred_region
            loop: start=0, step=1, limit=1
            $region33: #{gnn_sage_forward.5} parent=31 // loop_pre_header
              _
            $region34: #{gnn_sage_forward.5} parent=31 // loop_header
              %s98 = sphi 0, %s102
              %p99 = scmp.ge.s32.totalorder %s98, 1
              %s103 = sphi %s1, %s1
              %s104 = sphi [#allocation3], [#allocation3]
            $region35: #{gnn_sage_forward.5} parent=31 // loop_header_branch
              %101 = sbr.rel (%p99) target = $region39
            $region36: #{gnn_sage_forward.5} parent=31 // loop_body
              _
            $region37: #{gnn_sage_forward.5} parent=31 // loop_footer
              %s102 = sadd.s32 1, %s98
            $region38: #{gnn_sage_forward.5} parent=31 // loop_footer_branch
              %97 = sbr.rel target = $region34
            $region39: #{gnn_sage_forward.5} parent=31 // loop_exit
              _
            loop: start=0, step=1, limit=1
            $region40: #{gnn_sage_forward.5} parent=31 // loop_pre_header
              _
            $region41: #{gnn_sage_forward.5} parent=31 // loop_header
              %s107 = sphi 0, %s111
              %p108 = scmp.ge.s32.totalorder %s107, 1
              %s112 = sphi %s1, %s1
              %s113 = sphi [#allocation3], [#allocation3]
            $region42: #{gnn_sage_forward.5} parent=31 // loop_header_branch
              %110 = sbr.rel (%p108) target = $region46
            $region43: #{gnn_sage_forward.5} parent=31 // loop_body
              %v114 = vld [vmem:[%s112] sm:$0xf]
              %115 = vst [vmem:[%s113] sm:$0xf] %v114
              %v116 = vld [vmem:[%s112 + $0x8] sm:$0xf]
              %117 = vst [vmem:[%s113 + $0x4] sm:$0xf] %v116
              %v118 = vld [vmem:[%s112 + $0x10] sm:$0xf]
              %119 = vst [vmem:[%s113 + $0x8] sm:$0xf] %v118
              %v120 = vld [vmem:[%s112 + $0x18] sm:$0xf]
              %121 = vst [vmem:[%s113 + $0xc] sm:$0xf] %v120
              %v122 = vld [vmem:[%s112 + $0x20] sm:$0xf]
              %123 = vst [vmem:[%s113 + $0x10] sm:$0xf] %v122
              %v124 = vld [vmem:[%s112 + $0x28] sm:$0xf]
              %125 = vst [vmem:[%s113 + $0x14] sm:$0xf] %v124
              %v126 = vld [vmem:[%s112 + $0x30] sm:$0xf]
              %127 = vst [vmem:[%s113 + $0x18] sm:$0xf] %v126
              %v128 = vld [vmem:[%s112 + $0x38] sm:$0xf]
              %129 = vst [vmem:[%s113 + $0x1c] sm:$0xf] %v128
              %v130 = vld [vmem:[%s112 + $0x40] sm:$0xf]
              %131 = vst [vmem:[%s113 + $0x20] sm:$0xf] %v130
              %v132 = vld [vmem:[%s112 + $0x48] sm:$0xf]
              %133 = vst [vmem:[%s113 + $0x24] sm:$0xf] %v132
              %v134 = vld [vmem:[%s112 + $0x50] sm:$0xf]
              %135 = vst [vmem:[%s113 + $0x28] sm:$0xf] %v134
              %v136 = vld [vmem:[%s112 + $0x58] sm:$0xf]
              %137 = vst [vmem:[%s113 + $0x2c] sm:$0xf] %v136
              %v138 = vld [vmem:[%s112 + $0x60] sm:$0xf]
              %139 = vst [vmem:[%s113 + $0x30] sm:$0xf] %v138
              %v140 = vld [vmem:[%s112 + $0x68] sm:$0xf]
              %141 = vst [vmem:[%s113 + $0x34] sm:$0xf] %v140
              %v142 = vld [vmem:[%s112 + $0x70] sm:$0xf]
              %143 = vst [vmem:[%s113 + $0x38] sm:$0xf] %v142
              %v144 = vld [vmem:[%s112 + $0x78] sm:$0xf]
              %145 = vst [vmem:[%s113 + $0x3c] sm:$0xf] %v144
              %v146 = vld [vmem:[%s112 + $0x80] sm:$0xf]
              %147 = vst [vmem:[%s113 + $0x40] sm:$0xf] %v146
              %v148 = vld [vmem:[%s112 + $0x88] sm:$0xf]
              %149 = vst [vmem:[%s113 + $0x44] sm:$0xf] %v148
              %v150 = vld [vmem:[%s112 + $0x90] sm:$0xf]
              %151 = vst [vmem:[%s113 + $0x48] sm:$0xf] %v150
              %v152 = vld [vmem:[%s112 + $0x98] sm:$0xf]
              %153 = vst [vmem:[%s113 + $0x4c] sm:$0xf] %v152
              %v154 = vld [vmem:[%s112 + $0xa0] sm:$0xf]
              %155 = vst [vmem:[%s113 + $0x50] sm:$0xf] %v154
              %v156 = vld [vmem:[%s112 + $0xa8] sm:$0xf]
              %157 = vst [vmem:[%s113 + $0x54] sm:$0xf] %v156
              %v158 = vld [vmem:[%s112 + $0xb0] sm:$0xf]
              %159 = vst [vmem:[%s113 + $0x58] sm:$0xf] %v158
              %v160 = vld [vmem:[%s112 + $0xb8] sm:$0xf]
              %161 = vst [vmem:[%s113 + $0x5c] sm:$0xf] %v160
              %v162 = vld [vmem:[%s112 + $0xc0] sm:$0xf]
              %163 = vst [vmem:[%s113 + $0x60] sm:$0xf] %v162
              %v164 = vld [vmem:[%s112 + $0xc8] sm:$0xf]
              %165 = vst [vmem:[%s113 + $0x64] sm:$0xf] %v164
              %v166 = vld [vmem:[%s112 + $0xd0] sm:$0xf]
              %167 = vst [vmem:[%s113 + $0x68] sm:$0xf] %v166
              %v168 = vld [vmem:[%s112 + $0xd8] sm:$0xf]
              %169 = vst [vmem:[%s113 + $0x6c] sm:$0xf] %v168
              %v170 = vld [vmem:[%s112 + $0xe0] sm:$0xf]
              %171 = vst [vmem:[%s113 + $0x70] sm:$0xf] %v170
              %v172 = vld [vmem:[%s112 + $0xe8] sm:$0xf]
              %173 = vst [vmem:[%s113 + $0x74] sm:$0xf] %v172
              %v174 = vld [vmem:[%s112 + $0xf0] sm:$0xf]
              %175 = vst [vmem:[%s113 + $0x78] sm:$0xf] %v174
              %v176 = vld [vmem:[%s112 + $0xf8] sm:$0xf]
              %177 = vst [vmem:[%s113 + $0x7c] sm:$0xf] %v176
            $region44: #{gnn_sage_forward.5} parent=31 // loop_footer
              %s111 = sadd.s32 1, %s107
            $region45: #{gnn_sage_forward.5} parent=31 // loop_footer_branch
              %106 = sbr.rel target = $region41
            $region46: #{gnn_sage_forward.5} parent=31 // loop_exit
              _
          $region32: #{gnn_sage_forward.5} parent=16 // pred_fallthru
            _
        $region17: #{gnn_sage_forward.5} parent=12 // pred_fallthru
          _
        // Predicated region
        $region18: #{gnn_sage_forward.5} parent=12 // pred_check
          _
        $region19: #{gnn_sage_forward.5} parent=12 // pred_check_branch
          %21 = sbr.rel (0) target = $region21
        $region20: #{gnn_sage_forward.5} parent=12 // pred_region
          loop: start=0, step=1, limit=1
          $region22: #{gnn_sage_forward.5} parent=20 // loop_pre_header
            _
          $region23: #{gnn_sage_forward.5} parent=20 // loop_header
            %s24 = sphi 0, %s28
            %p25 = scmp.ge.s32.totalorder %s24, 1
            %s29 = sphi %s1, %s1
            %s30 = sphi [#allocation3], [#allocation3]
          $region24: #{gnn_sage_forward.5} parent=20 // loop_header_branch
            %27 = sbr.rel (%p25) target = $region28
          $region25: #{gnn_sage_forward.5} parent=20 // loop_body
            %v31 = vld [vmem:[%s29] sm:$0xf]
            %32 = vst [vmem:[%s30] sm:$0xf] %v31
            %v33 = vld [vmem:[%s29 + $0x8] sm:$0xf]
            %34 = vst [vmem:[%s30 + $0x4] sm:$0xf] %v33
            %v35 = vld [vmem:[%s29 + $0x10] sm:$0xf]
            %36 = vst [vmem:[%s30 + $0x8] sm:$0xf] %v35
            %v37 = vld [vmem:[%s29 + $0x18] sm:$0xf]
            %38 = vst [vmem:[%s30 + $0xc] sm:$0xf] %v37
            %v39 = vld [vmem:[%s29 + $0x20] sm:$0xf]
            %40 = vst [vmem:[%s30 + $0x10] sm:$0xf] %v39
            %v41 = vld [vmem:[%s29 + $0x28] sm:$0xf]
            %42 = vst [vmem:[%s30 + $0x14] sm:$0xf] %v41
            %v43 = vld [vmem:[%s29 + $0x30] sm:$0xf]
            %44 = vst [vmem:[%s30 + $0x18] sm:$0xf] %v43
            %v45 = vld [vmem:[%s29 + $0x38] sm:$0xf]
            %46 = vst [vmem:[%s30 + $0x1c] sm:$0xf] %v45
            %v47 = vld [vmem:[%s29 + $0x40] sm:$0xf]
            %48 = vst [vmem:[%s30 + $0x20] sm:$0xf] %v47
            %v49 = vld [vmem:[%s29 + $0x48] sm:$0xf]
            %50 = vst [vmem:[%s30 + $0x24] sm:$0xf] %v49
            %v51 = vld [vmem:[%s29 + $0x50] sm:$0xf]
            %52 = vst [vmem:[%s30 + $0x28] sm:$0xf] %v51
            %v53 = vld [vmem:[%s29 + $0x58] sm:$0xf]
            %54 = vst [vmem:[%s30 + $0x2c] sm:$0xf] %v53
            %v55 = vld [vmem:[%s29 + $0x60] sm:$0xf]
            %56 = vst [vmem:[%s30 + $0x30] sm:$0xf] %v55
            %v57 = vld [vmem:[%s29 + $0x68] sm:$0xf]
            %58 = vst [vmem:[%s30 + $0x34] sm:$0xf] %v57
            %v59 = vld [vmem:[%s29 + $0x70] sm:$0xf]
            %60 = vst [vmem:[%s30 + $0x38] sm:$0xf] %v59
            %v61 = vld [vmem:[%s29 + $0x78] sm:$0xf]
            %62 = vst [vmem:[%s30 + $0x3c] sm:$0xf] %v61
            %v63 = vld [vmem:[%s29 + $0x80] sm:$0xf]
            %64 = vst [vmem:[%s30 + $0x40] sm:$0xf] %v63
            %v65 = vld [vmem:[%s29 + $0x88] sm:$0xf]
            %66 = vst [vmem:[%s30 + $0x44] sm:$0xf] %v65
            %v67 = vld [vmem:[%s29 + $0x90] sm:$0xf]
            %68 = vst [vmem:[%s30 + $0x48] sm:$0xf] %v67
            %v69 = vld [vmem:[%s29 + $0x98] sm:$0xf]
            %70 = vst [vmem:[%s30 + $0x4c] sm:$0xf] %v69
            %v71 = vld [vmem:[%s29 + $0xa0] sm:$0xf]
            %72 = vst [vmem:[%s30 + $0x50] sm:$0xf] %v71
            %v73 = vld [vmem:[%s29 + $0xa8] sm:$0xf]
            %74 = vst [vmem:[%s30 + $0x54] sm:$0xf] %v73
            %v75 = vld [vmem:[%s29 + $0xb0] sm:$0xf]
            %76 = vst [vmem:[%s30 + $0x58] sm:$0xf] %v75
            %v77 = vld [vmem:[%s29 + $0xb8] sm:$0xf]
            %78 = vst [vmem:[%s30 + $0x5c] sm:$0xf] %v77
            %v79 = vld [vmem:[%s29 + $0xc0] sm:$0xf]
            %80 = vst [vmem:[%s30 + $0x60] sm:$0xf] %v79
            %v81 = vld [vmem:[%s29 + $0xc8] sm:$0xf]
            %82 = vst [vmem:[%s30 + $0x64] sm:$0xf] %v81
            %v83 = vld [vmem:[%s29 + $0xd0] sm:$0xf]
            %84 = vst [vmem:[%s30 + $0x68] sm:$0xf] %v83
            %v85 = vld [vmem:[%s29 + $0xd8] sm:$0xf]
            %86 = vst [vmem:[%s30 + $0x6c] sm:$0xf] %v85
            %v87 = vld [vmem:[%s29 + $0xe0] sm:$0xf]
            %88 = vst [vmem:[%s30 + $0x70] sm:$0xf] %v87
            %v89 = vld [vmem:[%s29 + $0xe8] sm:$0xf]
            %90 = vst [vmem:[%s30 + $0x74] sm:$0xf] %v89
            %v91 = vld [vmem:[%s29 + $0xf0] sm:$0xf]
            %92 = vst [vmem:[%s30 + $0x78] sm:$0xf] %v91
            %v93 = vld [vmem:[%s29 + $0xf8] sm:$0xf]
            %94 = vst [vmem:[%s30 + $0x7c] sm:$0xf] %v93
          $region26: #{gnn_sage_forward.5} parent=20 // loop_footer
            %s28 = sadd.s32 1, %s24
          $region27: #{gnn_sage_forward.5} parent=20 // loop_footer_branch
            %23 = sbr.rel target = $region23
          $region28: #{gnn_sage_forward.5} parent=20 // loop_exit
            _
        $region21: #{gnn_sage_forward.5} parent=12 // pred_fallthru
          _
      $region13: #{gnn_sage_forward.5} parent=8 // pred_fallthru
        _
      %178 = vnop
    $region9: #{gnn_sage_forward.5} parent=1 // pred_fallthru
      _
    // Predicated region
    $region47: #{gnn_sage_forward.5} parent=1 // pred_check
      _
    $region48: #{gnn_sage_forward.5} parent=1 // pred_check_branch
      %180 = sbr.rel (0) target = $region50
    $region49: #{gnn_sage_forward.5} parent=1 // pred_region
      %s181 = scalar_lea.vmem %s2, 4
      // Predicated region
      $region51: #{gnn_sage_forward.5} parent=49 // pred_check
        _
      $region52: #{gnn_sage_forward.5} parent=49 // pred_check_branch
        %183 = sbr.rel (0) target = $region54
      $region53: #{gnn_sage_forward.5} parent=49 // pred_region
        // Predicated region
        $region55: #{gnn_sage_forward.5} parent=53 // pred_check
          _
        $region56: #{gnn_sage_forward.5} parent=53 // pred_check_branch
          %185 = sbr.rel target = $region58
        $region57: #{gnn_sage_forward.5} parent=53 // pred_region
          // Predicated region
          $region70: #{gnn_sage_forward.5} parent=57 // pred_check
            _
          $region71: #{gnn_sage_forward.5} parent=57 // pred_check_branch
            %262 = sbr.rel (0) target = $region73
          $region72: #{gnn_sage_forward.5} parent=57 // pred_region
            loop: start=0, step=1, limit=1
            $region74: #{gnn_sage_forward.5} parent=72 // loop_pre_header
              _
            $region75: #{gnn_sage_forward.5} parent=72 // loop_header
              %s264 = sphi 0, %s268
              %p265 = scmp.ge.s32.totalorder %s264, 1
              %s269 = sphi %s181, %s181
              %s270 = sphi [#allocation4], [#allocation4]
            $region76: #{gnn_sage_forward.5} parent=72 // loop_header_branch
              %267 = sbr.rel (%p265) target = $region80
            $region77: #{gnn_sage_forward.5} parent=72 // loop_body
              _
            $region78: #{gnn_sage_forward.5} parent=72 // loop_footer
              %s268 = sadd.s32 1, %s264
            $region79: #{gnn_sage_forward.5} parent=72 // loop_footer_branch
              %263 = sbr.rel target = $region75
            $region80: #{gnn_sage_forward.5} parent=72 // loop_exit
              _
            loop: start=0, step=1, limit=1
            $region81: #{gnn_sage_forward.5} parent=72 // loop_pre_header
              _
            $region82: #{gnn_sage_forward.5} parent=72 // loop_header
              %s273 = sphi 0, %s277
              %p274 = scmp.ge.s32.totalorder %s273, 1
              %s278 = sphi %s181, %s181
              %s279 = sphi [#allocation4], [#allocation4]
            $region83: #{gnn_sage_forward.5} parent=72 // loop_header_branch
              %276 = sbr.rel (%p274) target = $region87
            $region84: #{gnn_sage_forward.5} parent=72 // loop_body
              %v280 = vld [vmem:[%s278] sm:$0xf]
              %281 = vst [vmem:[%s279] sm:$0xf] %v280
              %v282 = vld [vmem:[%s278 + $0x8] sm:$0xf]
              %283 = vst [vmem:[%s279 + $0x4] sm:$0xf] %v282
              %v284 = vld [vmem:[%s278 + $0x10] sm:$0xf]
              %285 = vst [vmem:[%s279 + $0x8] sm:$0xf] %v284
              %v286 = vld [vmem:[%s278 + $0x18] sm:$0xf]
              %287 = vst [vmem:[%s279 + $0xc] sm:$0xf] %v286
              %v288 = vld [vmem:[%s278 + $0x20] sm:$0xf]
              %289 = vst [vmem:[%s279 + $0x10] sm:$0xf] %v288
              %v290 = vld [vmem:[%s278 + $0x28] sm:$0xf]
              %291 = vst [vmem:[%s279 + $0x14] sm:$0xf] %v290
              %v292 = vld [vmem:[%s278 + $0x30] sm:$0xf]
              %293 = vst [vmem:[%s279 + $0x18] sm:$0xf] %v292
              %v294 = vld [vmem:[%s278 + $0x38] sm:$0xf]
              %295 = vst [vmem:[%s279 + $0x1c] sm:$0xf] %v294
              %v296 = vld [vmem:[%s278 + $0x40] sm:$0xf]
              %297 = vst [vmem:[%s279 + $0x20] sm:$0xf] %v296
              %v298 = vld [vmem:[%s278 + $0x48] sm:$0xf]
              %299 = vst [vmem:[%s279 + $0x24] sm:$0xf] %v298
              %v300 = vld [vmem:[%s278 + $0x50] sm:$0xf]
              %301 = vst [vmem:[%s279 + $0x28] sm:$0xf] %v300
              %v302 = vld [vmem:[%s278 + $0x58] sm:$0xf]
              %303 = vst [vmem:[%s279 + $0x2c] sm:$0xf] %v302
              %v304 = vld [vmem:[%s278 + $0x60] sm:$0xf]
              %305 = vst [vmem:[%s279 + $0x30] sm:$0xf] %v304
              %v306 = vld [vmem:[%s278 + $0x68] sm:$0xf]
              %307 = vst [vmem:[%s279 + $0x34] sm:$0xf] %v306
              %v308 = vld [vmem:[%s278 + $0x70] sm:$0xf]
              %309 = vst [vmem:[%s279 + $0x38] sm:$0xf] %v308
              %v310 = vld [vmem:[%s278 + $0x78] sm:$0xf]
              %311 = vst [vmem:[%s279 + $0x3c] sm:$0xf] %v310
              %v312 = vld [vmem:[%s278 + $0x80] sm:$0xf]
              %313 = vst [vmem:[%s279 + $0x40] sm:$0xf] %v312
              %v314 = vld [vmem:[%s278 + $0x88] sm:$0xf]
              %315 = vst [vmem:[%s279 + $0x44] sm:$0xf] %v314
              %v316 = vld [vmem:[%s278 + $0x90] sm:$0xf]
              %317 = vst [vmem:[%s279 + $0x48] sm:$0xf] %v316
              %v318 = vld [vmem:[%s278 + $0x98] sm:$0xf]
              %319 = vst [vmem:[%s279 + $0x4c] sm:$0xf] %v318
              %v320 = vld [vmem:[%s278 + $0xa0] sm:$0xf]
              %321 = vst [vmem:[%s279 + $0x50] sm:$0xf] %v320
              %v322 = vld [vmem:[%s278 + $0xa8] sm:$0xf]
              %323 = vst [vmem:[%s279 + $0x54] sm:$0xf] %v322
              %v324 = vld [vmem:[%s278 + $0xb0] sm:$0xf]
              %325 = vst [vmem:[%s279 + $0x58] sm:$0xf] %v324
              %v326 = vld [vmem:[%s278 + $0xb8] sm:$0xf]
              %327 = vst [vmem:[%s279 + $0x5c] sm:$0xf] %v326
              %v328 = vld [vmem:[%s278 + $0xc0] sm:$0xf]
              %329 = vst [vmem:[%s279 + $0x60] sm:$0xf] %v328
              %v330 = vld [vmem:[%s278 + $0xc8] sm:$0xf]
              %331 = vst [vmem:[%s279 + $0x64] sm:$0xf] %v330
              %v332 = vld [vmem:[%s278 + $0xd0] sm:$0xf]
              %333 = vst [vmem:[%s279 + $0x68] sm:$0xf] %v332
              %v334 = vld [vmem:[%s278 + $0xd8] sm:$0xf]
              %335 = vst [vmem:[%s279 + $0x6c] sm:$0xf] %v334
              %v336 = vld [vmem:[%s278 + $0xe0] sm:$0xf]
              %337 = vst [vmem:[%s279 + $0x70] sm:$0xf] %v336
              %v338 = vld [vmem:[%s278 + $0xe8] sm:$0xf]
              %339 = vst [vmem:[%s279 + $0x74] sm:$0xf] %v338
              %v340 = vld [vmem:[%s278 + $0xf0] sm:$0xf]
              %341 = vst [vmem:[%s279 + $0x78] sm:$0xf] %v340
              %v342 = vld [vmem:[%s278 + $0xf8] sm:$0xf]
              %343 = vst [vmem:[%s279 + $0x7c] sm:$0xf] %v342
            $region85: #{gnn_sage_forward.5} parent=72 // loop_footer
              %s277 = sadd.s32 1, %s273
            $region86: #{gnn_sage_forward.5} parent=72 // loop_footer_branch
              %272 = sbr.rel target = $region82
            $region87: #{gnn_sage_forward.5} parent=72 // loop_exit
              _
          $region73: #{gnn_sage_forward.5} parent=57 // pred_fallthru
            _
        $region58: #{gnn_sage_forward.5} parent=53 // pred_fallthru
          _
        // Predicated region
        $region59: #{gnn_sage_forward.5} parent=53 // pred_check
          _
        $region60: #{gnn_sage_forward.5} parent=53 // pred_check_branch
          %187 = sbr.rel (0) target = $region62
        $region61: #{gnn_sage_forward.5} parent=53 // pred_region
          loop: start=0, step=1, limit=1
          $region63: #{gnn_sage_forward.5} parent=61 // loop_pre_header
            _
          $region64: #{gnn_sage_forward.5} parent=61 // loop_header
            %s190 = sphi 0, %s194
            %p191 = scmp.ge.s32.totalorder %s190, 1
            %s195 = sphi %s181, %s181
            %s196 = sphi [#allocation4], [#allocation4]
          $region65: #{gnn_sage_forward.5} parent=61 // loop_header_branch
            %193 = sbr.rel (%p191) target = $region69
          $region66: #{gnn_sage_forward.5} parent=61 // loop_body
            %v197 = vld [vmem:[%s195] sm:$0xf]
            %198 = vst [vmem:[%s196] sm:$0xf] %v197
            %v199 = vld [vmem:[%s195 + $0x8] sm:$0xf]
            %200 = vst [vmem:[%s196 + $0x4] sm:$0xf] %v199
            %v201 = vld [vmem:[%s195 + $0x10] sm:$0xf]
            %202 = vst [vmem:[%s196 + $0x8] sm:$0xf] %v201
            %v203 = vld [vmem:[%s195 + $0x18] sm:$0xf]
            %204 = vst [vmem:[%s196 + $0xc] sm:$0xf] %v203
            %v205 = vld [vmem:[%s195 + $0x20] sm:$0xf]
            %206 = vst [vmem:[%s196 + $0x10] sm:$0xf] %v205
            %v207 = vld [vmem:[%s195 + $0x28] sm:$0xf]
            %208 = vst [vmem:[%s196 + $0x14] sm:$0xf] %v207
            %v209 = vld [vmem:[%s195 + $0x30] sm:$0xf]
            %210 = vst [vmem:[%s196 + $0x18] sm:$0xf] %v209
            %v211 = vld [vmem:[%s195 + $0x38] sm:$0xf]
            %212 = vst [vmem:[%s196 + $0x1c] sm:$0xf] %v211
            %v213 = vld [vmem:[%s195 + $0x40] sm:$0xf]
            %214 = vst [vmem:[%s196 + $0x20] sm:$0xf] %v213
            %v215 = vld [vmem:[%s195 + $0x48] sm:$0xf]
            %216 = vst [vmem:[%s196 + $0x24] sm:$0xf] %v215
            %v217 = vld [vmem:[%s195 + $0x50] sm:$0xf]
            %218 = vst [vmem:[%s196 + $0x28] sm:$0xf] %v217
            %v219 = vld [vmem:[%s195 + $0x58] sm:$0xf]
            %220 = vst [vmem:[%s196 + $0x2c] sm:$0xf] %v219
            %v221 = vld [vmem:[%s195 + $0x60] sm:$0xf]
            %222 = vst [vmem:[%s196 + $0x30] sm:$0xf] %v221
            %v223 = vld [vmem:[%s195 + $0x68] sm:$0xf]
            %224 = vst [vmem:[%s196 + $0x34] sm:$0xf] %v223
            %v225 = vld [vmem:[%s195 + $0x70] sm:$0xf]
            %226 = vst [vmem:[%s196 + $0x38] sm:$0xf] %v225
            %v227 = vld [vmem:[%s195 + $0x78] sm:$0xf]
            %228 = vst [vmem:[%s196 + $0x3c] sm:$0xf] %v227
            %v229 = vld [vmem:[%s195 + $0x80] sm:$0xf]
            %230 = vst [vmem:[%s196 + $0x40] sm:$0xf] %v229
            %v231 = vld [vmem:[%s195 + $0x88] sm:$0xf]
            %232 = vst [vmem:[%s196 + $0x44] sm:$0xf] %v231
            %v233 = vld [vmem:[%s195 + $0x90] sm:$0xf]
            %234 = vst [vmem:[%s196 + $0x48] sm:$0xf] %v233
            %v235 = vld [vmem:[%s195 + $0x98] sm:$0xf]
            %236 = vst [vmem:[%s196 + $0x4c] sm:$0xf] %v235
            %v237 = vld [vmem:[%s195 + $0xa0] sm:$0xf]
            %238 = vst [vmem:[%s196 + $0x50] sm:$0xf] %v237
            %v239 = vld [vmem:[%s195 + $0xa8] sm:$0xf]
            %240 = vst [vmem:[%s196 + $0x54] sm:$0xf] %v239
            %v241 = vld [vmem:[%s195 + $0xb0] sm:$0xf]
            %242 = vst [vmem:[%s196 + $0x58] sm:$0xf] %v241
            %v243 = vld [vmem:[%s195 + $0xb8] sm:$0xf]
            %244 = vst [vmem:[%s196 + $0x5c] sm:$0xf] %v243
            %v245 = vld [vmem:[%s195 + $0xc0] sm:$0xf]
            %246 = vst [vmem:[%s196 + $0x60] sm:$0xf] %v245
            %v247 = vld [vmem:[%s195 + $0xc8] sm:$0xf]
            %248 = vst [vmem:[%s196 + $0x64] sm:$0xf] %v247
            %v249 = vld [vmem:[%s195 + $0xd0] sm:$0xf]
            %250 = vst [vmem:[%s196 + $0x68] sm:$0xf] %v249
            %v251 = vld [vmem:[%s195 + $0xd8] sm:$0xf]
            %252 = vst [vmem:[%s196 + $0x6c] sm:$0xf] %v251
            %v253 = vld [vmem:[%s195 + $0xe0] sm:$0xf]
            %254 = vst [vmem:[%s196 + $0x70] sm:$0xf] %v253
            %v255 = vld [vmem:[%s195 + $0xe8] sm:$0xf]
            %256 = vst [vmem:[%s196 + $0x74] sm:$0xf] %v255
            %v257 = vld [vmem:[%s195 + $0xf0] sm:$0xf]
            %258 = vst [vmem:[%s196 + $0x78] sm:$0xf] %v257
            %v259 = vld [vmem:[%s195 + $0xf8] sm:$0xf]
            %260 = vst [vmem:[%s196 + $0x7c] sm:$0xf] %v259
          $region67: #{gnn_sage_forward.5} parent=61 // loop_footer
            %s194 = sadd.s32 1, %s190
          $region68: #{gnn_sage_forward.5} parent=61 // loop_footer_branch
            %189 = sbr.rel target = $region64
          $region69: #{gnn_sage_forward.5} parent=61 // loop_exit
            _
        $region62: #{gnn_sage_forward.5} parent=53 // pred_fallthru
          _
      $region54: #{gnn_sage_forward.5} parent=49 // pred_fallthru
        _
      %344 = vnop
    $region50: #{gnn_sage_forward.5} parent=1 // pred_fallthru
      _
    // Predicated region
    $region88: #{gnn_sage_forward.5} parent=1 // pred_check
      _
    $region89: #{gnn_sage_forward.5} parent=1 // pred_check_branch
      %346 = sbr.rel (0) target = $region91
    $region90: #{gnn_sage_forward.5} parent=1 // pred_region
      _
    $region91: #{gnn_sage_forward.5} parent=1 // pred_fallthru
      _
    // Predicated region
    $region92: #{gnn_sage_forward.5} parent=1 // pred_check
      _
    $region93: #{gnn_sage_forward.5} parent=1 // pred_check_branch
      %348 = sbr.rel (0) target = $region95
    $region94: #{gnn_sage_forward.5} parent=1 // pred_region
      _
    $region95: #{gnn_sage_forward.5} parent=1 // pred_fallthru
      _
    // Predicated region
    $region96: #{gnn_sage_forward.5} parent=1 // pred_check
      _
    $region97: #{gnn_sage_forward.5} parent=1 // pred_check_branch
      %350 = sbr.rel (0) target = $region99
    $region98: #{gnn_sage_forward.5} parent=1 // pred_region
      _
    $region99: #{gnn_sage_forward.5} parent=1 // pred_fallthru
      _
    // Predicated region
    $region100: #{gnn_sage_forward.5} parent=1 // pred_check
      _
    $region101: #{gnn_sage_forward.5} parent=1 // pred_check_branch
      %352 = sbr.rel (0) target = $region103
    $region102: #{gnn_sage_forward.5} parent=1 // pred_region
      _
    $region103: #{gnn_sage_forward.5} parent=1 // pred_fallthru
      _
    // Predicated region
    $region104: #{gnn_sage_forward.5} parent=1 // pred_check
      _
    $region105: #{gnn_sage_forward.5} parent=1 // pred_check_branch
      %354 = sbr.rel (0) target = $region107
    $region106: #{gnn_sage_forward.5} parent=1 // pred_region
      _
    $region107: #{gnn_sage_forward.5} parent=1 // pred_fallthru
      _
    // Predicated region
    $region108: #{gnn_sage_forward.5} parent=1 // pred_check
      _
    $region109: #{gnn_sage_forward.5} parent=1 // pred_check_branch
      %356 = sbr.rel (0) target = $region111
    $region110: #{gnn_sage_forward.5} parent=1 // pred_region
      _
    $region111: #{gnn_sage_forward.5} parent=1 // pred_fallthru
      _
    %p358 = scmp.eq.s32.totalorder 0, 0
    // Predicated region
    $region112: #{gnn_sage_forward.5} parent=1 // pred_check
      %p359 = pneg %p358
    $region113: #{gnn_sage_forward.5} parent=1 // pred_check_branch
      %361 = sbr.rel (%p359) target = $region115
    $region114: #{gnn_sage_forward.5} parent=1 // pred_region
      %362 = vst [vmem:[#allocation2] sm:$0xff] 0.0
      %363 = vst [vmem:[#allocation2 + $0x8] sm:$0xff] 0.0
      %364 = vst [vmem:[#allocation2 + $0x10] sm:$0xff] 0.0
      %365 = vst [vmem:[#allocation2 + $0x18] sm:$0xff] 0.0
      %366 = vst [vmem:[#allocation2 + $0x20] sm:$0xff] 0.0
      %367 = vst [vmem:[#allocation2 + $0x28] sm:$0xff] 0.0
      %368 = vst [vmem:[#allocation2 + $0x30] sm:$0xff] 0.0
      %369 = vst [vmem:[#allocation2 + $0x38] sm:$0xff] 0.0
      %370 = vst [vmem:[#allocation2 + $0x40] sm:$0xff] 0.0
      %371 = vst [vmem:[#allocation2 + $0x48] sm:$0xff] 0.0
      %372 = vst [vmem:[#allocation2 + $0x50] sm:$0xff] 0.0
      %373 = vst [vmem:[#allocation2 + $0x58] sm:$0xff] 0.0
      %374 = vst [vmem:[#allocation2 + $0x60] sm:$0xff] 0.0
      %375 = vst [vmem:[#allocation2 + $0x68] sm:$0xff] 0.0
      %376 = vst [vmem:[#allocation2 + $0x70] sm:$0xff] 0.0
      %377 = vst [vmem:[#allocation2 + $0x78] sm:$0xff] 0.0
      %378 = vst [vmem:[#allocation2 + $0x80] sm:$0xff] 0.0
      %379 = vst [vmem:[#allocation2 + $0x88] sm:$0xff] 0.0
      %380 = vst [vmem:[#allocation2 + $0x90] sm:$0xff] 0.0
      %381 = vst [vmem:[#allocation2 + $0x98] sm:$0xff] 0.0
      %382 = vst [vmem:[#allocation2 + $0xa0] sm:$0xff] 0.0
      %383 = vst [vmem:[#allocation2 + $0xa8] sm:$0xff] 0.0
      %384 = vst [vmem:[#allocation2 + $0xb0] sm:$0xff] 0.0
      %385 = vst [vmem:[#allocation2 + $0xb8] sm:$0xff] 0.0
      %386 = vst [vmem:[#allocation2 + $0xc0] sm:$0xff] 0.0
      %387 = vst [vmem:[#allocation2 + $0xc8] sm:$0xff] 0.0
      %388 = vst [vmem:[#allocation2 + $0xd0] sm:$0xff] 0.0
      %389 = vst [vmem:[#allocation2 + $0xd8] sm:$0xff] 0.0
      %390 = vst [vmem:[#allocation2 + $0xe0] sm:$0xff] 0.0
      %391 = vst [vmem:[#allocation2 + $0xe8] sm:$0xff] 0.0
      %392 = vst [vmem:[#allocation2 + $0xf0] sm:$0xff] 0.0
      %393 = vst [vmem:[#allocation2 + $0xf8] sm:$0xff] 0.0
    $region115: #{gnn_sage_forward.5} parent=1 // pred_fallthru
      _
    %s394 = smul.u32 0, 256
    %s395 = sshra.s32 %s394, 3
    %s396 = sand.u32 %s394, 7
    %s397 = smul.addr %s395, 4
    %s398 = scalar_lea.vmem [#allocation3], %s397
    %v399 = vld [vmem:[%s398] sm:$0xf]
    %v400 = vld [vmem:[%s398 + $0x4] sm:$0xf]
    %v401 = vld [vmem:[%s398 + $0x8] sm:$0xf]
    %v402 = vld [vmem:[%s398 + $0xc] sm:$0xf]
    %v403 = vld [vmem:[%s398 + $0x10] sm:$0xf]
    %v404 = vld [vmem:[%s398 + $0x14] sm:$0xf]
    %v405 = vld [vmem:[%s398 + $0x18] sm:$0xf]
    %v406 = vld [vmem:[%s398 + $0x1c] sm:$0xf]
    %v407 = vld [vmem:[%s398 + $0x20] sm:$0xf]
    %v408 = vld [vmem:[%s398 + $0x24] sm:$0xf]
    %v409 = vld [vmem:[%s398 + $0x28] sm:$0xf]
    %v410 = vld [vmem:[%s398 + $0x2c] sm:$0xf]
    %v411 = vld [vmem:[%s398 + $0x30] sm:$0xf]
    %v412 = vld [vmem:[%s398 + $0x34] sm:$0xf]
    %v413 = vld [vmem:[%s398 + $0x38] sm:$0xf]
    %v414 = vld [vmem:[%s398 + $0x3c] sm:$0xf]
    %v415 = vld [vmem:[%s398 + $0x40] sm:$0xf]
    %v416 = vld [vmem:[%s398 + $0x44] sm:$0xf]
    %v417 = vld [vmem:[%s398 + $0x48] sm:$0xf]
    %v418 = vld [vmem:[%s398 + $0x4c] sm:$0xf]
    %v419 = vld [vmem:[%s398 + $0x50] sm:$0xf]
    %v420 = vld [vmem:[%s398 + $0x54] sm:$0xf]
    %v421 = vld [vmem:[%s398 + $0x58] sm:$0xf]
    %v422 = vld [vmem:[%s398 + $0x5c] sm:$0xf]
    %v423 = vld [vmem:[%s398 + $0x60] sm:$0xf]
    %v424 = vld [vmem:[%s398 + $0x64] sm:$0xf]
    %v425 = vld [vmem:[%s398 + $0x68] sm:$0xf]
    %v426 = vld [vmem:[%s398 + $0x6c] sm:$0xf]
    %v427 = vld [vmem:[%s398 + $0x70] sm:$0xf]
    %v428 = vld [vmem:[%s398 + $0x74] sm:$0xf]
    %v429 = vld [vmem:[%s398 + $0x78] sm:$0xf]
    %v430 = vld [vmem:[%s398 + $0x7c] sm:$0xf]
    %v431 = vld [vmem:[#allocation2] sm:$0xff]
    %v432 = vld [vmem:[#allocation2 + $0x8] sm:$0xff]
    %v433 = vld [vmem:[#allocation2 + $0x10] sm:$0xff]
    %v434 = vld [vmem:[#allocation2 + $0x18] sm:$0xff]
    %v435 = vld [vmem:[#allocation2 + $0x20] sm:$0xff]
    %v436 = vld [vmem:[#allocation2 + $0x28] sm:$0xff]
    %v437 = vld [vmem:[#allocation2 + $0x30] sm:$0xff]
    %v438 = vld [vmem:[#allocation2 + $0x38] sm:$0xff]
    %v439 = vld [vmem:[#allocation2 + $0x40] sm:$0xff]
    %v440 = vld [vmem:[#allocation2 + $0x48] sm:$0xff]
    %v441 = vld [vmem:[#allocation2 + $0x50] sm:$0xff]
    %v442 = vld [vmem:[#allocation2 + $0x58] sm:$0xff]
    %v443 = vld [vmem:[#allocation2 + $0x60] sm:$0xff]
    %v444 = vld [vmem:[#allocation2 + $0x68] sm:$0xff]
    %v445 = vld [vmem:[#allocation2 + $0x70] sm:$0xff]
    %v446 = vld [vmem:[#allocation2 + $0x78] sm:$0xff]
    %v447 = vld [vmem:[#allocation2 + $0x80] sm:$0xff]
    %v448 = vld [vmem:[#allocation2 + $0x88] sm:$0xff]
    %v449 = vld [vmem:[#allocation2 + $0x90] sm:$0xff]
    %v450 = vld [vmem:[#allocation2 + $0x98] sm:$0xff]
    %v451 = vld [vmem:[#allocation2 + $0xa0] sm:$0xff]
    %v452 = vld [vmem:[#allocation2 + $0xa8] sm:$0xff]
    %v453 = vld [vmem:[#allocation2 + $0xb0] sm:$0xff]
    %v454 = vld [vmem:[#allocation2 + $0xb8] sm:$0xff]
    %v455 = vld [vmem:[#allocation2 + $0xc0] sm:$0xff]
    %v456 = vld [vmem:[#allocation2 + $0xc8] sm:$0xff]
    %v457 = vld [vmem:[#allocation2 + $0xd0] sm:$0xff]
    %v458 = vld [vmem:[#allocation2 + $0xd8] sm:$0xff]
    %v459 = vld [vmem:[#allocation2 + $0xe0] sm:$0xff]
    %v460 = vld [vmem:[#allocation2 + $0xe8] sm:$0xff]
    %v461 = vld [vmem:[#allocation2 + $0xf0] sm:$0xff]
    %v462 = vld [vmem:[#allocation2 + $0xf8] sm:$0xff]
    %v463 = vld [vmem:[%s0] sm:$0xff]
    %v464 = vld [vmem:[%s0 + $0x8] sm:$0xff]
    %v465 = vld [vmem:[%s0 + $0x10] sm:$0xff]
    %v466 = vld [vmem:[%s0 + $0x18] sm:$0xff]
    %v467 = vld [vmem:[%s0 + $0x20] sm:$0xff]
    %v468 = vld [vmem:[%s0 + $0x28] sm:$0xff]
    %v469 = vld [vmem:[%s0 + $0x30] sm:$0xff]
    %v470 = vld [vmem:[%s0 + $0x38] sm:$0xff]
    %v471 = vld [vmem:[%s0 + $0x40] sm:$0xff]
    %v472 = vld [vmem:[%s0 + $0x48] sm:$0xff]
    %v473 = vld [vmem:[%s0 + $0x50] sm:$0xff]
    %v474 = vld [vmem:[%s0 + $0x58] sm:$0xff]
    %v475 = vld [vmem:[%s0 + $0x60] sm:$0xff]
    %v476 = vld [vmem:[%s0 + $0x68] sm:$0xff]
    %v477 = vld [vmem:[%s0 + $0x70] sm:$0xff]
    %v478 = vld [vmem:[%s0 + $0x78] sm:$0xff]
    %v479 = vld [vmem:[%s0 + $0x80] sm:$0xff]
    %v480 = vld [vmem:[%s0 + $0x88] sm:$0xff]
    %v481 = vld [vmem:[%s0 + $0x90] sm:$0xff]
    %v482 = vld [vmem:[%s0 + $0x98] sm:$0xff]
    %v483 = vld [vmem:[%s0 + $0xa0] sm:$0xff]
    %v484 = vld [vmem:[%s0 + $0xa8] sm:$0xff]
    %v485 = vld [vmem:[%s0 + $0xb0] sm:$0xff]
    %v486 = vld [vmem:[%s0 + $0xb8] sm:$0xff]
    %v487 = vld [vmem:[%s0 + $0xc0] sm:$0xff]
    %v488 = vld [vmem:[%s0 + $0xc8] sm:$0xff]
    %v489 = vld [vmem:[%s0 + $0xd0] sm:$0xff]
    %v490 = vld [vmem:[%s0 + $0xd8] sm:$0xff]
    %v491 = vld [vmem:[%s0 + $0xe0] sm:$0xff]
    %v492 = vld [vmem:[%s0 + $0xe8] sm:$0xff]
    %v493 = vld [vmem:[%s0 + $0xf0] sm:$0xff]
    %v494 = vld [vmem:[%s0 + $0xf8] sm:$0xff]
    %v527 = vunpack.c.l.b16 %v463
    %v528 = vunpack.c.h.b16 %v463
    %v529 = vunpack.c.l.b16 %v464
    %v530 = vunpack.c.h.b16 %v464
    %v531 = vunpack.c.l.b16 %v465
    %v532 = vunpack.c.h.b16 %v465
    %v533 = vunpack.c.l.b16 %v466
    %v534 = vunpack.c.h.b16 %v466
    %v535 = vunpack.c.l.b16 %v467
    %v536 = vunpack.c.h.b16 %v467
    %v537 = vunpack.c.l.b16 %v468
    %v538 = vunpack.c.h.b16 %v468
    %v539 = vunpack.c.l.b16 %v469
    %v540 = vunpack.c.h.b16 %v469
    %v541 = vunpack.c.l.b16 %v470
    %v542 = vunpack.c.h.b16 %v470
    %v543 = vunpack.c.l.b16 %v471
    %v544 = vunpack.c.h.b16 %v471
    %v545 = vunpack.c.l.b16 %v472
    %v546 = vunpack.c.h.b16 %v472
    %v547 = vunpack.c.l.b16 %v473
    %v548 = vunpack.c.h.b16 %v473
    %v549 = vunpack.c.l.b16 %v474
    %v550 = vunpack.c.h.b16 %v474
    %v551 = vunpack.c.l.b16 %v475
    %v552 = vunpack.c.h.b16 %v475
    %v553 = vunpack.c.l.b16 %v476
    %v554 = vunpack.c.h.b16 %v476
    %v555 = vunpack.c.l.b16 %v477
    %v556 = vunpack.c.h.b16 %v477
    %v557 = vunpack.c.l.b16 %v478
    %v558 = vunpack.c.h.b16 %v478
    %v559 = vunpack.c.l.b16 %v479
    %v560 = vunpack.c.h.b16 %v479
    %v561 = vunpack.c.l.b16 %v480
    %v562 = vunpack.c.h.b16 %v480
    %v563 = vunpack.c.l.b16 %v481
    %v564 = vunpack.c.h.b16 %v481
    %v565 = vunpack.c.l.b16 %v482
    %v566 = vunpack.c.h.b16 %v482
    %v567 = vunpack.c.l.b16 %v483
    %v568 = vunpack.c.h.b16 %v483
    %v569 = vunpack.c.l.b16 %v484
    %v570 = vunpack.c.h.b16 %v484
    %v571 = vunpack.c.l.b16 %v485
    %v572 = vunpack.c.h.b16 %v485
    %v573 = vunpack.c.l.b16 %v486
    %v574 = vunpack.c.h.b16 %v486
    %v575 = vunpack.c.l.b16 %v487
    %v576 = vunpack.c.h.b16 %v487
    %v577 = vunpack.c.l.b16 %v488
    %v578 = vunpack.c.h.b16 %v488
    %v579 = vunpack.c.l.b16 %v489
    %v580 = vunpack.c.h.b16 %v489
    %v581 = vunpack.c.l.b16 %v490
    %v582 = vunpack.c.h.b16 %v490
    %v583 = vunpack.c.l.b16 %v491
    %v584 = vunpack.c.h.b16 %v491
    %v585 = vunpack.c.l.b16 %v492
    %v586 = vunpack.c.h.b16 %v492
    %v587 = vunpack.c.l.b16 %v493
    %v588 = vunpack.c.h.b16 %v493
    %v589 = vunpack.c.l.b16 %v494
    %v590 = vunpack.c.h.b16 %v494
    %v591 = vpack.c.b16 %v529, %v527
    %v592 = vpack.c.b16 %v530, %v528
    %v593 = vpack.c.b16 %v533, %v531
    %v594 = vpack.c.b16 %v534, %v532
    %v595 = vpack.c.b16 %v537, %v535
    %v596 = vpack.c.b16 %v538, %v536
    %v597 = vpack.c.b16 %v541, %v539
    %v598 = vpack.c.b16 %v542, %v540
    %v599 = vpack.c.b16 %v545, %v543
    %v600 = vpack.c.b16 %v546, %v544
    %v601 = vpack.c.b16 %v549, %v547
    %v602 = vpack.c.b16 %v550, %v548
    %v603 = vpack.c.b16 %v553, %v551
    %v604 = vpack.c.b16 %v554, %v552
    %v605 = vpack.c.b16 %v557, %v555
    %v606 = vpack.c.b16 %v558, %v556
    %v607 = vpack.c.b16 %v561, %v559
    %v608 = vpack.c.b16 %v562, %v560
    %v609 = vpack.c.b16 %v565, %v563
    %v610 = vpack.c.b16 %v566, %v564
    %v611 = vpack.c.b16 %v569, %v567
    %v612 = vpack.c.b16 %v570, %v568
    %v613 = vpack.c.b16 %v573, %v571
    %v614 = vpack.c.b16 %v574, %v572
    %v615 = vpack.c.b16 %v577, %v575
    %v616 = vpack.c.b16 %v578, %v576
    %v617 = vpack.c.b16 %v581, %v579
    %v618 = vpack.c.b16 %v582, %v580
    %v619 = vpack.c.b16 %v585, %v583
    %v620 = vpack.c.b16 %v586, %v584
    %v621 = vpack.c.b16 %v589, %v587
    %v622 = vpack.c.b16 %v590, %v588
    %v687 = vunpack.c.l.b16 %v399
    %v688 = vunpack.c.l.b16 %v400
    %v689 = vunpack.c.l.b16 %v401
    %v690 = vunpack.c.l.b16 %v402
    %v691 = vunpack.c.l.b16 %v403
    %v692 = vunpack.c.l.b16 %v404
    %v693 = vunpack.c.l.b16 %v405
    %v694 = vunpack.c.l.b16 %v406
    %v695 = vunpack.c.l.b16 %v407
    %v696 = vunpack.c.l.b16 %v408
    %v697 = vunpack.c.l.b16 %v409
    %v698 = vunpack.c.l.b16 %v410
    %v699 = vunpack.c.l.b16 %v411
    %v700 = vunpack.c.l.b16 %v412
    %v701 = vunpack.c.l.b16 %v413
    %v702 = vunpack.c.l.b16 %v414
    %v703 = vunpack.c.l.b16 %v415
    %v704 = vunpack.c.l.b16 %v416
    %v705 = vunpack.c.l.b16 %v417
    %v706 = vunpack.c.l.b16 %v418
    %v707 = vunpack.c.l.b16 %v419
    %v708 = vunpack.c.l.b16 %v420
    %v709 = vunpack.c.l.b16 %v421
    %v710 = vunpack.c.l.b16 %v422
    %v711 = vunpack.c.l.b16 %v423
    %v712 = vunpack.c.l.b16 %v424
    %v713 = vunpack.c.l.b16 %v425
    %v714 = vunpack.c.l.b16 %v426
    %v715 = vunpack.c.l.b16 %v427
    %v716 = vunpack.c.l.b16 %v428
    %v717 = vunpack.c.l.b16 %v429
    %v718 = vunpack.c.l.b16 %v430
    %v719 = vpack.c.b16 %v688, %v687
    %v720 = vpack.c.b16 %v690, %v689
    %v721 = vpack.c.b16 %v692, %v691
    %v722 = vpack.c.b16 %v694, %v693
    %v723 = vpack.c.b16 %v696, %v695
    %v724 = vpack.c.b16 %v698, %v697
    %v725 = vpack.c.b16 %v700, %v699
    %v726 = vpack.c.b16 %v702, %v701
    %v727 = vpack.c.b16 %v704, %v703
    %v728 = vpack.c.b16 %v706, %v705
    %v729 = vpack.c.b16 %v708, %v707
    %v730 = vpack.c.b16 %v710, %v709
    %v731 = vpack.c.b16 %v712, %v711
    %v732 = vpack.c.b16 %v714, %v713
    %v733 = vpack.c.b16 %v716, %v715
    %v734 = vpack.c.b16 %v718, %v717
    %751 = vmatprep.subr.bf16.mxu0 0
    %752 = vmatpush1.bf16.msra.mxu0 %v719
    %753 = vmatprep.subr.bf16.mxu0 0
    %754 = vmatpush1.bf16.msra.mxu0 %v720
    %755 = vmatprep.subr.bf16.mxu0 0
    %756 = vmatpush1.bf16.msra.mxu0 %v721
    %757 = vmatprep.subr.bf16.mxu0 0
    %758 = vmatpush1.bf16.msra.mxu0 %v722
    %759 = vmatprep.subr.bf16.mxu0 0
    %760 = vmatpush1.bf16.msra.mxu0 %v723
    %761 = vmatprep.subr.bf16.mxu0 0
    %762 = vmatpush1.bf16.msra.mxu0 %v724
    %763 = vmatprep.subr.bf16.mxu0 0
    %764 = vmatpush1.bf16.msra.mxu0 %v725
    %765 = vmatprep.subr.bf16.mxu0 0
    %766 = vmatpush1.bf16.msra.mxu0 %v726
    %767 = vmatprep.subr.bf16.mxu0 0
    %768 = vmatpush1.bf16.msra.mxu0 %v727
    %769 = vmatprep.subr.bf16.mxu0 0
    %770 = vmatpush1.bf16.msra.mxu0 %v728
    %771 = vmatprep.subr.bf16.mxu0 0
    %772 = vmatpush1.bf16.msra.mxu0 %v729
    %773 = vmatprep.subr.bf16.mxu0 0
    %774 = vmatpush1.bf16.msra.mxu0 %v730
    %775 = vmatprep.subr.bf16.mxu0 0
    %776 = vmatpush1.bf16.msra.mxu0 %v731
    %777 = vmatprep.subr.bf16.mxu0 0
    %778 = vmatpush1.bf16.msra.mxu0 %v732
    %779 = vmatprep.subr.bf16.mxu0 0
    %780 = vmatpush1.bf16.msra.mxu0 %v733
    %781 = vmatprep.subr.bf16.mxu0 0
    %782 = vmatpush1.bf16.msra.mxu0 %v734
    %783 = vmatprep.mubr.bf16.mxu0 %v592
    %784 = vmatmul.mubr.bf16.gmra.mrb[0].mxu0 %v591
    %v785 = vpop.f32.mrb[0].mxu0
    %v786 = vadd.f32 0.0, %v785
    %v787 = vpop.f32.mrb[0].mxu0
    %v788 = vpop.f32.mrb[0].mxu0
    %v789 = vadd.f32 0.0, %v788
    %v790 = vpop.f32.mrb[0].mxu0
    %791 = vmatprep.mubr.bf16.mxu0 %v594
    %792 = vmatmul.mubr.bf16.gmra.mrb[0].mxu0 %v593
    %v793 = vpop.f32.mrb[0].mxu0
    %v794 = vadd.f32 0.0, %v793
    %v795 = vpop.f32.mrb[0].mxu0
    %v796 = vpop.f32.mrb[0].mxu0
    %v797 = vadd.f32 0.0, %v796
    %v798 = vpop.f32.mrb[0].mxu0
    %799 = vmatprep.mubr.bf16.mxu0 %v596
    %800 = vmatmul.mubr.bf16.gmra.mrb[0].mxu0 %v595
    %v801 = vpop.f32.mrb[0].mxu0
    %v802 = vadd.f32 0.0, %v801
    %v803 = vpop.f32.mrb[0].mxu0
    %v804 = vpop.f32.mrb[0].mxu0
    %v805 = vadd.f32 0.0, %v804
    %v806 = vpop.f32.mrb[0].mxu0
    %807 = vmatprep.mubr.bf16.mxu0 %v598
    %808 = vmatmul.mubr.bf16.gmra.mrb[0].mxu0 %v597
    %v809 = vpop.f32.mrb[0].mxu0
    %v810 = vadd.f32 0.0, %v809
    %v811 = vpop.f32.mrb[0].mxu0
    %v812 = vpop.f32.mrb[0].mxu0
    %v813 = vadd.f32 0.0, %v812
    %v814 = vpop.f32.mrb[0].mxu0
    %815 = vmatprep.mubr.bf16.mxu0 %v600
    %816 = vmatmul.mubr.bf16.gmra.mrb[0].mxu0 %v599
    %v817 = vpop.f32.mrb[0].mxu0
    %v818 = vadd.f32 0.0, %v817
    %v819 = vpop.f32.mrb[0].mxu0
    %v820 = vpop.f32.mrb[0].mxu0
    %v821 = vadd.f32 0.0, %v820
    %v822 = vpop.f32.mrb[0].mxu0
    %823 = vmatprep.mubr.bf16.mxu0 %v602
    %824 = vmatmul.mubr.bf16.gmra.mrb[0].mxu0 %v601
    %v825 = vpop.f32.mrb[0].mxu0
    %v826 = vadd.f32 0.0, %v825
    %v827 = vpop.f32.mrb[0].mxu0
    %v828 = vpop.f32.mrb[0].mxu0
    %v829 = vadd.f32 0.0, %v828
    %v830 = vpop.f32.mrb[0].mxu0
    %831 = vmatprep.mubr.bf16.mxu0 %v604
    %832 = vmatmul.mubr.bf16.gmra.mrb[0].mxu0 %v603
    %v833 = vpop.f32.mrb[0].mxu0
    %v834 = vadd.f32 0.0, %v833
    %v835 = vpop.f32.mrb[0].mxu0
    %v836 = vpop.f32.mrb[0].mxu0
    %v837 = vadd.f32 0.0, %v836
    %v838 = vpop.f32.mrb[0].mxu0
    %839 = vmatprep.mubr.bf16.mxu0 %v606
    %840 = vmatmul.mubr.bf16.gmra.mrb[0].mxu0 %v605
    %v841 = vpop.f32.mrb[0].mxu0
    %v842 = vadd.f32 0.0, %v841
    %v843 = vpop.f32.mrb[0].mxu0
    %v844 = vpop.f32.mrb[0].mxu0
    %v845 = vadd.f32 0.0, %v844
    %v846 = vpop.f32.mrb[0].mxu0
    %847 = vmatprep.mubr.bf16.mxu0 %v608
    %848 = vmatmul.mubr.bf16.gmra.mrb[0].mxu0 %v607
    %v849 = vpop.f32.mrb[0].mxu0
    %v850 = vadd.f32 0.0, %v849
    %v851 = vpop.f32.mrb[0].mxu0
    %v852 = vpop.f32.mrb[0].mxu0
    %v853 = vadd.f32 0.0, %v852
    %v854 = vpop.f32.mrb[0].mxu0
    %855 = vmatprep.mubr.bf16.mxu0 %v610
    %856 = vmatmul.mubr.bf16.gmra.mrb[0].mxu0 %v609
    %v857 = vpop.f32.mrb[0].mxu0
    %v858 = vadd.f32 0.0, %v857
    %v859 = vpop.f32.mrb[0].mxu0
    %v860 = vpop.f32.mrb[0].mxu0
    %v861 = vadd.f32 0.0, %v860
    %v862 = vpop.f32.mrb[0].mxu0
    %863 = vmatprep.mubr.bf16.mxu0 %v612
    %864 = vmatmul.mubr.bf16.gmra.mrb[0].mxu0 %v611
    %v865 = vpop.f32.mrb[0].mxu0
    %v866 = vadd.f32 0.0, %v865
    %v867 = vpop.f32.mrb[0].mxu0
    %v868 = vpop.f32.mrb[0].mxu0
    %v869 = vadd.f32 0.0, %v868
    %v870 = vpop.f32.mrb[0].mxu0
    %871 = vmatprep.mubr.bf16.mxu0 %v614
    %872 = vmatmul.mubr.bf16.gmra.mrb[0].mxu0 %v613
    %v873 = vpop.f32.mrb[0].mxu0
    %v874 = vadd.f32 0.0, %v873
    %v875 = vpop.f32.mrb[0].mxu0
    %v876 = vpop.f32.mrb[0].mxu0
    %v877 = vadd.f32 0.0, %v876
    %v878 = vpop.f32.mrb[0].mxu0
    %879 = vmatprep.mubr.bf16.mxu0 %v616
    %880 = vmatmul.mubr.bf16.gmra.mrb[0].mxu0 %v615
    %v881 = vpop.f32.mrb[0].mxu0
    %v882 = vadd.f32 0.0, %v881
    %v883 = vpop.f32.mrb[0].mxu0
    %v884 = vpop.f32.mrb[0].mxu0
    %v885 = vadd.f32 0.0, %v884
    %v886 = vpop.f32.mrb[0].mxu0
    %887 = vmatprep.mubr.bf16.mxu0 %v618
    %888 = vmatmul.mubr.bf16.gmra.mrb[0].mxu0 %v617
    %v889 = vpop.f32.mrb[0].mxu0
    %v890 = vadd.f32 0.0, %v889
    %v891 = vpop.f32.mrb[0].mxu0
    %v892 = vpop.f32.mrb[0].mxu0
    %v893 = vadd.f32 0.0, %v892
    %v894 = vpop.f32.mrb[0].mxu0
    %895 = vmatprep.mubr.bf16.mxu0 %v620
    %896 = vmatmul.mubr.bf16.gmra.mrb[0].mxu0 %v619
    %v897 = vpop.f32.mrb[0].mxu0
    %v898 = vadd.f32 0.0, %v897
    %v899 = vpop.f32.mrb[0].mxu0
    %v900 = vpop.f32.mrb[0].mxu0
    %v901 = vadd.f32 0.0, %v900
    %v902 = vpop.f32.mrb[0].mxu0
    %903 = vmatprep.mubr.bf16.mxu0 %v622
    %904 = vmatmul.mubr.bf16.gmra.mrb[0].mxu0 %v621
    %v905 = vpop.f32.mrb[0].mxu0
    %v906 = vadd.f32 0.0, %v905
    %v907 = vpop.f32.mrb[0].mxu0
    %v908 = vpop.f32.mrb[0].mxu0
    %v909 = vadd.f32 0.0, %v908
    %v910 = vpop.f32.mrb[0].mxu0
    %911 = vdwg.mxu0
    %v912 = vadd.f32 %v431, %v786
    %v913 = vadd.f32 %v432, %v789
    %v914 = vadd.f32 %v433, %v794
    %v915 = vadd.f32 %v434, %v797
    %v916 = vadd.f32 %v435, %v802
    %v917 = vadd.f32 %v436, %v805
    %v918 = vadd.f32 %v437, %v810
    %v919 = vadd.f32 %v438, %v813
    %v920 = vadd.f32 %v439, %v818
    %v921 = vadd.f32 %v440, %v821
    %v922 = vadd.f32 %v441, %v826
    %v923 = vadd.f32 %v442, %v829
    %v924 = vadd.f32 %v443, %v834
    %v925 = vadd.f32 %v444, %v837
    %v926 = vadd.f32 %v445, %v842
    %v927 = vadd.f32 %v446, %v845
    %v928 = vadd.f32 %v447, %v850
    %v929 = vadd.f32 %v448, %v853
    %v930 = vadd.f32 %v449, %v858
    %v931 = vadd.f32 %v450, %v861
    %v932 = vadd.f32 %v451, %v866
    %v933 = vadd.f32 %v452, %v869
    %v934 = vadd.f32 %v453, %v874
    %v935 = vadd.f32 %v454, %v877
    %v936 = vadd.f32 %v455, %v882
    %v937 = vadd.f32 %v456, %v885
    %v938 = vadd.f32 %v457, %v890
    %v939 = vadd.f32 %v458, %v893
    %v940 = vadd.f32 %v459, %v898
    %v941 = vadd.f32 %v460, %v901
    %v942 = vadd.f32 %v461, %v906
    %v943 = vadd.f32 %v462, %v909
    %944 = vst [vmem:[#allocation2] sm:$0xff] %v912
    %945 = vst [vmem:[#allocation2 + $0x8] sm:$0xff] %v913
    %946 = vst [vmem:[#allocation2 + $0x10] sm:$0xff] %v914
    %947 = vst [vmem:[#allocation2 + $0x18] sm:$0xff] %v915
    %948 = vst [vmem:[#allocation2 + $0x20] sm:$0xff] %v916
    %949 = vst [vmem:[#allocation2 + $0x28] sm:$0xff] %v917
    %950 = vst [vmem:[#allocation2 + $0x30] sm:$0xff] %v918
    %951 = vst [vmem:[#allocation2 + $0x38] sm:$0xff] %v919
    %952 = vst [vmem:[#allocation2 + $0x40] sm:$0xff] %v920
    %953 = vst [vmem:[#allocation2 + $0x48] sm:$0xff] %v921
    %954 = vst [vmem:[#allocation2 + $0x50] sm:$0xff] %v922
    %955 = vst [vmem:[#allocation2 + $0x58] sm:$0xff] %v923
    %956 = vst [vmem:[#allocation2 + $0x60] sm:$0xff] %v924
    %957 = vst [vmem:[#allocation2 + $0x68] sm:$0xff] %v925
    %958 = vst [vmem:[#allocation2 + $0x70] sm:$0xff] %v926
    %959 = vst [vmem:[#allocation2 + $0x78] sm:$0xff] %v927
    %960 = vst [vmem:[#allocation2 + $0x80] sm:$0xff] %v928
    %961 = vst [vmem:[#allocation2 + $0x88] sm:$0xff] %v929
    %962 = vst [vmem:[#allocation2 + $0x90] sm:$0xff] %v930
    %963 = vst [vmem:[#allocation2 + $0x98] sm:$0xff] %v931
    %964 = vst [vmem:[#allocation2 + $0xa0] sm:$0xff] %v932
    %965 = vst [vmem:[#allocation2 + $0xa8] sm:$0xff] %v933
    %966 = vst [vmem:[#allocation2 + $0xb0] sm:$0xff] %v934
    %967 = vst [vmem:[#allocation2 + $0xb8] sm:$0xff] %v935
    %968 = vst [vmem:[#allocation2 + $0xc0] sm:$0xff] %v936
    %969 = vst [vmem:[#allocation2 + $0xc8] sm:$0xff] %v937
    %970 = vst [vmem:[#allocation2 + $0xd0] sm:$0xff] %v938
    %971 = vst [vmem:[#allocation2 + $0xd8] sm:$0xff] %v939
    %972 = vst [vmem:[#allocation2 + $0xe0] sm:$0xff] %v940
    %973 = vst [vmem:[#allocation2 + $0xe8] sm:$0xff] %v941
    %974 = vst [vmem:[#allocation2 + $0xf0] sm:$0xff] %v942
    %975 = vst [vmem:[#allocation2 + $0xf8] sm:$0xff] %v943
    // Predicated region
    $region116: #{gnn_sage_forward.5} parent=1 // pred_check
      %p976 = pneg %p358
    $region117: #{gnn_sage_forward.5} parent=1 // pred_check_branch
      %978 = sbr.rel (%p976) target = $region119
    $region118: #{gnn_sage_forward.5} parent=1 // pred_region
      %v979 = vld [vmem:[#allocation2] sm:$0xff]
      %v980 = vld [vmem:[#allocation2 + $0x8] sm:$0xff]
      %v981 = vld [vmem:[#allocation2 + $0x10] sm:$0xff]
      %v982 = vld [vmem:[#allocation2 + $0x18] sm:$0xff]
      %v983 = vld [vmem:[#allocation2 + $0x20] sm:$0xff]
      %v984 = vld [vmem:[#allocation2 + $0x28] sm:$0xff]
      %v985 = vld [vmem:[#allocation2 + $0x30] sm:$0xff]
      %v986 = vld [vmem:[#allocation2 + $0x38] sm:$0xff]
      %v987 = vld [vmem:[#allocation2 + $0x40] sm:$0xff]
      %v988 = vld [vmem:[#allocation2 + $0x48] sm:$0xff]
      %v989 = vld [vmem:[#allocation2 + $0x50] sm:$0xff]
      %v990 = vld [vmem:[#allocation2 + $0x58] sm:$0xff]
      %v991 = vld [vmem:[#allocation2 + $0x60] sm:$0xff]
      %v992 = vld [vmem:[#allocation2 + $0x68] sm:$0xff]
      %v993 = vld [vmem:[#allocation2 + $0x70] sm:$0xff]
      %v994 = vld [vmem:[#allocation2 + $0x78] sm:$0xff]
      %v995 = vld [vmem:[#allocation2 + $0x80] sm:$0xff]
      %v996 = vld [vmem:[#allocation2 + $0x88] sm:$0xff]
      %v997 = vld [vmem:[#allocation2 + $0x90] sm:$0xff]
      %v998 = vld [vmem:[#allocation2 + $0x98] sm:$0xff]
      %v999 = vld [vmem:[#allocation2 + $0xa0] sm:$0xff]
      %v1000 = vld [vmem:[#allocation2 + $0xa8] sm:$0xff]
      %v1001 = vld [vmem:[#allocation2 + $0xb0] sm:$0xff]
      %v1002 = vld [vmem:[#allocation2 + $0xb8] sm:$0xff]
      %v1003 = vld [vmem:[#allocation2 + $0xc0] sm:$0xff]
      %v1004 = vld [vmem:[#allocation2 + $0xc8] sm:$0xff]
      %v1005 = vld [vmem:[#allocation2 + $0xd0] sm:$0xff]
      %v1006 = vld [vmem:[#allocation2 + $0xd8] sm:$0xff]
      %v1007 = vld [vmem:[#allocation2 + $0xe0] sm:$0xff]
      %v1008 = vld [vmem:[#allocation2 + $0xe8] sm:$0xff]
      %v1009 = vld [vmem:[#allocation2 + $0xf0] sm:$0xff]
      %v1010 = vld [vmem:[#allocation2 + $0xf8] sm:$0xff]
      %v1011 = vld [vmem:[%s3] sm:$0xff]
      %v1012 = vld [vmem:[%s3 + $0x8] sm:$0xff]
      %v1013 = vld [vmem:[%s3 + $0x10] sm:$0xff]
      %v1014 = vld [vmem:[%s3 + $0x18] sm:$0xff]
      %v1015 = vld [vmem:[%s3 + $0x20] sm:$0xff]
      %v1016 = vld [vmem:[%s3 + $0x28] sm:$0xff]
      %v1017 = vld [vmem:[%s3 + $0x30] sm:$0xff]
      %v1018 = vld [vmem:[%s3 + $0x38] sm:$0xff]
      %v1019 = vld [vmem:[%s3 + $0x40] sm:$0xff]
      %v1020 = vld [vmem:[%s3 + $0x48] sm:$0xff]
      %v1021 = vld [vmem:[%s3 + $0x50] sm:$0xff]
      %v1022 = vld [vmem:[%s3 + $0x58] sm:$0xff]
      %v1023 = vld [vmem:[%s3 + $0x60] sm:$0xff]
      %v1024 = vld [vmem:[%s3 + $0x68] sm:$0xff]
      %v1025 = vld [vmem:[%s3 + $0x70] sm:$0xff]
      %v1026 = vld [vmem:[%s3 + $0x78] sm:$0xff]
      %v1027 = vld [vmem:[%s3 + $0x80] sm:$0xff]
      %v1028 = vld [vmem:[%s3 + $0x88] sm:$0xff]
      %v1029 = vld [vmem:[%s3 + $0x90] sm:$0xff]
      %v1030 = vld [vmem:[%s3 + $0x98] sm:$0xff]
      %v1031 = vld [vmem:[%s3 + $0xa0] sm:$0xff]
      %v1032 = vld [vmem:[%s3 + $0xa8] sm:$0xff]
      %v1033 = vld [vmem:[%s3 + $0xb0] sm:$0xff]
      %v1034 = vld [vmem:[%s3 + $0xb8] sm:$0xff]
      %v1035 = vld [vmem:[%s3 + $0xc0] sm:$0xff]
      %v1036 = vld [vmem:[%s3 + $0xc8] sm:$0xff]
      %v1037 = vld [vmem:[%s3 + $0xd0] sm:$0xff]
      %v1038 = vld [vmem:[%s3 + $0xd8] sm:$0xff]
      %v1039 = vld [vmem:[%s3 + $0xe0] sm:$0xff]
      %v1040 = vld [vmem:[%s3 + $0xe8] sm:$0xff]
      %v1041 = vld [vmem:[%s3 + $0xf0] sm:$0xff]
      %v1042 = vld [vmem:[%s3 + $0xf8] sm:$0xff]
      %1044 = vset.pattern.permute.xlu0 0
      %1045 = vperm.xlu0 %1044, %v1011
      %v1046 = vpop.permute.xlu0 %1045
      %1049 = vset.pattern.permute.xlu0 0
      %1050 = vperm.xlu0 %1049, %v1012
      %v1051 = vpop.permute.xlu0 %1050
      %1054 = vset.pattern.permute.xlu0 0
      %1055 = vperm.xlu0 %1054, %v1013
      %v1056 = vpop.permute.xlu0 %1055
      %1059 = vset.pattern.permute.xlu0 0
      %1060 = vperm.xlu0 %1059, %v1014
      %v1061 = vpop.permute.xlu0 %1060
      %1064 = vset.pattern.permute.xlu0 0
      %1065 = vperm.xlu0 %1064, %v1015
      %v1066 = vpop.permute.xlu0 %1065
      %1069 = vset.pattern.permute.xlu0 0
      %1070 = vperm.xlu0 %1069, %v1016
      %v1071 = vpop.permute.xlu0 %1070
      %1074 = vset.pattern.permute.xlu0 0
      %1075 = vperm.xlu0 %1074, %v1017
      %v1076 = vpop.permute.xlu0 %1075
      %1079 = vset.pattern.permute.xlu0 0
      %1080 = vperm.xlu0 %1079, %v1018
      %v1081 = vpop.permute.xlu0 %1080
      %1084 = vset.pattern.permute.xlu0 0
      %1085 = vperm.xlu0 %1084, %v1019
      %v1086 = vpop.permute.xlu0 %1085
      %1089 = vset.pattern.permute.xlu0 0
      %1090 = vperm.xlu0 %1089, %v1020
      %v1091 = vpop.permute.xlu0 %1090
      %1094 = vset.pattern.permute.xlu0 0
      %1095 = vperm.xlu0 %1094, %v1021
      %v1096 = vpop.permute.xlu0 %1095
      %1099 = vset.pattern.permute.xlu0 0
      %1100 = vperm.xlu0 %1099, %v1022
      %v1101 = vpop.permute.xlu0 %1100
      %1104 = vset.pattern.permute.xlu0 0
      %1105 = vperm.xlu0 %1104, %v1023
      %v1106 = vpop.permute.xlu0 %1105
      %1109 = vset.pattern.permute.xlu0 0
      %1110 = vperm.xlu0 %1109, %v1024
      %v1111 = vpop.permute.xlu0 %1110
      %1114 = vset.pattern.permute.xlu0 0
      %1115 = vperm.xlu0 %1114, %v1025
      %v1116 = vpop.permute.xlu0 %1115
      %1119 = vset.pattern.permute.xlu0 0
      %1120 = vperm.xlu0 %1119, %v1026
      %v1121 = vpop.permute.xlu0 %1120
      %1124 = vset.pattern.permute.xlu0 0
      %1125 = vperm.xlu0 %1124, %v1027
      %v1126 = vpop.permute.xlu0 %1125
      %1129 = vset.pattern.permute.xlu0 0
      %1130 = vperm.xlu0 %1129, %v1028
      %v1131 = vpop.permute.xlu0 %1130
      %1134 = vset.pattern.permute.xlu0 0
      %1135 = vperm.xlu0 %1134, %v1029
      %v1136 = vpop.permute.xlu0 %1135
      %1139 = vset.pattern.permute.xlu0 0
      %1140 = vperm.xlu0 %1139, %v1030
      %v1141 = vpop.permute.xlu0 %1140
      %1144 = vset.pattern.permute.xlu0 0
      %1145 = vperm.xlu0 %1144, %v1031
      %v1146 = vpop.permute.xlu0 %1145
      %1149 = vset.pattern.permute.xlu0 0
      %1150 = vperm.xlu0 %1149, %v1032
      %v1151 = vpop.permute.xlu0 %1150
      %1154 = vset.pattern.permute.xlu0 0
      %1155 = vperm.xlu0 %1154, %v1033
      %v1156 = vpop.permute.xlu0 %1155
      %1159 = vset.pattern.permute.xlu0 0
      %1160 = vperm.xlu0 %1159, %v1034
      %v1161 = vpop.permute.xlu0 %1160
      %1164 = vset.pattern.permute.xlu0 0
      %1165 = vperm.xlu0 %1164, %v1035
      %v1166 = vpop.permute.xlu0 %1165
      %1169 = vset.pattern.permute.xlu0 0
      %1170 = vperm.xlu0 %1169, %v1036
      %v1171 = vpop.permute.xlu0 %1170
      %1174 = vset.pattern.permute.xlu0 0
      %1175 = vperm.xlu0 %1174, %v1037
      %v1176 = vpop.permute.xlu0 %1175
      %1179 = vset.pattern.permute.xlu0 0
      %1180 = vperm.xlu0 %1179, %v1038
      %v1181 = vpop.permute.xlu0 %1180
      %1184 = vset.pattern.permute.xlu0 0
      %1185 = vperm.xlu0 %1184, %v1039
      %v1186 = vpop.permute.xlu0 %1185
      %1189 = vset.pattern.permute.xlu0 0
      %1190 = vperm.xlu0 %1189, %v1040
      %v1191 = vpop.permute.xlu0 %1190
      %1194 = vset.pattern.permute.xlu0 0
      %1195 = vperm.xlu0 %1194, %v1041
      %v1196 = vpop.permute.xlu0 %1195
      %1199 = vset.pattern.permute.xlu0 0
      %1200 = vperm.xlu0 %1199, %v1042
      %v1201 = vpop.permute.xlu0 %1200
      %v1203 = vmul.f32 %v979, %v1046
      %v1204 = vmul.f32 %v980, %v1051
      %v1205 = vmul.f32 %v981, %v1056
      %v1206 = vmul.f32 %v982, %v1061
      %v1207 = vmul.f32 %v983, %v1066
      %v1208 = vmul.f32 %v984, %v1071
      %v1209 = vmul.f32 %v985, %v1076
      %v1210 = vmul.f32 %v986, %v1081
      %v1211 = vmul.f32 %v987, %v1086
      %v1212 = vmul.f32 %v988, %v1091
      %v1213 = vmul.f32 %v989, %v1096
      %v1214 = vmul.f32 %v990, %v1101
      %v1215 = vmul.f32 %v991, %v1106
      %v1216 = vmul.f32 %v992, %v1111
      %v1217 = vmul.f32 %v993, %v1116
      %v1218 = vmul.f32 %v994, %v1121
      %v1219 = vmul.f32 %v995, %v1126
      %v1220 = vmul.f32 %v996, %v1131
      %v1221 = vmul.f32 %v997, %v1136
      %v1222 = vmul.f32 %v998, %v1141
      %v1223 = vmul.f32 %v999, %v1146
      %v1224 = vmul.f32 %v1000, %v1151
      %v1225 = vmul.f32 %v1001, %v1156
      %v1226 = vmul.f32 %v1002, %v1161
      %v1227 = vmul.f32 %v1003, %v1166
      %v1228 = vmul.f32 %v1004, %v1171
      %v1229 = vmul.f32 %v1005, %v1176
      %v1230 = vmul.f32 %v1006, %v1181
      %v1231 = vmul.f32 %v1007, %v1186
      %v1232 = vmul.f32 %v1008, %v1191
      %v1233 = vmul.f32 %v1009, %v1196
      %v1234 = vmul.f32 %v1010, %v1201
      %v1235 = vld [vmem:[#allocation4] sm:$0xf]
      %v1236 = vld [vmem:[#allocation4 + $0x4] sm:$0xf]
      %v1237 = vld [vmem:[#allocation4 + $0x8] sm:$0xf]
      %v1238 = vld [vmem:[#allocation4 + $0xc] sm:$0xf]
      %v1239 = vld [vmem:[#allocation4 + $0x10] sm:$0xf]
      %v1240 = vld [vmem:[#allocation4 + $0x14] sm:$0xf]
      %v1241 = vld [vmem:[#allocation4 + $0x18] sm:$0xf]
      %v1242 = vld [vmem:[#allocation4 + $0x1c] sm:$0xf]
      %v1243 = vld [vmem:[#allocation4 + $0x20] sm:$0xf]
      %v1244 = vld [vmem:[#allocation4 + $0x24] sm:$0xf]
      %v1245 = vld [vmem:[#allocation4 + $0x28] sm:$0xf]
      %v1246 = vld [vmem:[#allocation4 + $0x2c] sm:$0xf]
      %v1247 = vld [vmem:[#allocation4 + $0x30] sm:$0xf]
      %v1248 = vld [vmem:[#allocation4 + $0x34] sm:$0xf]
      %v1249 = vld [vmem:[#allocation4 + $0x38] sm:$0xf]
      %v1250 = vld [vmem:[#allocation4 + $0x3c] sm:$0xf]
      %v1251 = vld [vmem:[#allocation4 + $0x40] sm:$0xf]
      %v1252 = vld [vmem:[#allocation4 + $0x44] sm:$0xf]
      %v1253 = vld [vmem:[#allocation4 + $0x48] sm:$0xf]
      %v1254 = vld [vmem:[#allocation4 + $0x4c] sm:$0xf]
      %v1255 = vld [vmem:[#allocation4 + $0x50] sm:$0xf]
      %v1256 = vld [vmem:[#allocation4 + $0x54] sm:$0xf]
      %v1257 = vld [vmem:[#allocation4 + $0x58] sm:$0xf]
      %v1258 = vld [vmem:[#allocation4 + $0x5c] sm:$0xf]
      %v1259 = vld [vmem:[#allocation4 + $0x60] sm:$0xf]
      %v1260 = vld [vmem:[#allocation4 + $0x64] sm:$0xf]
      %v1261 = vld [vmem:[#allocation4 + $0x68] sm:$0xf]
      %v1262 = vld [vmem:[#allocation4 + $0x6c] sm:$0xf]
      %v1263 = vld [vmem:[#allocation4 + $0x70] sm:$0xf]
      %v1264 = vld [vmem:[#allocation4 + $0x74] sm:$0xf]
      %v1265 = vld [vmem:[#allocation4 + $0x78] sm:$0xf]
      %v1266 = vld [vmem:[#allocation4 + $0x7c] sm:$0xf]
      %v1267 = vunpack.c.l.bf16 %v1235
      %v1268 = vunpack.c.l.bf16 %v1236
      %v1269 = vunpack.c.l.bf16 %v1237
      %v1270 = vunpack.c.l.bf16 %v1238
      %v1271 = vunpack.c.l.bf16 %v1239
      %v1272 = vunpack.c.l.bf16 %v1240
      %v1273 = vunpack.c.l.bf16 %v1241
      %v1274 = vunpack.c.l.bf16 %v1242
      %v1275 = vunpack.c.l.bf16 %v1243
      %v1276 = vunpack.c.l.bf16 %v1244
      %v1277 = vunpack.c.l.bf16 %v1245
      %v1278 = vunpack.c.l.bf16 %v1246
      %v1279 = vunpack.c.l.bf16 %v1247
      %v1280 = vunpack.c.l.bf16 %v1248
      %v1281 = vunpack.c.l.bf16 %v1249
      %v1282 = vunpack.c.l.bf16 %v1250
      %v1283 = vunpack.c.l.bf16 %v1251
      %v1284 = vunpack.c.l.bf16 %v1252
      %v1285 = vunpack.c.l.bf16 %v1253
      %v1286 = vunpack.c.l.bf16 %v1254
      %v1287 = vunpack.c.l.bf16 %v1255
      %v1288 = vunpack.c.l.bf16 %v1256
      %v1289 = vunpack.c.l.bf16 %v1257
      %v1290 = vunpack.c.l.bf16 %v1258
      %v1291 = vunpack.c.l.bf16 %v1259
      %v1292 = vunpack.c.l.bf16 %v1260
      %v1293 = vunpack.c.l.bf16 %v1261
      %v1294 = vunpack.c.l.bf16 %v1262
      %v1295 = vunpack.c.l.bf16 %v1263
      %v1296 = vunpack.c.l.bf16 %v1264
      %v1297 = vunpack.c.l.bf16 %v1265
      %v1298 = vunpack.c.l.bf16 %v1266
      %v1299 = vadd.f32 %v1203, %v1267
      %v1300 = vadd.f32 %v1204, %v1268
      %v1301 = vadd.f32 %v1205, %v1269
      %v1302 = vadd.f32 %v1206, %v1270
      %v1303 = vadd.f32 %v1207, %v1271
      %v1304 = vadd.f32 %v1208, %v1272
      %v1305 = vadd.f32 %v1209, %v1273
      %v1306 = vadd.f32 %v1210, %v1274
      %v1307 = vadd.f32 %v1211, %v1275
      %v1308 = vadd.f32 %v1212, %v1276
      %v1309 = vadd.f32 %v1213, %v1277
      %v1310 = vadd.f32 %v1214, %v1278
      %v1311 = vadd.f32 %v1215, %v1279
      %v1312 = vadd.f32 %v1216, %v1280
      %v1313 = vadd.f32 %v1217, %v1281
      %v1314 = vadd.f32 %v1218, %v1282
      %v1315 = vadd.f32 %v1219, %v1283
      %v1316 = vadd.f32 %v1220, %v1284
      %v1317 = vadd.f32 %v1221, %v1285
      %v1318 = vadd.f32 %v1222, %v1286
      %v1319 = vadd.f32 %v1223, %v1287
      %v1320 = vadd.f32 %v1224, %v1288
      %v1321 = vadd.f32 %v1225, %v1289
      %v1322 = vadd.f32 %v1226, %v1290
      %v1323 = vadd.f32 %v1227, %v1291
      %v1324 = vadd.f32 %v1228, %v1292
      %v1325 = vadd.f32 %v1229, %v1293
      %v1326 = vadd.f32 %v1230, %v1294
      %v1327 = vadd.f32 %v1231, %v1295
      %v1328 = vadd.f32 %v1232, %v1296
      %v1329 = vadd.f32 %v1233, %v1297
      %v1330 = vadd.f32 %v1234, %v1298
      %v1331 = vld [vmem:[%s4] sm:$0x1]
      %v1333 = vlaneseq
      %v1334 = vshrl.u32 %v1333, 7
      %v1335 = vsub.s32 0, %v1334
      %v1336 = vrot.slane %v1331, %v1335
      %v1338 = vadd.f32 %v1299, %v1336
      %v1339 = vadd.f32 %v1300, %v1336
      %v1340 = vadd.f32 %v1301, %v1336
      %v1341 = vadd.f32 %v1302, %v1336
      %v1342 = vadd.f32 %v1303, %v1336
      %v1343 = vadd.f32 %v1304, %v1336
      %v1344 = vadd.f32 %v1305, %v1336
      %v1345 = vadd.f32 %v1306, %v1336
      %v1346 = vadd.f32 %v1307, %v1336
      %v1347 = vadd.f32 %v1308, %v1336
      %v1348 = vadd.f32 %v1309, %v1336
      %v1349 = vadd.f32 %v1310, %v1336
      %v1350 = vadd.f32 %v1311, %v1336
      %v1351 = vadd.f32 %v1312, %v1336
      %v1352 = vadd.f32 %v1313, %v1336
      %v1353 = vadd.f32 %v1314, %v1336
      %v1354 = vadd.f32 %v1315, %v1336
      %v1355 = vadd.f32 %v1316, %v1336
      %v1356 = vadd.f32 %v1317, %v1336
      %v1357 = vadd.f32 %v1318, %v1336
      %v1358 = vadd.f32 %v1319, %v1336
      %v1359 = vadd.f32 %v1320, %v1336
      %v1360 = vadd.f32 %v1321, %v1336
      %v1361 = vadd.f32 %v1322, %v1336
      %v1362 = vadd.f32 %v1323, %v1336
      %v1363 = vadd.f32 %v1324, %v1336
      %v1364 = vadd.f32 %v1325, %v1336
      %v1365 = vadd.f32 %v1326, %v1336
      %v1366 = vadd.f32 %v1327, %v1336
      %v1367 = vadd.f32 %v1328, %v1336
      %v1368 = vadd.f32 %v1329, %v1336
      %v1369 = vadd.f32 %v1330, %v1336
      %v1370 = vmax.f32 %v1338, 0.0
      %v1371 = vmax.f32 %v1339, 0.0
      %v1372 = vmax.f32 %v1340, 0.0
      %v1373 = vmax.f32 %v1341, 0.0
      %v1374 = vmax.f32 %v1342, 0.0
      %v1375 = vmax.f32 %v1343, 0.0
      %v1376 = vmax.f32 %v1344, 0.0
      %v1377 = vmax.f32 %v1345, 0.0
      %v1378 = vmax.f32 %v1346, 0.0
      %v1379 = vmax.f32 %v1347, 0.0
      %v1380 = vmax.f32 %v1348, 0.0
      %v1381 = vmax.f32 %v1349, 0.0
      %v1382 = vmax.f32 %v1350, 0.0
      %v1383 = vmax.f32 %v1351, 0.0
      %v1384 = vmax.f32 %v1352, 0.0
      %v1385 = vmax.f32 %v1353, 0.0
      %v1386 = vmax.f32 %v1354, 0.0
      %v1387 = vmax.f32 %v1355, 0.0
      %v1388 = vmax.f32 %v1356, 0.0
      %v1389 = vmax.f32 %v1357, 0.0
      %v1390 = vmax.f32 %v1358, 0.0
      %v1391 = vmax.f32 %v1359, 0.0
      %v1392 = vmax.f32 %v1360, 0.0
      %v1393 = vmax.f32 %v1361, 0.0
      %v1394 = vmax.f32 %v1362, 0.0
      %v1395 = vmax.f32 %v1363, 0.0
      %v1396 = vmax.f32 %v1364, 0.0
      %v1397 = vmax.f32 %v1365, 0.0
      %v1398 = vmax.f32 %v1366, 0.0
      %v1399 = vmax.f32 %v1367, 0.0
      %v1400 = vmax.f32 %v1368, 0.0
      %v1401 = vmax.f32 %v1369, 0.0
      %v1402 = vpack.c.bf16 %v1371, %v1370
      %v1403 = vpack.c.bf16 %v1373, %v1372
      %v1404 = vpack.c.bf16 %v1375, %v1374
      %v1405 = vpack.c.bf16 %v1377, %v1376
      %v1406 = vpack.c.bf16 %v1379, %v1378
      %v1407 = vpack.c.bf16 %v1381, %v1380
      %v1408 = vpack.c.bf16 %v1383, %v1382
      %v1409 = vpack.c.bf16 %v1385, %v1384
      %v1410 = vpack.c.bf16 %v1387, %v1386
      %v1411 = vpack.c.bf16 %v1389, %v1388
      %v1412 = vpack.c.bf16 %v1391, %v1390
      %v1413 = vpack.c.bf16 %v1393, %v1392
      %v1414 = vpack.c.bf16 %v1395, %v1394
      %v1415 = vpack.c.bf16 %v1397, %v1396
      %v1416 = vpack.c.bf16 %v1399, %v1398
      %v1417 = vpack.c.bf16 %v1401, %v1400
      %v1418 = vld [vmem:[%s5] sm:$0xf]
      %v1419 = vld [vmem:[%s5 + $0x4] sm:$0xf]
      %v1420 = vld [vmem:[%s5 + $0x8] sm:$0xf]
      %v1421 = vld [vmem:[%s5 + $0xc] sm:$0xf]
      %v1422 = vld [vmem:[%s5 + $0x10] sm:$0xf]
      %v1423 = vld [vmem:[%s5 + $0x14] sm:$0xf]
      %v1424 = vld [vmem:[%s5 + $0x18] sm:$0xf]
      %v1425 = vld [vmem:[%s5 + $0x1c] sm:$0xf]
      %v1426 = vld [vmem:[%s5 + $0x20] sm:$0xf]
      %v1427 = vld [vmem:[%s5 + $0x24] sm:$0xf]
      %v1428 = vld [vmem:[%s5 + $0x28] sm:$0xf]
      %v1429 = vld [vmem:[%s5 + $0x2c] sm:$0xf]
      %v1430 = vld [vmem:[%s5 + $0x30] sm:$0xf]
      %v1431 = vld [vmem:[%s5 + $0x34] sm:$0xf]
      %v1432 = vld [vmem:[%s5 + $0x38] sm:$0xf]
      %v1433 = vld [vmem:[%s5 + $0x3c] sm:$0xf]
      %v1434 = vld [vmem:[%s6] sm:$0x1]
      %v1436 = vlaneseq
      %v1437 = vshrl.u32 %v1436, 7
      %v1438 = vsub.s32 0, %v1437
      %v1439 = vrot.slane %v1434, %v1438
      %v1457 = vunpack.c.l.b16 %v1418
      %v1458 = vunpack.c.l.b16 %v1419
      %v1459 = vunpack.c.l.b16 %v1420
      %v1460 = vunpack.c.l.b16 %v1421
      %v1461 = vunpack.c.l.b16 %v1422
      %v1462 = vunpack.c.l.b16 %v1423
      %v1463 = vunpack.c.l.b16 %v1424
      %v1464 = vunpack.c.l.b16 %v1425
      %v1465 = vunpack.c.l.b16 %v1426
      %v1466 = vunpack.c.l.b16 %v1427
      %v1467 = vunpack.c.l.b16 %v1428
      %v1468 = vunpack.c.l.b16 %v1429
      %v1469 = vunpack.c.l.b16 %v1430
      %v1470 = vunpack.c.l.b16 %v1431
      %v1471 = vunpack.c.l.b16 %v1432
      %v1472 = vunpack.c.l.b16 %v1433
      %v1473 = vpack.c.b16 %v1458, %v1457
      %v1474 = vpack.c.b16 %v1460, %v1459
      %v1475 = vpack.c.b16 %v1462, %v1461
      %v1476 = vpack.c.b16 %v1464, %v1463
      %v1477 = vpack.c.b16 %v1466, %v1465
      %v1478 = vpack.c.b16 %v1468, %v1467
      %v1479 = vpack.c.b16 %v1470, %v1469
      %v1480 = vpack.c.b16 %v1472, %v1471
      %1489 = vmatprep.subr.bf16.mxu0 0
      %1490 = vmatpush1.bf16.msra.mxu0 %v1473
      %1491 = vmatprep.subr.bf16.mxu0 0
      %1492 = vmatpush1.bf16.msra.mxu0 %v1474
      %1493 = vmatprep.subr.bf16.mxu0 0
      %1494 = vmatpush1.bf16.msra.mxu0 %v1475
      %1495 = vmatprep.subr.bf16.mxu0 0
      %1496 = vmatpush1.bf16.msra.mxu0 %v1476
      %1497 = vmatprep.subr.bf16.mxu0 0
      %1498 = vmatpush1.bf16.msra.mxu0 %v1477
      %1499 = vmatprep.subr.bf16.mxu0 0
      %1500 = vmatpush1.bf16.msra.mxu0 %v1478
      %1501 = vmatprep.subr.bf16.mxu0 0
      %1502 = vmatpush1.bf16.msra.mxu0 %v1479
      %1503 = vmatprep.subr.bf16.mxu0 0
      %1504 = vmatpush1.bf16.msra.mxu0 %v1480
      %1505 = vmatprep.subr.bf16.mxu0 0
      %1506 = vmatpush1.bf16.msra.mxu0 0
      %1507 = vmatprep.subr.bf16.mxu0 0
      %1508 = vmatpush1.bf16.msra.mxu0 0
      %1509 = vmatprep.subr.bf16.mxu0 0
      %1510 = vmatpush1.bf16.msra.mxu0 0
      %1511 = vmatprep.subr.bf16.mxu0 0
      %1512 = vmatpush1.bf16.msra.mxu0 0
      %1513 = vmatprep.subr.bf16.mxu0 0
      %1514 = vmatpush1.bf16.msra.mxu0 0
      %1515 = vmatprep.subr.bf16.mxu0 0
      %1516 = vmatpush1.bf16.msra.mxu0 0
      %1517 = vmatprep.subr.bf16.mxu0 0
      %1518 = vmatpush1.bf16.msra.mxu0 0
      %1519 = vmatprep.subr.bf16.mxu0 0
      %1520 = vmatpush1.bf16.msra.mxu0 0
      %1521 = vmatprep.mubr.bf16.mxu0 0
      %1522 = vmatmul.mubr.bf16.gmra.mrb[0].mxu0 %v1402
      %v1523 = vpop.f32.mrb[0].mxu0
      %v1524 = vadd.f32 %v1439, %v1523
      %v1525 = vpop.f32.mrb[0].mxu0
      %v1526 = vpop.f32.mrb[0].mxu0
      %v1527 = vadd.f32 %v1439, %v1526
      %v1528 = vpop.f32.mrb[0].mxu0
      %1529 = vmatprep.mubr.bf16.mxu0 0
      %1530 = vmatmul.mubr.bf16.gmra.mrb[0].mxu0 %v1403
      %v1531 = vpop.f32.mrb[0].mxu0
      %v1532 = vadd.f32 %v1439, %v1531
      %v1533 = vpop.f32.mrb[0].mxu0
      %v1534 = vpop.f32.mrb[0].mxu0
      %v1535 = vadd.f32 %v1439, %v1534
      %v1536 = vpop.f32.mrb[0].mxu0
      %1537 = vmatprep.mubr.bf16.mxu0 0
      %1538 = vmatmul.mubr.bf16.gmra.mrb[0].mxu0 %v1404
      %v1539 = vpop.f32.mrb[0].mxu0
      %v1540 = vadd.f32 %v1439, %v1539
      %v1541 = vpop.f32.mrb[0].mxu0
      %v1542 = vpop.f32.mrb[0].mxu0
      %v1543 = vadd.f32 %v1439, %v1542
      %v1544 = vpop.f32.mrb[0].mxu0
      %1545 = vmatprep.mubr.bf16.mxu0 0
      %1546 = vmatmul.mubr.bf16.gmra.mrb[0].mxu0 %v1405
      %v1547 = vpop.f32.mrb[0].mxu0
      %v1548 = vadd.f32 %v1439, %v1547
      %v1549 = vpop.f32.mrb[0].mxu0
      %v1550 = vpop.f32.mrb[0].mxu0
      %v1551 = vadd.f32 %v1439, %v1550
      %v1552 = vpop.f32.mrb[0].mxu0
      %1553 = vmatprep.mubr.bf16.mxu0 0
      %1554 = vmatmul.mubr.bf16.gmra.mrb[0].mxu0 %v1406
      %v1555 = vpop.f32.mrb[0].mxu0
      %v1556 = vadd.f32 %v1439, %v1555
      %v1557 = vpop.f32.mrb[0].mxu0
      %v1558 = vpop.f32.mrb[0].mxu0
      %v1559 = vadd.f32 %v1439, %v1558
      %v1560 = vpop.f32.mrb[0].mxu0
      %1561 = vmatprep.mubr.bf16.mxu0 0
      %1562 = vmatmul.mubr.bf16.gmra.mrb[0].mxu0 %v1407
      %v1563 = vpop.f32.mrb[0].mxu0
      %v1564 = vadd.f32 %v1439, %v1563
      %v1565 = vpop.f32.mrb[0].mxu0
      %v1566 = vpop.f32.mrb[0].mxu0
      %v1567 = vadd.f32 %v1439, %v1566
      %v1568 = vpop.f32.mrb[0].mxu0
      %1569 = vmatprep.mubr.bf16.mxu0 0
      %1570 = vmatmul.mubr.bf16.gmra.mrb[0].mxu0 %v1408
      %v1571 = vpop.f32.mrb[0].mxu0
      %v1572 = vadd.f32 %v1439, %v1571
      %v1573 = vpop.f32.mrb[0].mxu0
      %v1574 = vpop.f32.mrb[0].mxu0
      %v1575 = vadd.f32 %v1439, %v1574
      %v1576 = vpop.f32.mrb[0].mxu0
      %1577 = vmatprep.mubr.bf16.mxu0 0
      %1578 = vmatmul.mubr.bf16.gmra.mrb[0].mxu0 %v1409
      %v1579 = vpop.f32.mrb[0].mxu0
      %v1580 = vadd.f32 %v1439, %v1579
      %v1581 = vpop.f32.mrb[0].mxu0
      %v1582 = vpop.f32.mrb[0].mxu0
      %v1583 = vadd.f32 %v1439, %v1582
      %v1584 = vpop.f32.mrb[0].mxu0
      %1585 = vmatprep.mubr.bf16.mxu0 0
      %1586 = vmatmul.mubr.bf16.gmra.mrb[0].mxu0 %v1410
      %v1587 = vpop.f32.mrb[0].mxu0
      %v1588 = vadd.f32 %v1439, %v1587
      %v1589 = vpop.f32.mrb[0].mxu0
      %v1590 = vpop.f32.mrb[0].mxu0
      %v1591 = vadd.f32 %v1439, %v1590
      %v1592 = vpop.f32.mrb[0].mxu0
      %1593 = vmatprep.mubr.bf16.mxu0 0
      %1594 = vmatmul.mubr.bf16.gmra.mrb[0].mxu0 %v1411
      %v1595 = vpop.f32.mrb[0].mxu0
      %v1596 = vadd.f32 %v1439, %v1595
      %v1597 = vpop.f32.mrb[0].mxu0
      %v1598 = vpop.f32.mrb[0].mxu0
      %v1599 = vadd.f32 %v1439, %v1598
      %v1600 = vpop.f32.mrb[0].mxu0
      %1601 = vmatprep.mubr.bf16.mxu0 0
      %1602 = vmatmul.mubr.bf16.gmra.mrb[0].mxu0 %v1412
      %v1603 = vpop.f32.mrb[0].mxu0
      %v1604 = vadd.f32 %v1439, %v1603
      %v1605 = vpop.f32.mrb[0].mxu0
      %v1606 = vpop.f32.mrb[0].mxu0
      %v1607 = vadd.f32 %v1439, %v1606
      %v1608 = vpop.f32.mrb[0].mxu0
      %1609 = vmatprep.mubr.bf16.mxu0 0
      %1610 = vmatmul.mubr.bf16.gmra.mrb[0].mxu0 %v1413
      %v1611 = vpop.f32.mrb[0].mxu0
      %v1612 = vadd.f32 %v1439, %v1611
      %v1613 = vpop.f32.mrb[0].mxu0
      %v1614 = vpop.f32.mrb[0].mxu0
      %v1615 = vadd.f32 %v1439, %v1614
      %v1616 = vpop.f32.mrb[0].mxu0
      %1617 = vmatprep.mubr.bf16.mxu0 0
      %1618 = vmatmul.mubr.bf16.gmra.mrb[0].mxu0 %v1414
      %v1619 = vpop.f32.mrb[0].mxu0
      %v1620 = vadd.f32 %v1439, %v1619
      %v1621 = vpop.f32.mrb[0].mxu0
      %v1622 = vpop.f32.mrb[0].mxu0
      %v1623 = vadd.f32 %v1439, %v1622
      %v1624 = vpop.f32.mrb[0].mxu0
      %1625 = vmatprep.mubr.bf16.mxu0 0
      %1626 = vmatmul.mubr.bf16.gmra.mrb[0].mxu0 %v1415
      %v1627 = vpop.f32.mrb[0].mxu0
      %v1628 = vadd.f32 %v1439, %v1627
      %v1629 = vpop.f32.mrb[0].mxu0
      %v1630 = vpop.f32.mrb[0].mxu0
      %v1631 = vadd.f32 %v1439, %v1630
      %v1632 = vpop.f32.mrb[0].mxu0
      %1633 = vmatprep.mubr.bf16.mxu0 0
      %1634 = vmatmul.mubr.bf16.gmra.mrb[0].mxu0 %v1416
      %v1635 = vpop.f32.mrb[0].mxu0
      %v1636 = vadd.f32 %v1439, %v1635
      %v1637 = vpop.f32.mrb[0].mxu0
      %v1638 = vpop.f32.mrb[0].mxu0
      %v1639 = vadd.f32 %v1439, %v1638
      %v1640 = vpop.f32.mrb[0].mxu0
      %1641 = vmatprep.mubr.bf16.mxu0 0
      %1642 = vmatmul.mubr.bf16.gmra.mrb[0].mxu0 %v1417
      %v1643 = vpop.f32.mrb[0].mxu0
      %v1644 = vadd.f32 %v1439, %v1643
      %v1645 = vpop.f32.mrb[0].mxu0
      %v1646 = vpop.f32.mrb[0].mxu0
      %v1647 = vadd.f32 %v1439, %v1646
      %v1648 = vpop.f32.mrb[0].mxu0
      %1649 = vdwg.mxu0
      %1650 = vst [vmem:[%s7] sm:$0xff] %v1524
      %1651 = vst [vmem:[%s7 + $0x8] sm:$0xff] %v1527
      %1652 = vst [vmem:[%s7 + $0x10] sm:$0xff] %v1532
      %1653 = vst [vmem:[%s7 + $0x18] sm:$0xff] %v1535
      %1654 = vst [vmem:[%s7 + $0x20] sm:$0xff] %v1540
      %1655 = vst [vmem:[%s7 + $0x28] sm:$0xff] %v1543
      %1656 = vst [vmem:[%s7 + $0x30] sm:$0xff] %v1548
      %1657 = vst [vmem:[%s7 + $0x38] sm:$0xff] %v1551
      %1658 = vst [vmem:[%s7 + $0x40] sm:$0xff] %v1556
      %1659 = vst [vmem:[%s7 + $0x48] sm:$0xff] %v1559
      %1660 = vst [vmem:[%s7 + $0x50] sm:$0xff] %v1564
      %1661 = vst [vmem:[%s7 + $0x58] sm:$0xff] %v1567
      %1662 = vst [vmem:[%s7 + $0x60] sm:$0xff] %v1572
      %1663 = vst [vmem:[%s7 + $0x68] sm:$0xff] %v1575
      %1664 = vst [vmem:[%s7 + $0x70] sm:$0xff] %v1580
      %1665 = vst [vmem:[%s7 + $0x78] sm:$0xff] %v1583
      %1666 = vst [vmem:[%s7 + $0x80] sm:$0xff] %v1588
      %1667 = vst [vmem:[%s7 + $0x88] sm:$0xff] %v1591
      %1668 = vst [vmem:[%s7 + $0x90] sm:$0xff] %v1596
      %1669 = vst [vmem:[%s7 + $0x98] sm:$0xff] %v1599
      %1670 = vst [vmem:[%s7 + $0xa0] sm:$0xff] %v1604
      %1671 = vst [vmem:[%s7 + $0xa8] sm:$0xff] %v1607
      %1672 = vst [vmem:[%s7 + $0xb0] sm:$0xff] %v1612
      %1673 = vst [vmem:[%s7 + $0xb8] sm:$0xff] %v1615
      %1674 = vst [vmem:[%s7 + $0xc0] sm:$0xff] %v1620
      %1675 = vst [vmem:[%s7 + $0xc8] sm:$0xff] %v1623
      %1676 = vst [vmem:[%s7 + $0xd0] sm:$0xff] %v1628
      %1677 = vst [vmem:[%s7 + $0xd8] sm:$0xff] %v1631
      %1678 = vst [vmem:[%s7 + $0xe0] sm:$0xff] %v1636
      %1679 = vst [vmem:[%s7 + $0xe8] sm:$0xff] %v1639
      %1680 = vst [vmem:[%s7 + $0xf0] sm:$0xff] %v1644
      %1681 = vst [vmem:[%s7 + $0xf8] sm:$0xff] %v1647
    $region119: #{gnn_sage_forward.5} parent=1 // pred_fallthru
      _
    // Predicated region
    $region120: #{gnn_sage_forward.5} parent=1 // pred_check
      _
    $region121: #{gnn_sage_forward.5} parent=1 // pred_check_branch
      %1683 = sbr.rel (0) target = $region123
    $region122: #{gnn_sage_forward.5} parent=1 // pred_region
      _
    $region123: #{gnn_sage_forward.5} parent=1 // pred_fallthru
      _
    // Predicated region
    $region124: #{gnn_sage_forward.5} parent=1 // pred_check
      _
    $region125: #{gnn_sage_forward.5} parent=1 // pred_check_branch
      %1685 = sbr.rel (0) target = $region127
    $region126: #{gnn_sage_forward.5} parent=1 // pred_region
      _
    $region127: #{gnn_sage_forward.5} parent=1 // pred_fallthru
      _

// kernel: gnn_sage_forward.4
$region0: #{gnn_sage_forward.4}
  #allocation0 [shape = 'u32[]', space=smem, size = 0x4, offset = 0x4, fixed_abs, tag = 'smem constant byte address 0x4 - core index']
  #allocation1 [shape = 'u32[144,128]{1,0:T(1,128)}', space=vmem, size = 0x12000, scoped, tag = 'internal scratch']
  #allocation2 [shape = 'f32[256,128]{1,0:T(8,128)}', space=vmem, size = 0x20000, scoped, tag = 'scratch operand']
  %s0 = inlined_call_operand.vmem [shape: bf16[256,256], index: 0, kind: input, shape index: {}]
  %s1 = inlined_call_operand.vmem [shape: bf16[256,256], index: 1, kind: input, shape index: {}, may-alias: {1,2}]
  %s2 = inlined_call_operand.vmem [shape: bf16[256,256], index: 2, kind: input, shape index: {}, may-alias: {1,2}]
  %s3 = inlined_call_operand.vmem [shape: f32[256,1], index: 3, kind: input, shape index: {}]
  %s4 = inlined_call_operand.vmem [shape: f32[1,128], index: 4, kind: input, shape index: {}]
  %s5 = inlined_call_operand.vmem [shape: bf16[128,256], index: 5, kind: input, shape index: {}]
  %s6 = inlined_call_operand.vmem [shape: f32[1,256], index: 6, kind: input, shape index: {}]
  %s7 = inlined_call_operand.vmem [shape: bf16[256,256], index: 7, kind: output, shape index: {}]
  %s8 = sld [smem:[#allocation0]]
  $region128: #{gnn_sage_forward.4} parent=0
    _
  %s10 = ssub.s32 1, %s8
  %s11 = scalar_select 0, %s10, %s8
  $region1: #{gnn_sage_forward.4} parent=0
    #allocation3 [shape = 'u8[65536]{0}', space=vmem, size = 0x10000, scoped, tag = 'input window, operand 1, single buffered']
    #allocation4 [shape = 'u8[65536]{0}', space=vmem, size = 0x10000, scoped, tag = 'input window, operand 2, single buffered']
    // Predicated region
    $region2: #{gnn_sage_forward.4} parent=1 // pred_check
      _
    $region3: #{gnn_sage_forward.4} parent=1 // pred_check_branch
      %13 = sbr.rel (0) target = $region5
    $region4: #{gnn_sage_forward.4} parent=1 // pred_region
      _
    $region5: #{gnn_sage_forward.4} parent=1 // pred_fallthru
      _
    // Predicated region
    $region6: #{gnn_sage_forward.4} parent=1 // pred_check
      _
    $region7: #{gnn_sage_forward.4} parent=1 // pred_check_branch
      %15 = sbr.rel (0) target = $region9
    $region8: #{gnn_sage_forward.4} parent=1 // pred_region
      // Predicated region
      $region10: #{gnn_sage_forward.4} parent=8 // pred_check
        _
      $region11: #{gnn_sage_forward.4} parent=8 // pred_check_branch
        %17 = sbr.rel (0) target = $region13
      $region12: #{gnn_sage_forward.4} parent=8 // pred_region
        // Predicated region
        $region14: #{gnn_sage_forward.4} parent=12 // pred_check
          _
        $region15: #{gnn_sage_forward.4} parent=12 // pred_check_branch
          %19 = sbr.rel target = $region17
        $region16: #{gnn_sage_forward.4} parent=12 // pred_region
          // Predicated region
          $region29: #{gnn_sage_forward.4} parent=16 // pred_check
            _
          $region30: #{gnn_sage_forward.4} parent=16 // pred_check_branch
            %96 = sbr.rel (0) target = $region32
          $region31: #{gnn_sage_forward.4} parent=16 // pred_region
            loop: start=0, step=1, limit=1
            $region33: #{gnn_sage_forward.4} parent=31 // loop_pre_header
              _
            $region34: #{gnn_sage_forward.4} parent=31 // loop_header
              %s98 = sphi 0, %s102
              %p99 = scmp.ge.s32.totalorder %s98, 1
              %s103 = sphi %s1, %s1
              %s104 = sphi [#allocation3], [#allocation3]
            $region35: #{gnn_sage_forward.4} parent=31 // loop_header_branch
              %101 = sbr.rel (%p99) target = $region39
            $region36: #{gnn_sage_forward.4} parent=31 // loop_body
              _
            $region37: #{gnn_sage_forward.4} parent=31 // loop_footer
              %s102 = sadd.s32 1, %s98
            $region38: #{gnn_sage_forward.4} parent=31 // loop_footer_branch
              %97 = sbr.rel target = $region34
            $region39: #{gnn_sage_forward.4} parent=31 // loop_exit
              _
            loop: start=0, step=1, limit=1
            $region40: #{gnn_sage_forward.4} parent=31 // loop_pre_header
              _
            $region41: #{gnn_sage_forward.4} parent=31 // loop_header
              %s107 = sphi 0, %s111
              %p108 = scmp.ge.s32.totalorder %s107, 1
              %s112 = sphi %s1, %s1
              %s113 = sphi [#allocation3], [#allocation3]
            $region42: #{gnn_sage_forward.4} parent=31 // loop_header_branch
              %110 = sbr.rel (%p108) target = $region46
            $region43: #{gnn_sage_forward.4} parent=31 // loop_body
              %v114 = vld [vmem:[%s112] sm:$0xf]
              %115 = vst [vmem:[%s113] sm:$0xf] %v114
              %v116 = vld [vmem:[%s112 + $0x8] sm:$0xf]
              %117 = vst [vmem:[%s113 + $0x4] sm:$0xf] %v116
              %v118 = vld [vmem:[%s112 + $0x10] sm:$0xf]
              %119 = vst [vmem:[%s113 + $0x8] sm:$0xf] %v118
              %v120 = vld [vmem:[%s112 + $0x18] sm:$0xf]
              %121 = vst [vmem:[%s113 + $0xc] sm:$0xf] %v120
              %v122 = vld [vmem:[%s112 + $0x20] sm:$0xf]
              %123 = vst [vmem:[%s113 + $0x10] sm:$0xf] %v122
              %v124 = vld [vmem:[%s112 + $0x28] sm:$0xf]
              %125 = vst [vmem:[%s113 + $0x14] sm:$0xf] %v124
              %v126 = vld [vmem:[%s112 + $0x30] sm:$0xf]
              %127 = vst [vmem:[%s113 + $0x18] sm:$0xf] %v126
              %v128 = vld [vmem:[%s112 + $0x38] sm:$0xf]
              %129 = vst [vmem:[%s113 + $0x1c] sm:$0xf] %v128
              %v130 = vld [vmem:[%s112 + $0x40] sm:$0xf]
              %131 = vst [vmem:[%s113 + $0x20] sm:$0xf] %v130
              %v132 = vld [vmem:[%s112 + $0x48] sm:$0xf]
              %133 = vst [vmem:[%s113 + $0x24] sm:$0xf] %v132
              %v134 = vld [vmem:[%s112 + $0x50] sm:$0xf]
              %135 = vst [vmem:[%s113 + $0x28] sm:$0xf] %v134
              %v136 = vld [vmem:[%s112 + $0x58] sm:$0xf]
              %137 = vst [vmem:[%s113 + $0x2c] sm:$0xf] %v136
              %v138 = vld [vmem:[%s112 + $0x60] sm:$0xf]
              %139 = vst [vmem:[%s113 + $0x30] sm:$0xf] %v138
              %v140 = vld [vmem:[%s112 + $0x68] sm:$0xf]
              %141 = vst [vmem:[%s113 + $0x34] sm:$0xf] %v140
              %v142 = vld [vmem:[%s112 + $0x70] sm:$0xf]
              %143 = vst [vmem:[%s113 + $0x38] sm:$0xf] %v142
              %v144 = vld [vmem:[%s112 + $0x78] sm:$0xf]
              %145 = vst [vmem:[%s113 + $0x3c] sm:$0xf] %v144
              %v146 = vld [vmem:[%s112 + $0x80] sm:$0xf]
              %147 = vst [vmem:[%s113 + $0x40] sm:$0xf] %v146
              %v148 = vld [vmem:[%s112 + $0x88] sm:$0xf]
              %149 = vst [vmem:[%s113 + $0x44] sm:$0xf] %v148
              %v150 = vld [vmem:[%s112 + $0x90] sm:$0xf]
              %151 = vst [vmem:[%s113 + $0x48] sm:$0xf] %v150
              %v152 = vld [vmem:[%s112 + $0x98] sm:$0xf]
              %153 = vst [vmem:[%s113 + $0x4c] sm:$0xf] %v152
              %v154 = vld [vmem:[%s112 + $0xa0] sm:$0xf]
              %155 = vst [vmem:[%s113 + $0x50] sm:$0xf] %v154
              %v156 = vld [vmem:[%s112 + $0xa8] sm:$0xf]
              %157 = vst [vmem:[%s113 + $0x54] sm:$0xf] %v156
              %v158 = vld [vmem:[%s112 + $0xb0] sm:$0xf]
              %159 = vst [vmem:[%s113 + $0x58] sm:$0xf] %v158
              %v160 = vld [vmem:[%s112 + $0xb8] sm:$0xf]
              %161 = vst [vmem:[%s113 + $0x5c] sm:$0xf] %v160
              %v162 = vld [vmem:[%s112 + $0xc0] sm:$0xf]
              %163 = vst [vmem:[%s113 + $0x60] sm:$0xf] %v162
              %v164 = vld [vmem:[%s112 + $0xc8] sm:$0xf]
              %165 = vst [vmem:[%s113 + $0x64] sm:$0xf] %v164
              %v166 = vld [vmem:[%s112 + $0xd0] sm:$0xf]
              %167 = vst [vmem:[%s113 + $0x68] sm:$0xf] %v166
              %v168 = vld [vmem:[%s112 + $0xd8] sm:$0xf]
              %169 = vst [vmem:[%s113 + $0x6c] sm:$0xf] %v168
              %v170 = vld [vmem:[%s112 + $0xe0] sm:$0xf]
              %171 = vst [vmem:[%s113 + $0x70] sm:$0xf] %v170
              %v172 = vld [vmem:[%s112 + $0xe8] sm:$0xf]
              %173 = vst [vmem:[%s113 + $0x74] sm:$0xf] %v172
              %v174 = vld [vmem:[%s112 + $0xf0] sm:$0xf]
              %175 = vst [vmem:[%s113 + $0x78] sm:$0xf] %v174
              %v176 = vld [vmem:[%s112 + $0xf8] sm:$0xf]
              %177 = vst [vmem:[%s113 + $0x7c] sm:$0xf] %v176
            $region44: #{gnn_sage_forward.4} parent=31 // loop_footer
              %s111 = sadd.s32 1, %s107
            $region45: #{gnn_sage_forward.4} parent=31 // loop_footer_branch
              %106 = sbr.rel target = $region41
            $region46: #{gnn_sage_forward.4} parent=31 // loop_exit
              _
          $region32: #{gnn_sage_forward.4} parent=16 // pred_fallthru
            _
        $region17: #{gnn_sage_forward.4} parent=12 // pred_fallthru
          _
        // Predicated region
        $region18: #{gnn_sage_forward.4} parent=12 // pred_check
          _
        $region19: #{gnn_sage_forward.4} parent=12 // pred_check_branch
          %21 = sbr.rel (0) target = $region21
        $region20: #{gnn_sage_forward.4} parent=12 // pred_region
          loop: start=0, step=1, limit=1
          $region22: #{gnn_sage_forward.4} parent=20 // loop_pre_header
            _
          $region23: #{gnn_sage_forward.4} parent=20 // loop_header
            %s24 = sphi 0, %s28
            %p25 = scmp.ge.s32.totalorder %s24, 1
            %s29 = sphi %s1, %s1
            %s30 = sphi [#allocation3], [#allocation3]
          $region24: #{gnn_sage_forward.4} parent=20 // loop_header_branch
            %27 = sbr.rel (%p25) target = $region28
          $region25: #{gnn_sage_forward.4} parent=20 // loop_body
            %v31 = vld [vmem:[%s29] sm:$0xf]
            %32 = vst [vmem:[%s30] sm:$0xf] %v31
            %v33 = vld [vmem:[%s29 + $0x8] sm:$0xf]
            %34 = vst [vmem:[%s30 + $0x4] sm:$0xf] %v33
            %v35 = vld [vmem:[%s29 + $0x10] sm:$0xf]
            %36 = vst [vmem:[%s30 + $0x8] sm:$0xf] %v35
            %v37 = vld [vmem:[%s29 + $0x18] sm:$0xf]
            %38 = vst [vmem:[%s30 + $0xc] sm:$0xf] %v37
            %v39 = vld [vmem:[%s29 + $0x20] sm:$0xf]
            %40 = vst [vmem:[%s30 + $0x10] sm:$0xf] %v39
            %v41 = vld [vmem:[%s29 + $0x28] sm:$0xf]
            %42 = vst [vmem:[%s30 + $0x14] sm:$0xf] %v41
            %v43 = vld [vmem:[%s29 + $0x30] sm:$0xf]
            %44 = vst [vmem:[%s30 + $0x18] sm:$0xf] %v43
            %v45 = vld [vmem:[%s29 + $0x38] sm:$0xf]
            %46 = vst [vmem:[%s30 + $0x1c] sm:$0xf] %v45
            %v47 = vld [vmem:[%s29 + $0x40] sm:$0xf]
            %48 = vst [vmem:[%s30 + $0x20] sm:$0xf] %v47
            %v49 = vld [vmem:[%s29 + $0x48] sm:$0xf]
            %50 = vst [vmem:[%s30 + $0x24] sm:$0xf] %v49
            %v51 = vld [vmem:[%s29 + $0x50] sm:$0xf]
            %52 = vst [vmem:[%s30 + $0x28] sm:$0xf] %v51
            %v53 = vld [vmem:[%s29 + $0x58] sm:$0xf]
            %54 = vst [vmem:[%s30 + $0x2c] sm:$0xf] %v53
            %v55 = vld [vmem:[%s29 + $0x60] sm:$0xf]
            %56 = vst [vmem:[%s30 + $0x30] sm:$0xf] %v55
            %v57 = vld [vmem:[%s29 + $0x68] sm:$0xf]
            %58 = vst [vmem:[%s30 + $0x34] sm:$0xf] %v57
            %v59 = vld [vmem:[%s29 + $0x70] sm:$0xf]
            %60 = vst [vmem:[%s30 + $0x38] sm:$0xf] %v59
            %v61 = vld [vmem:[%s29 + $0x78] sm:$0xf]
            %62 = vst [vmem:[%s30 + $0x3c] sm:$0xf] %v61
            %v63 = vld [vmem:[%s29 + $0x80] sm:$0xf]
            %64 = vst [vmem:[%s30 + $0x40] sm:$0xf] %v63
            %v65 = vld [vmem:[%s29 + $0x88] sm:$0xf]
            %66 = vst [vmem:[%s30 + $0x44] sm:$0xf] %v65
            %v67 = vld [vmem:[%s29 + $0x90] sm:$0xf]
            %68 = vst [vmem:[%s30 + $0x48] sm:$0xf] %v67
            %v69 = vld [vmem:[%s29 + $0x98] sm:$0xf]
            %70 = vst [vmem:[%s30 + $0x4c] sm:$0xf] %v69
            %v71 = vld [vmem:[%s29 + $0xa0] sm:$0xf]
            %72 = vst [vmem:[%s30 + $0x50] sm:$0xf] %v71
            %v73 = vld [vmem:[%s29 + $0xa8] sm:$0xf]
            %74 = vst [vmem:[%s30 + $0x54] sm:$0xf] %v73
            %v75 = vld [vmem:[%s29 + $0xb0] sm:$0xf]
            %76 = vst [vmem:[%s30 + $0x58] sm:$0xf] %v75
            %v77 = vld [vmem:[%s29 + $0xb8] sm:$0xf]
            %78 = vst [vmem:[%s30 + $0x5c] sm:$0xf] %v77
            %v79 = vld [vmem:[%s29 + $0xc0] sm:$0xf]
            %80 = vst [vmem:[%s30 + $0x60] sm:$0xf] %v79
            %v81 = vld [vmem:[%s29 + $0xc8] sm:$0xf]
            %82 = vst [vmem:[%s30 + $0x64] sm:$0xf] %v81
            %v83 = vld [vmem:[%s29 + $0xd0] sm:$0xf]
            %84 = vst [vmem:[%s30 + $0x68] sm:$0xf] %v83
            %v85 = vld [vmem:[%s29 + $0xd8] sm:$0xf]
            %86 = vst [vmem:[%s30 + $0x6c] sm:$0xf] %v85
            %v87 = vld [vmem:[%s29 + $0xe0] sm:$0xf]
            %88 = vst [vmem:[%s30 + $0x70] sm:$0xf] %v87
            %v89 = vld [vmem:[%s29 + $0xe8] sm:$0xf]
            %90 = vst [vmem:[%s30 + $0x74] sm:$0xf] %v89
            %v91 = vld [vmem:[%s29 + $0xf0] sm:$0xf]
            %92 = vst [vmem:[%s30 + $0x78] sm:$0xf] %v91
            %v93 = vld [vmem:[%s29 + $0xf8] sm:$0xf]
            %94 = vst [vmem:[%s30 + $0x7c] sm:$0xf] %v93
          $region26: #{gnn_sage_forward.4} parent=20 // loop_footer
            %s28 = sadd.s32 1, %s24
          $region27: #{gnn_sage_forward.4} parent=20 // loop_footer_branch
            %23 = sbr.rel target = $region23
          $region28: #{gnn_sage_forward.4} parent=20 // loop_exit
            _
        $region21: #{gnn_sage_forward.4} parent=12 // pred_fallthru
          _
      $region13: #{gnn_sage_forward.4} parent=8 // pred_fallthru
        _
      %178 = vnop
    $region9: #{gnn_sage_forward.4} parent=1 // pred_fallthru
      _
    // Predicated region
    $region47: #{gnn_sage_forward.4} parent=1 // pred_check
      _
    $region48: #{gnn_sage_forward.4} parent=1 // pred_check_branch
      %180 = sbr.rel (0) target = $region50
    $region49: #{gnn_sage_forward.4} parent=1 // pred_region
      %s181 = scalar_lea.vmem %s2, 4
      // Predicated region
      $region51: #{gnn_sage_forward.4} parent=49 // pred_check
        _
      $region52: #{gnn_sage_forward.4} parent=49 // pred_check_branch
        %183 = sbr.rel (0) target = $region54
      $region53: #{gnn_sage_forward.4} parent=49 // pred_region
        // Predicated region
        $region55: #{gnn_sage_forward.4} parent=53 // pred_check
          _
        $region56: #{gnn_sage_forward.4} parent=53 // pred_check_branch
          %185 = sbr.rel target = $region58
        $region57: #{gnn_sage_forward.4} parent=53 // pred_region
          // Predicated region
          $region70: #{gnn_sage_forward.4} parent=57 // pred_check
            _
          $region71: #{gnn_sage_forward.4} parent=57 // pred_check_branch
            %262 = sbr.rel (0) target = $region73
          $region72: #{gnn_sage_forward.4} parent=57 // pred_region
            loop: start=0, step=1, limit=1
            $region74: #{gnn_sage_forward.4} parent=72 // loop_pre_header
              _
            $region75: #{gnn_sage_forward.4} parent=72 // loop_header
              %s264 = sphi 0, %s268
              %p265 = scmp.ge.s32.totalorder %s264, 1
              %s269 = sphi %s181, %s181
              %s270 = sphi [#allocation4], [#allocation4]
            $region76: #{gnn_sage_forward.4} parent=72 // loop_header_branch
              %267 = sbr.rel (%p265) target = $region80
            $region77: #{gnn_sage_forward.4} parent=72 // loop_body
              _
            $region78: #{gnn_sage_forward.4} parent=72 // loop_footer
              %s268 = sadd.s32 1, %s264
            $region79: #{gnn_sage_forward.4} parent=72 // loop_footer_branch
              %263 = sbr.rel target = $region75
            $region80: #{gnn_sage_forward.4} parent=72 // loop_exit
              _
            loop: start=0, step=1, limit=1
            $region81: #{gnn_sage_forward.4} parent=72 // loop_pre_header
              _
            $region82: #{gnn_sage_forward.4} parent=72 // loop_header
              %s273 = sphi 0, %s277
              %p274 = scmp.ge.s32.totalorder %s273, 1
              %s278 = sphi %s181, %s181
              %s279 = sphi [#allocation4], [#allocation4]
            $region83: #{gnn_sage_forward.4} parent=72 // loop_header_branch
              %276 = sbr.rel (%p274) target = $region87
            $region84: #{gnn_sage_forward.4} parent=72 // loop_body
              %v280 = vld [vmem:[%s278] sm:$0xf]
              %281 = vst [vmem:[%s279] sm:$0xf] %v280
              %v282 = vld [vmem:[%s278 + $0x8] sm:$0xf]
              %283 = vst [vmem:[%s279 + $0x4] sm:$0xf] %v282
              %v284 = vld [vmem:[%s278 + $0x10] sm:$0xf]
              %285 = vst [vmem:[%s279 + $0x8] sm:$0xf] %v284
              %v286 = vld [vmem:[%s278 + $0x18] sm:$0xf]
              %287 = vst [vmem:[%s279 + $0xc] sm:$0xf] %v286
              %v288 = vld [vmem:[%s278 + $0x20] sm:$0xf]
              %289 = vst [vmem:[%s279 + $0x10] sm:$0xf] %v288
              %v290 = vld [vmem:[%s278 + $0x28] sm:$0xf]
              %291 = vst [vmem:[%s279 + $0x14] sm:$0xf] %v290
              %v292 = vld [vmem:[%s278 + $0x30] sm:$0xf]
              %293 = vst [vmem:[%s279 + $0x18] sm:$0xf] %v292
              %v294 = vld [vmem:[%s278 + $0x38] sm:$0xf]
              %295 = vst [vmem:[%s279 + $0x1c] sm:$0xf] %v294
              %v296 = vld [vmem:[%s278 + $0x40] sm:$0xf]
              %297 = vst [vmem:[%s279 + $0x20] sm:$0xf] %v296
              %v298 = vld [vmem:[%s278 + $0x48] sm:$0xf]
              %299 = vst [vmem:[%s279 + $0x24] sm:$0xf] %v298
              %v300 = vld [vmem:[%s278 + $0x50] sm:$0xf]
              %301 = vst [vmem:[%s279 + $0x28] sm:$0xf] %v300
              %v302 = vld [vmem:[%s278 + $0x58] sm:$0xf]
              %303 = vst [vmem:[%s279 + $0x2c] sm:$0xf] %v302
              %v304 = vld [vmem:[%s278 + $0x60] sm:$0xf]
              %305 = vst [vmem:[%s279 + $0x30] sm:$0xf] %v304
              %v306 = vld [vmem:[%s278 + $0x68] sm:$0xf]
              %307 = vst [vmem:[%s279 + $0x34] sm:$0xf] %v306
              %v308 = vld [vmem:[%s278 + $0x70] sm:$0xf]
              %309 = vst [vmem:[%s279 + $0x38] sm:$0xf] %v308
              %v310 = vld [vmem:[%s278 + $0x78] sm:$0xf]
              %311 = vst [vmem:[%s279 + $0x3c] sm:$0xf] %v310
              %v312 = vld [vmem:[%s278 + $0x80] sm:$0xf]
              %313 = vst [vmem:[%s279 + $0x40] sm:$0xf] %v312
              %v314 = vld [vmem:[%s278 + $0x88] sm:$0xf]
              %315 = vst [vmem:[%s279 + $0x44] sm:$0xf] %v314
              %v316 = vld [vmem:[%s278 + $0x90] sm:$0xf]
              %317 = vst [vmem:[%s279 + $0x48] sm:$0xf] %v316
              %v318 = vld [vmem:[%s278 + $0x98] sm:$0xf]
              %319 = vst [vmem:[%s279 + $0x4c] sm:$0xf] %v318
              %v320 = vld [vmem:[%s278 + $0xa0] sm:$0xf]
              %321 = vst [vmem:[%s279 + $0x50] sm:$0xf] %v320
              %v322 = vld [vmem:[%s278 + $0xa8] sm:$0xf]
              %323 = vst [vmem:[%s279 + $0x54] sm:$0xf] %v322
              %v324 = vld [vmem:[%s278 + $0xb0] sm:$0xf]
              %325 = vst [vmem:[%s279 + $0x58] sm:$0xf] %v324
              %v326 = vld [vmem:[%s278 + $0xb8] sm:$0xf]
              %327 = vst [vmem:[%s279 + $0x5c] sm:$0xf] %v326
              %v328 = vld [vmem:[%s278 + $0xc0] sm:$0xf]
              %329 = vst [vmem:[%s279 + $0x60] sm:$0xf] %v328
              %v330 = vld [vmem:[%s278 + $0xc8] sm:$0xf]
              %331 = vst [vmem:[%s279 + $0x64] sm:$0xf] %v330
              %v332 = vld [vmem:[%s278 + $0xd0] sm:$0xf]
              %333 = vst [vmem:[%s279 + $0x68] sm:$0xf] %v332
              %v334 = vld [vmem:[%s278 + $0xd8] sm:$0xf]
              %335 = vst [vmem:[%s279 + $0x6c] sm:$0xf] %v334
              %v336 = vld [vmem:[%s278 + $0xe0] sm:$0xf]
              %337 = vst [vmem:[%s279 + $0x70] sm:$0xf] %v336
              %v338 = vld [vmem:[%s278 + $0xe8] sm:$0xf]
              %339 = vst [vmem:[%s279 + $0x74] sm:$0xf] %v338
              %v340 = vld [vmem:[%s278 + $0xf0] sm:$0xf]
              %341 = vst [vmem:[%s279 + $0x78] sm:$0xf] %v340
              %v342 = vld [vmem:[%s278 + $0xf8] sm:$0xf]
              %343 = vst [vmem:[%s279 + $0x7c] sm:$0xf] %v342
            $region85: #{gnn_sage_forward.4} parent=72 // loop_footer
              %s277 = sadd.s32 1, %s273
            $region86: #{gnn_sage_forward.4} parent=72 // loop_footer_branch
              %272 = sbr.rel target = $region82
            $region87: #{gnn_sage_forward.4} parent=72 // loop_exit
              _
          $region73: #{gnn_sage_forward.4} parent=57 // pred_fallthru
            _
        $region58: #{gnn_sage_forward.4} parent=53 // pred_fallthru
          _
        // Predicated region
        $region59: #{gnn_sage_forward.4} parent=53 // pred_check
          _
        $region60: #{gnn_sage_forward.4} parent=53 // pred_check_branch
          %187 = sbr.rel (0) target = $region62
        $region61: #{gnn_sage_forward.4} parent=53 // pred_region
          loop: start=0, step=1, limit=1
          $region63: #{gnn_sage_forward.4} parent=61 // loop_pre_header
            _
          $region64: #{gnn_sage_forward.4} parent=61 // loop_header
            %s190 = sphi 0, %s194
            %p191 = scmp.ge.s32.totalorder %s190, 1
            %s195 = sphi %s181, %s181
            %s196 = sphi [#allocation4], [#allocation4]
          $region65: #{gnn_sage_forward.4} parent=61 // loop_header_branch
            %193 = sbr.rel (%p191) target = $region69
          $region66: #{gnn_sage_forward.4} parent=61 // loop_body
            %v197 = vld [vmem:[%s195] sm:$0xf]
            %198 = vst [vmem:[%s196] sm:$0xf] %v197
            %v199 = vld [vmem:[%s195 + $0x8] sm:$0xf]
            %200 = vst [vmem:[%s196 + $0x4] sm:$0xf] %v199
            %v201 = vld [vmem:[%s195 + $0x10] sm:$0xf]
            %202 = vst [vmem:[%s196 + $0x8] sm:$0xf] %v201
            %v203 = vld [vmem:[%s195 + $0x18] sm:$0xf]
            %204 = vst [vmem:[%s196 + $0xc] sm:$0xf] %v203
            %v205 = vld [vmem:[%s195 + $0x20] sm:$0xf]
            %206 = vst [vmem:[%s196 + $0x10] sm:$0xf] %v205
            %v207 = vld [vmem:[%s195 + $0x28] sm:$0xf]
            %208 = vst [vmem:[%s196 + $0x14] sm:$0xf] %v207
            %v209 = vld [vmem:[%s195 + $0x30] sm:$0xf]
            %210 = vst [vmem:[%s196 + $0x18] sm:$0xf] %v209
            %v211 = vld [vmem:[%s195 + $0x38] sm:$0xf]
            %212 = vst [vmem:[%s196 + $0x1c] sm:$0xf] %v211
            %v213 = vld [vmem:[%s195 + $0x40] sm:$0xf]
            %214 = vst [vmem:[%s196 + $0x20] sm:$0xf] %v213
            %v215 = vld [vmem:[%s195 + $0x48] sm:$0xf]
            %216 = vst [vmem:[%s196 + $0x24] sm:$0xf] %v215
            %v217 = vld [vmem:[%s195 + $0x50] sm:$0xf]
            %218 = vst [vmem:[%s196 + $0x28] sm:$0xf] %v217
            %v219 = vld [vmem:[%s195 + $0x58] sm:$0xf]
            %220 = vst [vmem:[%s196 + $0x2c] sm:$0xf] %v219
            %v221 = vld [vmem:[%s195 + $0x60] sm:$0xf]
            %222 = vst [vmem:[%s196 + $0x30] sm:$0xf] %v221
            %v223 = vld [vmem:[%s195 + $0x68] sm:$0xf]
            %224 = vst [vmem:[%s196 + $0x34] sm:$0xf] %v223
            %v225 = vld [vmem:[%s195 + $0x70] sm:$0xf]
            %226 = vst [vmem:[%s196 + $0x38] sm:$0xf] %v225
            %v227 = vld [vmem:[%s195 + $0x78] sm:$0xf]
            %228 = vst [vmem:[%s196 + $0x3c] sm:$0xf] %v227
            %v229 = vld [vmem:[%s195 + $0x80] sm:$0xf]
            %230 = vst [vmem:[%s196 + $0x40] sm:$0xf] %v229
            %v231 = vld [vmem:[%s195 + $0x88] sm:$0xf]
            %232 = vst [vmem:[%s196 + $0x44] sm:$0xf] %v231
            %v233 = vld [vmem:[%s195 + $0x90] sm:$0xf]
            %234 = vst [vmem:[%s196 + $0x48] sm:$0xf] %v233
            %v235 = vld [vmem:[%s195 + $0x98] sm:$0xf]
            %236 = vst [vmem:[%s196 + $0x4c] sm:$0xf] %v235
            %v237 = vld [vmem:[%s195 + $0xa0] sm:$0xf]
            %238 = vst [vmem:[%s196 + $0x50] sm:$0xf] %v237
            %v239 = vld [vmem:[%s195 + $0xa8] sm:$0xf]
            %240 = vst [vmem:[%s196 + $0x54] sm:$0xf] %v239
            %v241 = vld [vmem:[%s195 + $0xb0] sm:$0xf]
            %242 = vst [vmem:[%s196 + $0x58] sm:$0xf] %v241
            %v243 = vld [vmem:[%s195 + $0xb8] sm:$0xf]
            %244 = vst [vmem:[%s196 + $0x5c] sm:$0xf] %v243
            %v245 = vld [vmem:[%s195 + $0xc0] sm:$0xf]
            %246 = vst [vmem:[%s196 + $0x60] sm:$0xf] %v245
            %v247 = vld [vmem:[%s195 + $0xc8] sm:$0xf]
            %248 = vst [vmem:[%s196 + $0x64] sm:$0xf] %v247
            %v249 = vld [vmem:[%s195 + $0xd0] sm:$0xf]
            %250 = vst [vmem:[%s196 + $0x68] sm:$0xf] %v249
            %v251 = vld [vmem:[%s195 + $0xd8] sm:$0xf]
            %252 = vst [vmem:[%s196 + $0x6c] sm:$0xf] %v251
            %v253 = vld [vmem:[%s195 + $0xe0] sm:$0xf]
            %254 = vst [vmem:[%s196 + $0x70] sm:$0xf] %v253
            %v255 = vld [vmem:[%s195 + $0xe8] sm:$0xf]
            %256 = vst [vmem:[%s196 + $0x74] sm:$0xf] %v255
            %v257 = vld [vmem:[%s195 + $0xf0] sm:$0xf]
            %258 = vst [vmem:[%s196 + $0x78] sm:$0xf] %v257
            %v259 = vld [vmem:[%s195 + $0xf8] sm:$0xf]
            %260 = vst [vmem:[%s196 + $0x7c] sm:$0xf] %v259
          $region67: #{gnn_sage_forward.4} parent=61 // loop_footer
            %s194 = sadd.s32 1, %s190
          $region68: #{gnn_sage_forward.4} parent=61 // loop_footer_branch
            %189 = sbr.rel target = $region64
          $region69: #{gnn_sage_forward.4} parent=61 // loop_exit
            _
        $region62: #{gnn_sage_forward.4} parent=53 // pred_fallthru
          _
      $region54: #{gnn_sage_forward.4} parent=49 // pred_fallthru
        _
      %344 = vnop
    $region50: #{gnn_sage_forward.4} parent=1 // pred_fallthru
      _
    // Predicated region
    $region88: #{gnn_sage_forward.4} parent=1 // pred_check
      _
    $region89: #{gnn_sage_forward.4} parent=1 // pred_check_branch
      %346 = sbr.rel (0) target = $region91
    $region90: #{gnn_sage_forward.4} parent=1 // pred_region
      _
    $region91: #{gnn_sage_forward.4} parent=1 // pred_fallthru
      _
    // Predicated region
    $region92: #{gnn_sage_forward.4} parent=1 // pred_check
      _
    $region93: #{gnn_sage_forward.4} parent=1 // pred_check_branch
      %348 = sbr.rel (0) target = $region95
    $region94: #{gnn_sage_forward.4} parent=1 // pred_region
      _
    $region95: #{gnn_sage_forward.4} parent=1 // pred_fallthru
      _
    // Predicated region
    $region96: #{gnn_sage_forward.4} parent=1 // pred_check
      _
    $region97: #{gnn_sage_forward.4} parent=1 // pred_check_branch
      %350 = sbr.rel (0) target = $region99
    $region98: #{gnn_sage_forward.4} parent=1 // pred_region
      _
    $region99: #{gnn_sage_forward.4} parent=1 // pred_fallthru
      _
    // Predicated region
    $region100: #{gnn_sage_forward.4} parent=1 // pred_check
      _
    $region101: #{gnn_sage_forward.4} parent=1 // pred_check_branch
      %352 = sbr.rel (0) target = $region103
    $region102: #{gnn_sage_forward.4} parent=1 // pred_region
      _
    $region103: #{gnn_sage_forward.4} parent=1 // pred_fallthru
      _
    // Predicated region
    $region104: #{gnn_sage_forward.4} parent=1 // pred_check
      _
    $region105: #{gnn_sage_forward.4} parent=1 // pred_check_branch
      %354 = sbr.rel (0) target = $region107
    $region106: #{gnn_sage_forward.4} parent=1 // pred_region
      _
    $region107: #{gnn_sage_forward.4} parent=1 // pred_fallthru
      _
    // Predicated region
    $region108: #{gnn_sage_forward.4} parent=1 // pred_check
      _
    $region109: #{gnn_sage_forward.4} parent=1 // pred_check_branch
      %356 = sbr.rel (0) target = $region111
    $region110: #{gnn_sage_forward.4} parent=1 // pred_region
      _
    $region111: #{gnn_sage_forward.4} parent=1 // pred_fallthru
      _
    %p358 = scmp.eq.s32.totalorder 0, 0
    // Predicated region
    $region112: #{gnn_sage_forward.4} parent=1 // pred_check
      %p359 = pneg %p358
    $region113: #{gnn_sage_forward.4} parent=1 // pred_check_branch
      %361 = sbr.rel (%p359) target = $region115
    $region114: #{gnn_sage_forward.4} parent=1 // pred_region
      %362 = vst [vmem:[#allocation2] sm:$0xff] 0.0
      %363 = vst [vmem:[#allocation2 + $0x8] sm:$0xff] 0.0
      %364 = vst [vmem:[#allocation2 + $0x10] sm:$0xff] 0.0
      %365 = vst [vmem:[#allocation2 + $0x18] sm:$0xff] 0.0
      %366 = vst [vmem:[#allocation2 + $0x20] sm:$0xff] 0.0
      %367 = vst [vmem:[#allocation2 + $0x28] sm:$0xff] 0.0
      %368 = vst [vmem:[#allocation2 + $0x30] sm:$0xff] 0.0
      %369 = vst [vmem:[#allocation2 + $0x38] sm:$0xff] 0.0
      %370 = vst [vmem:[#allocation2 + $0x40] sm:$0xff] 0.0
      %371 = vst [vmem:[#allocation2 + $0x48] sm:$0xff] 0.0
      %372 = vst [vmem:[#allocation2 + $0x50] sm:$0xff] 0.0
      %373 = vst [vmem:[#allocation2 + $0x58] sm:$0xff] 0.0
      %374 = vst [vmem:[#allocation2 + $0x60] sm:$0xff] 0.0
      %375 = vst [vmem:[#allocation2 + $0x68] sm:$0xff] 0.0
      %376 = vst [vmem:[#allocation2 + $0x70] sm:$0xff] 0.0
      %377 = vst [vmem:[#allocation2 + $0x78] sm:$0xff] 0.0
      %378 = vst [vmem:[#allocation2 + $0x80] sm:$0xff] 0.0
      %379 = vst [vmem:[#allocation2 + $0x88] sm:$0xff] 0.0
      %380 = vst [vmem:[#allocation2 + $0x90] sm:$0xff] 0.0
      %381 = vst [vmem:[#allocation2 + $0x98] sm:$0xff] 0.0
      %382 = vst [vmem:[#allocation2 + $0xa0] sm:$0xff] 0.0
      %383 = vst [vmem:[#allocation2 + $0xa8] sm:$0xff] 0.0
      %384 = vst [vmem:[#allocation2 + $0xb0] sm:$0xff] 0.0
      %385 = vst [vmem:[#allocation2 + $0xb8] sm:$0xff] 0.0
      %386 = vst [vmem:[#allocation2 + $0xc0] sm:$0xff] 0.0
      %387 = vst [vmem:[#allocation2 + $0xc8] sm:$0xff] 0.0
      %388 = vst [vmem:[#allocation2 + $0xd0] sm:$0xff] 0.0
      %389 = vst [vmem:[#allocation2 + $0xd8] sm:$0xff] 0.0
      %390 = vst [vmem:[#allocation2 + $0xe0] sm:$0xff] 0.0
      %391 = vst [vmem:[#allocation2 + $0xe8] sm:$0xff] 0.0
      %392 = vst [vmem:[#allocation2 + $0xf0] sm:$0xff] 0.0
      %393 = vst [vmem:[#allocation2 + $0xf8] sm:$0xff] 0.0
    $region115: #{gnn_sage_forward.4} parent=1 // pred_fallthru
      _
    %s394 = smul.u32 0, 256
    %s395 = sshra.s32 %s394, 3
    %s396 = sand.u32 %s394, 7
    %s397 = smul.addr %s395, 4
    %s398 = scalar_lea.vmem [#allocation3], %s397
    %v399 = vld [vmem:[%s398] sm:$0xf]
    %v400 = vld [vmem:[%s398 + $0x4] sm:$0xf]
    %v401 = vld [vmem:[%s398 + $0x8] sm:$0xf]
    %v402 = vld [vmem:[%s398 + $0xc] sm:$0xf]
    %v403 = vld [vmem:[%s398 + $0x10] sm:$0xf]
    %v404 = vld [vmem:[%s398 + $0x14] sm:$0xf]
    %v405 = vld [vmem:[%s398 + $0x18] sm:$0xf]
    %v406 = vld [vmem:[%s398 + $0x1c] sm:$0xf]
    %v407 = vld [vmem:[%s398 + $0x20] sm:$0xf]
    %v408 = vld [vmem:[%s398 + $0x24] sm:$0xf]
    %v409 = vld [vmem:[%s398 + $0x28] sm:$0xf]
    %v410 = vld [vmem:[%s398 + $0x2c] sm:$0xf]
    %v411 = vld [vmem:[%s398 + $0x30] sm:$0xf]
    %v412 = vld [vmem:[%s398 + $0x34] sm:$0xf]
    %v413 = vld [vmem:[%s398 + $0x38] sm:$0xf]
    %v414 = vld [vmem:[%s398 + $0x3c] sm:$0xf]
    %v415 = vld [vmem:[%s398 + $0x40] sm:$0xf]
    %v416 = vld [vmem:[%s398 + $0x44] sm:$0xf]
    %v417 = vld [vmem:[%s398 + $0x48] sm:$0xf]
    %v418 = vld [vmem:[%s398 + $0x4c] sm:$0xf]
    %v419 = vld [vmem:[%s398 + $0x50] sm:$0xf]
    %v420 = vld [vmem:[%s398 + $0x54] sm:$0xf]
    %v421 = vld [vmem:[%s398 + $0x58] sm:$0xf]
    %v422 = vld [vmem:[%s398 + $0x5c] sm:$0xf]
    %v423 = vld [vmem:[%s398 + $0x60] sm:$0xf]
    %v424 = vld [vmem:[%s398 + $0x64] sm:$0xf]
    %v425 = vld [vmem:[%s398 + $0x68] sm:$0xf]
    %v426 = vld [vmem:[%s398 + $0x6c] sm:$0xf]
    %v427 = vld [vmem:[%s398 + $0x70] sm:$0xf]
    %v428 = vld [vmem:[%s398 + $0x74] sm:$0xf]
    %v429 = vld [vmem:[%s398 + $0x78] sm:$0xf]
    %v430 = vld [vmem:[%s398 + $0x7c] sm:$0xf]
    %v431 = vld [vmem:[#allocation2] sm:$0xff]
    %v432 = vld [vmem:[#allocation2 + $0x8] sm:$0xff]
    %v433 = vld [vmem:[#allocation2 + $0x10] sm:$0xff]
    %v434 = vld [vmem:[#allocation2 + $0x18] sm:$0xff]
    %v435 = vld [vmem:[#allocation2 + $0x20] sm:$0xff]
    %v436 = vld [vmem:[#allocation2 + $0x28] sm:$0xff]
    %v437 = vld [vmem:[#allocation2 + $0x30] sm:$0xff]
    %v438 = vld [vmem:[#allocation2 + $0x38] sm:$0xff]
    %v439 = vld [vmem:[#allocation2 + $0x40] sm:$0xff]
    %v440 = vld [vmem:[#allocation2 + $0x48] sm:$0xff]
    %v441 = vld [vmem:[#allocation2 + $0x50] sm:$0xff]
    %v442 = vld [vmem:[#allocation2 + $0x58] sm:$0xff]
    %v443 = vld [vmem:[#allocation2 + $0x60] sm:$0xff]
    %v444 = vld [vmem:[#allocation2 + $0x68] sm:$0xff]
    %v445 = vld [vmem:[#allocation2 + $0x70] sm:$0xff]
    %v446 = vld [vmem:[#allocation2 + $0x78] sm:$0xff]
    %v447 = vld [vmem:[#allocation2 + $0x80] sm:$0xff]
    %v448 = vld [vmem:[#allocation2 + $0x88] sm:$0xff]
    %v449 = vld [vmem:[#allocation2 + $0x90] sm:$0xff]
    %v450 = vld [vmem:[#allocation2 + $0x98] sm:$0xff]
    %v451 = vld [vmem:[#allocation2 + $0xa0] sm:$0xff]
    %v452 = vld [vmem:[#allocation2 + $0xa8] sm:$0xff]
    %v453 = vld [vmem:[#allocation2 + $0xb0] sm:$0xff]
    %v454 = vld [vmem:[#allocation2 + $0xb8] sm:$0xff]
    %v455 = vld [vmem:[#allocation2 + $0xc0] sm:$0xff]
    %v456 = vld [vmem:[#allocation2 + $0xc8] sm:$0xff]
    %v457 = vld [vmem:[#allocation2 + $0xd0] sm:$0xff]
    %v458 = vld [vmem:[#allocation2 + $0xd8] sm:$0xff]
    %v459 = vld [vmem:[#allocation2 + $0xe0] sm:$0xff]
    %v460 = vld [vmem:[#allocation2 + $0xe8] sm:$0xff]
    %v461 = vld [vmem:[#allocation2 + $0xf0] sm:$0xff]
    %v462 = vld [vmem:[#allocation2 + $0xf8] sm:$0xff]
    %v463 = vld [vmem:[%s0] sm:$0xff]
    %v464 = vld [vmem:[%s0 + $0x8] sm:$0xff]
    %v465 = vld [vmem:[%s0 + $0x10] sm:$0xff]
    %v466 = vld [vmem:[%s0 + $0x18] sm:$0xff]
    %v467 = vld [vmem:[%s0 + $0x20] sm:$0xff]
    %v468 = vld [vmem:[%s0 + $0x28] sm:$0xff]
    %v469 = vld [vmem:[%s0 + $0x30] sm:$0xff]
    %v470 = vld [vmem:[%s0 + $0x38] sm:$0xff]
    %v471 = vld [vmem:[%s0 + $0x40] sm:$0xff]
    %v472 = vld [vmem:[%s0 + $0x48] sm:$0xff]
    %v473 = vld [vmem:[%s0 + $0x50] sm:$0xff]
    %v474 = vld [vmem:[%s0 + $0x58] sm:$0xff]
    %v475 = vld [vmem:[%s0 + $0x60] sm:$0xff]
    %v476 = vld [vmem:[%s0 + $0x68] sm:$0xff]
    %v477 = vld [vmem:[%s0 + $0x70] sm:$0xff]
    %v478 = vld [vmem:[%s0 + $0x78] sm:$0xff]
    %v479 = vld [vmem:[%s0 + $0x80] sm:$0xff]
    %v480 = vld [vmem:[%s0 + $0x88] sm:$0xff]
    %v481 = vld [vmem:[%s0 + $0x90] sm:$0xff]
    %v482 = vld [vmem:[%s0 + $0x98] sm:$0xff]
    %v483 = vld [vmem:[%s0 + $0xa0] sm:$0xff]
    %v484 = vld [vmem:[%s0 + $0xa8] sm:$0xff]
    %v485 = vld [vmem:[%s0 + $0xb0] sm:$0xff]
    %v486 = vld [vmem:[%s0 + $0xb8] sm:$0xff]
    %v487 = vld [vmem:[%s0 + $0xc0] sm:$0xff]
    %v488 = vld [vmem:[%s0 + $0xc8] sm:$0xff]
    %v489 = vld [vmem:[%s0 + $0xd0] sm:$0xff]
    %v490 = vld [vmem:[%s0 + $0xd8] sm:$0xff]
    %v491 = vld [vmem:[%s0 + $0xe0] sm:$0xff]
    %v492 = vld [vmem:[%s0 + $0xe8] sm:$0xff]
    %v493 = vld [vmem:[%s0 + $0xf0] sm:$0xff]
    %v494 = vld [vmem:[%s0 + $0xf8] sm:$0xff]
    %v527 = vunpack.c.l.b16 %v463
    %v528 = vunpack.c.h.b16 %v463
    %v529 = vunpack.c.l.b16 %v464
    %v530 = vunpack.c.h.b16 %v464
    %v531 = vunpack.c.l.b16 %v465
    %v532 = vunpack.c.h.b16 %v465
    %v533 = vunpack.c.l.b16 %v466
    %v534 = vunpack.c.h.b16 %v466
    %v535 = vunpack.c.l.b16 %v467
    %v536 = vunpack.c.h.b16 %v467
    %v537 = vunpack.c.l.b16 %v468
    %v538 = vunpack.c.h.b16 %v468
    %v539 = vunpack.c.l.b16 %v469
    %v540 = vunpack.c.h.b16 %v469
    %v541 = vunpack.c.l.b16 %v470
    %v542 = vunpack.c.h.b16 %v470
    %v543 = vunpack.c.l.b16 %v471
    %v544 = vunpack.c.h.b16 %v471
    %v545 = vunpack.c.l.b16 %v472
    %v546 = vunpack.c.h.b16 %v472
    %v547 = vunpack.c.l.b16 %v473
    %v548 = vunpack.c.h.b16 %v473
    %v549 = vunpack.c.l.b16 %v474
    %v550 = vunpack.c.h.b16 %v474
    %v551 = vunpack.c.l.b16 %v475
    %v552 = vunpack.c.h.b16 %v475
    %v553 = vunpack.c.l.b16 %v476
    %v554 = vunpack.c.h.b16 %v476
    %v555 = vunpack.c.l.b16 %v477
    %v556 = vunpack.c.h.b16 %v477
    %v557 = vunpack.c.l.b16 %v478
    %v558 = vunpack.c.h.b16 %v478
    %v559 = vunpack.c.l.b16 %v479
    %v560 = vunpack.c.h.b16 %v479
    %v561 = vunpack.c.l.b16 %v480
    %v562 = vunpack.c.h.b16 %v480
    %v563 = vunpack.c.l.b16 %v481
    %v564 = vunpack.c.h.b16 %v481
    %v565 = vunpack.c.l.b16 %v482
    %v566 = vunpack.c.h.b16 %v482
    %v567 = vunpack.c.l.b16 %v483
    %v568 = vunpack.c.h.b16 %v483
    %v569 = vunpack.c.l.b16 %v484
    %v570 = vunpack.c.h.b16 %v484
    %v571 = vunpack.c.l.b16 %v485
    %v572 = vunpack.c.h.b16 %v485
    %v573 = vunpack.c.l.b16 %v486
    %v574 = vunpack.c.h.b16 %v486
    %v575 = vunpack.c.l.b16 %v487
    %v576 = vunpack.c.h.b16 %v487
    %v577 = vunpack.c.l.b16 %v488
    %v578 = vunpack.c.h.b16 %v488
    %v579 = vunpack.c.l.b16 %v489
    %v580 = vunpack.c.h.b16 %v489
    %v581 = vunpack.c.l.b16 %v490
    %v582 = vunpack.c.h.b16 %v490
    %v583 = vunpack.c.l.b16 %v491
    %v584 = vunpack.c.h.b16 %v491
    %v585 = vunpack.c.l.b16 %v492
    %v586 = vunpack.c.h.b16 %v492
    %v587 = vunpack.c.l.b16 %v493
    %v588 = vunpack.c.h.b16 %v493
    %v589 = vunpack.c.l.b16 %v494
    %v590 = vunpack.c.h.b16 %v494
    %v591 = vpack.c.b16 %v529, %v527
    %v592 = vpack.c.b16 %v530, %v528
    %v593 = vpack.c.b16 %v533, %v531
    %v594 = vpack.c.b16 %v534, %v532
    %v595 = vpack.c.b16 %v537, %v535
    %v596 = vpack.c.b16 %v538, %v536
    %v597 = vpack.c.b16 %v541, %v539
    %v598 = vpack.c.b16 %v542, %v540
    %v599 = vpack.c.b16 %v545, %v543
    %v600 = vpack.c.b16 %v546, %v544
    %v601 = vpack.c.b16 %v549, %v547
    %v602 = vpack.c.b16 %v550, %v548
    %v603 = vpack.c.b16 %v553, %v551
    %v604 = vpack.c.b16 %v554, %v552
    %v605 = vpack.c.b16 %v557, %v555
    %v606 = vpack.c.b16 %v558, %v556
    %v607 = vpack.c.b16 %v561, %v559
    %v608 = vpack.c.b16 %v562, %v560
    %v609 = vpack.c.b16 %v565, %v563
    %v610 = vpack.c.b16 %v566, %v564
    %v611 = vpack.c.b16 %v569, %v567
    %v612 = vpack.c.b16 %v570, %v568
    %v613 = vpack.c.b16 %v573, %v571
    %v614 = vpack.c.b16 %v574, %v572
    %v615 = vpack.c.b16 %v577, %v575
    %v616 = vpack.c.b16 %v578, %v576
    %v617 = vpack.c.b16 %v581, %v579
    %v618 = vpack.c.b16 %v582, %v580
    %v619 = vpack.c.b16 %v585, %v583
    %v620 = vpack.c.b16 %v586, %v584
    %v621 = vpack.c.b16 %v589, %v587
    %v622 = vpack.c.b16 %v590, %v588
    %v687 = vunpack.c.l.b16 %v399
    %v688 = vunpack.c.l.b16 %v400
    %v689 = vunpack.c.l.b16 %v401
    %v690 = vunpack.c.l.b16 %v402
    %v691 = vunpack.c.l.b16 %v403
    %v692 = vunpack.c.l.b16 %v404
    %v693 = vunpack.c.l.b16 %v405
    %v694 = vunpack.c.l.b16 %v406
    %v695 = vunpack.c.l.b16 %v407
    %v696 = vunpack.c.l.b16 %v408
    %v697 = vunpack.c.l.b16 %v409
    %v698 = vunpack.c.l.b16 %v410
    %v699 = vunpack.c.l.b16 %v411
    %v700 = vunpack.c.l.b16 %v412
    %v701 = vunpack.c.l.b16 %v413
    %v702 = vunpack.c.l.b16 %v414
    %v703 = vunpack.c.l.b16 %v415
    %v704 = vunpack.c.l.b16 %v416
    %v705 = vunpack.c.l.b16 %v417
    %v706 = vunpack.c.l.b16 %v418
    %v707 = vunpack.c.l.b16 %v419
    %v708 = vunpack.c.l.b16 %v420
    %v709 = vunpack.c.l.b16 %v421
    %v710 = vunpack.c.l.b16 %v422
    %v711 = vunpack.c.l.b16 %v423
    %v712 = vunpack.c.l.b16 %v424
    %v713 = vunpack.c.l.b16 %v425
    %v714 = vunpack.c.l.b16 %v426
    %v715 = vunpack.c.l.b16 %v427
    %v716 = vunpack.c.l.b16 %v428
    %v717 = vunpack.c.l.b16 %v429
    %v718 = vunpack.c.l.b16 %v430
    %v719 = vpack.c.b16 %v688, %v687
    %v720 = vpack.c.b16 %v690, %v689
    %v721 = vpack.c.b16 %v692, %v691
    %v722 = vpack.c.b16 %v694, %v693
    %v723 = vpack.c.b16 %v696, %v695
    %v724 = vpack.c.b16 %v698, %v697
    %v725 = vpack.c.b16 %v700, %v699
    %v726 = vpack.c.b16 %v702, %v701
    %v727 = vpack.c.b16 %v704, %v703
    %v728 = vpack.c.b16 %v706, %v705
    %v729 = vpack.c.b16 %v708, %v707
    %v730 = vpack.c.b16 %v710, %v709
    %v731 = vpack.c.b16 %v712, %v711
    %v732 = vpack.c.b16 %v714, %v713
    %v733 = vpack.c.b16 %v716, %v715
    %v734 = vpack.c.b16 %v718, %v717
    %751 = vmatprep.subr.bf16.mxu0 0
    %752 = vmatpush1.bf16.msra.mxu0 %v719
    %753 = vmatprep.subr.bf16.mxu0 0
    %754 = vmatpush1.bf16.msra.mxu0 %v720
    %755 = vmatprep.subr.bf16.mxu0 0
    %756 = vmatpush1.bf16.msra.mxu0 %v721
    %757 = vmatprep.subr.bf16.mxu0 0
    %758 = vmatpush1.bf16.msra.mxu0 %v722
    %759 = vmatprep.subr.bf16.mxu0 0
    %760 = vmatpush1.bf16.msra.mxu0 %v723
    %761 = vmatprep.subr.bf16.mxu0 0
    %762 = vmatpush1.bf16.msra.mxu0 %v724
    %763 = vmatprep.subr.bf16.mxu0 0
    %764 = vmatpush1.bf16.msra.mxu0 %v725
    %765 = vmatprep.subr.bf16.mxu0 0
    %766 = vmatpush1.bf16.msra.mxu0 %v726
    %767 = vmatprep.subr.bf16.mxu0 0
    %768 = vmatpush1.bf16.msra.mxu0 %v727
    %769 = vmatprep.subr.bf16.mxu0 0
    %770 = vmatpush1.bf16.msra.mxu0 %v728
    %771 = vmatprep.subr.bf16.mxu0 0
    %772 = vmatpush1.bf16.msra.mxu0 %v729
    %773 = vmatprep.subr.bf16.mxu0 0
    %774 = vmatpush1.bf16.msra.mxu0 %v730
    %775 = vmatprep.subr.bf16.mxu0 0
    %776 = vmatpush1.bf16.msra.mxu0 %v731
    %777 = vmatprep.subr.bf16.mxu0 0
    %778 = vmatpush1.bf16.msra.mxu0 %v732
    %779 = vmatprep.subr.bf16.mxu0 0
    %780 = vmatpush1.bf16.msra.mxu0 %v733
    %781 = vmatprep.subr.bf16.mxu0 0
    %782 = vmatpush1.bf16.msra.mxu0 %v734
    %783 = vmatprep.mubr.bf16.mxu0 %v592
    %784 = vmatmul.mubr.bf16.gmra.mrb[0].mxu0 %v591
    %v785 = vpop.f32.mrb[0].mxu0
    %v786 = vadd.f32 0.0, %v785
    %v787 = vpop.f32.mrb[0].mxu0
    %v788 = vpop.f32.mrb[0].mxu0
    %v789 = vadd.f32 0.0, %v788
    %v790 = vpop.f32.mrb[0].mxu0
    %791 = vmatprep.mubr.bf16.mxu0 %v594
    %792 = vmatmul.mubr.bf16.gmra.mrb[0].mxu0 %v593
    %v793 = vpop.f32.mrb[0].mxu0
    %v794 = vadd.f32 0.0, %v793
    %v795 = vpop.f32.mrb[0].mxu0
    %v796 = vpop.f32.mrb[0].mxu0
    %v797 = vadd.f32 0.0, %v796
    %v798 = vpop.f32.mrb[0].mxu0
    %799 = vmatprep.mubr.bf16.mxu0 %v596
    %800 = vmatmul.mubr.bf16.gmra.mrb[0].mxu0 %v595
    %v801 = vpop.f32.mrb[0].mxu0
    %v802 = vadd.f32 0.0, %v801
    %v803 = vpop.f32.mrb[0].mxu0
    %v804 = vpop.f32.mrb[0].mxu0
    %v805 = vadd.f32 0.0, %v804
    %v806 = vpop.f32.mrb[0].mxu0
    %807 = vmatprep.mubr.bf16.mxu0 %v598
    %808 = vmatmul.mubr.bf16.gmra.mrb[0].mxu0 %v597
    %v809 = vpop.f32.mrb[0].mxu0
    %v810 = vadd.f32 0.0, %v809
    %v811 = vpop.f32.mrb[0].mxu0
    %v812 = vpop.f32.mrb[0].mxu0
    %v813 = vadd.f32 0.0, %v812
    %v814 = vpop.f32.mrb[0].mxu0
    %815 = vmatprep.mubr.bf16.mxu0 %v600
    %816 = vmatmul.mubr.bf16.gmra.mrb[0].mxu0 %v599
    %v817 = vpop.f32.mrb[0].mxu0
    %v818 = vadd.f32 0.0, %v817
    %v819 = vpop.f32.mrb[0].mxu0
    %v820 = vpop.f32.mrb[0].mxu0
    %v821 = vadd.f32 0.0, %v820
    %v822 = vpop.f32.mrb[0].mxu0
    %823 = vmatprep.mubr.bf16.mxu0 %v602
    %824 = vmatmul.mubr.bf16.gmra.mrb[0].mxu0 %v601
    %v825 = vpop.f32.mrb[0].mxu0
    %v826 = vadd.f32 0.0, %v825
    %v827 = vpop.f32.mrb[0].mxu0
    %v828 = vpop.f32.mrb[0].mxu0
    %v829 = vadd.f32 0.0, %v828
    %v830 = vpop.f32.mrb[0].mxu0
    %831 = vmatprep.mubr.bf16.mxu0 %v604
    %832 = vmatmul.mubr.bf16.gmra.mrb[0].mxu0 %v603
    %v833 = vpop.f32.mrb[0].mxu0
    %v834 = vadd.f32 0.0, %v833
    %v835 = vpop.f32.mrb[0].mxu0
    %v836 = vpop.f32.mrb[0].mxu0
    %v837 = vadd.f32 0.0, %v836
    %v838 = vpop.f32.mrb[0].mxu0
    %839 = vmatprep.mubr.bf16.mxu0 %v606
    %840 = vmatmul.mubr.bf16.gmra.mrb[0].mxu0 %v605
    %v841 = vpop.f32.mrb[0].mxu0
    %v842 = vadd.f32 0.0, %v841
    %v843 = vpop.f32.mrb[0].mxu0
    %v844 = vpop.f32.mrb[0].mxu0
    %v845 = vadd.f32 0.0, %v844
    %v846 = vpop.f32.mrb[0].mxu0
    %847 = vmatprep.mubr.bf16.mxu0 %v608
    %848 = vmatmul.mubr.bf16.gmra.mrb[0].mxu0 %v607
    %v849 = vpop.f32.mrb[0].mxu0
    %v850 = vadd.f32 0.0, %v849
    %v851 = vpop.f32.mrb[0].mxu0
    %v852 = vpop.f32.mrb[0].mxu0
    %v853 = vadd.f32 0.0, %v852
    %v854 = vpop.f32.mrb[0].mxu0
    %855 = vmatprep.mubr.bf16.mxu0 %v610
    %856 = vmatmul.mubr.bf16.gmra.mrb[0].mxu0 %v609
    %v857 = vpop.f32.mrb[0].mxu0
    %v858 = vadd.f32 0.0, %v857
    %v859 = vpop.f32.mrb[0].mxu0
    %v860 = vpop.f32.mrb[0].mxu0
    %v861 = vadd.f32 0.0, %v860
    %v862 = vpop.f32.mrb[0].mxu0
    %863 = vmatprep.mubr.bf16.mxu0 %v612
    %864 = vmatmul.mubr.bf16.gmra.mrb[0].mxu0 %v611
    %v865 = vpop.f32.mrb[0].mxu0
    %v866 = vadd.f32 0.0, %v865
    %v867 = vpop.f32.mrb[0].mxu0
    %v868 = vpop.f32.mrb[0].mxu0
    %v869 = vadd.f32 0.0, %v868
    %v870 = vpop.f32.mrb[0].mxu0
    %871 = vmatprep.mubr.bf16.mxu0 %v614
    %872 = vmatmul.mubr.bf16.gmra.mrb[0].mxu0 %v613
    %v873 = vpop.f32.mrb[0].mxu0
    %v874 = vadd.f32 0.0, %v873
    %v875 = vpop.f32.mrb[0].mxu0
    %v876 = vpop.f32.mrb[0].mxu0
    %v877 = vadd.f32 0.0, %v876
    %v878 = vpop.f32.mrb[0].mxu0
    %879 = vmatprep.mubr.bf16.mxu0 %v616
    %880 = vmatmul.mubr.bf16.gmra.mrb[0].mxu0 %v615
    %v881 = vpop.f32.mrb[0].mxu0
    %v882 = vadd.f32 0.0, %v881
    %v883 = vpop.f32.mrb[0].mxu0
    %v884 = vpop.f32.mrb[0].mxu0
    %v885 = vadd.f32 0.0, %v884
    %v886 = vpop.f32.mrb[0].mxu0
    %887 = vmatprep.mubr.bf16.mxu0 %v618
    %888 = vmatmul.mubr.bf16.gmra.mrb[0].mxu0 %v617
    %v889 = vpop.f32.mrb[0].mxu0
    %v890 = vadd.f32 0.0, %v889
    %v891 = vpop.f32.mrb[0].mxu0
    %v892 = vpop.f32.mrb[0].mxu0
    %v893 = vadd.f32 0.0, %v892
    %v894 = vpop.f32.mrb[0].mxu0
    %895 = vmatprep.mubr.bf16.mxu0 %v620
    %896 = vmatmul.mubr.bf16.gmra.mrb[0].mxu0 %v619
    %v897 = vpop.f32.mrb[0].mxu0
    %v898 = vadd.f32 0.0, %v897
    %v899 = vpop.f32.mrb[0].mxu0
    %v900 = vpop.f32.mrb[0].mxu0
    %v901 = vadd.f32 0.0, %v900
    %v902 = vpop.f32.mrb[0].mxu0
    %903 = vmatprep.mubr.bf16.mxu0 %v622
    %904 = vmatmul.mubr.bf16.gmra.mrb[0].mxu0 %v621
    %v905 = vpop.f32.mrb[0].mxu0
    %v906 = vadd.f32 0.0, %v905
    %v907 = vpop.f32.mrb[0].mxu0
    %v908 = vpop.f32.mrb[0].mxu0
    %v909 = vadd.f32 0.0, %v908
    %v910 = vpop.f32.mrb[0].mxu0
    %911 = vdwg.mxu0
    %v912 = vadd.f32 %v431, %v786
    %v913 = vadd.f32 %v432, %v789
    %v914 = vadd.f32 %v433, %v794
    %v915 = vadd.f32 %v434, %v797
    %v916 = vadd.f32 %v435, %v802
    %v917 = vadd.f32 %v436, %v805
    %v918 = vadd.f32 %v437, %v810
    %v919 = vadd.f32 %v438, %v813
    %v920 = vadd.f32 %v439, %v818
    %v921 = vadd.f32 %v440, %v821
    %v922 = vadd.f32 %v441, %v826
    %v923 = vadd.f32 %v442, %v829
    %v924 = vadd.f32 %v443, %v834
    %v925 = vadd.f32 %v444, %v837
    %v926 = vadd.f32 %v445, %v842
    %v927 = vadd.f32 %v446, %v845
    %v928 = vadd.f32 %v447, %v850
    %v929 = vadd.f32 %v448, %v853
    %v930 = vadd.f32 %v449, %v858
    %v931 = vadd.f32 %v450, %v861
    %v932 = vadd.f32 %v451, %v866
    %v933 = vadd.f32 %v452, %v869
    %v934 = vadd.f32 %v453, %v874
    %v935 = vadd.f32 %v454, %v877
    %v936 = vadd.f32 %v455, %v882
    %v937 = vadd.f32 %v456, %v885
    %v938 = vadd.f32 %v457, %v890
    %v939 = vadd.f32 %v458, %v893
    %v940 = vadd.f32 %v459, %v898
    %v941 = vadd.f32 %v460, %v901
    %v942 = vadd.f32 %v461, %v906
    %v943 = vadd.f32 %v462, %v909
    %944 = vst [vmem:[#allocation2] sm:$0xff] %v912
    %945 = vst [vmem:[#allocation2 + $0x8] sm:$0xff] %v913
    %946 = vst [vmem:[#allocation2 + $0x10] sm:$0xff] %v914
    %947 = vst [vmem:[#allocation2 + $0x18] sm:$0xff] %v915
    %948 = vst [vmem:[#allocation2 + $0x20] sm:$0xff] %v916
    %949 = vst [vmem:[#allocation2 + $0x28] sm:$0xff] %v917
    %950 = vst [vmem:[#allocation2 + $0x30] sm:$0xff] %v918
    %951 = vst [vmem:[#allocation2 + $0x38] sm:$0xff] %v919
    %952 = vst [vmem:[#allocation2 + $0x40] sm:$0xff] %v920
    %953 = vst [vmem:[#allocation2 + $0x48] sm:$0xff] %v921
    %954 = vst [vmem:[#allocation2 + $0x50] sm:$0xff] %v922
    %955 = vst [vmem:[#allocation2 + $0x58] sm:$0xff] %v923
    %956 = vst [vmem:[#allocation2 + $0x60] sm:$0xff] %v924
    %957 = vst [vmem:[#allocation2 + $0x68] sm:$0xff] %v925
    %958 = vst [vmem:[#allocation2 + $0x70] sm:$0xff] %v926
    %959 = vst [vmem:[#allocation2 + $0x78] sm:$0xff] %v927
    %960 = vst [vmem:[#allocation2 + $0x80] sm:$0xff] %v928
    %961 = vst [vmem:[#allocation2 + $0x88] sm:$0xff] %v929
    %962 = vst [vmem:[#allocation2 + $0x90] sm:$0xff] %v930
    %963 = vst [vmem:[#allocation2 + $0x98] sm:$0xff] %v931
    %964 = vst [vmem:[#allocation2 + $0xa0] sm:$0xff] %v932
    %965 = vst [vmem:[#allocation2 + $0xa8] sm:$0xff] %v933
    %966 = vst [vmem:[#allocation2 + $0xb0] sm:$0xff] %v934
    %967 = vst [vmem:[#allocation2 + $0xb8] sm:$0xff] %v935
    %968 = vst [vmem:[#allocation2 + $0xc0] sm:$0xff] %v936
    %969 = vst [vmem:[#allocation2 + $0xc8] sm:$0xff] %v937
    %970 = vst [vmem:[#allocation2 + $0xd0] sm:$0xff] %v938
    %971 = vst [vmem:[#allocation2 + $0xd8] sm:$0xff] %v939
    %972 = vst [vmem:[#allocation2 + $0xe0] sm:$0xff] %v940
    %973 = vst [vmem:[#allocation2 + $0xe8] sm:$0xff] %v941
    %974 = vst [vmem:[#allocation2 + $0xf0] sm:$0xff] %v942
    %975 = vst [vmem:[#allocation2 + $0xf8] sm:$0xff] %v943
    // Predicated region
    $region116: #{gnn_sage_forward.4} parent=1 // pred_check
      %p976 = pneg %p358
    $region117: #{gnn_sage_forward.4} parent=1 // pred_check_branch
      %978 = sbr.rel (%p976) target = $region119
    $region118: #{gnn_sage_forward.4} parent=1 // pred_region
      %v979 = vld [vmem:[#allocation2] sm:$0xff]
      %v980 = vld [vmem:[#allocation2 + $0x8] sm:$0xff]
      %v981 = vld [vmem:[#allocation2 + $0x10] sm:$0xff]
      %v982 = vld [vmem:[#allocation2 + $0x18] sm:$0xff]
      %v983 = vld [vmem:[#allocation2 + $0x20] sm:$0xff]
      %v984 = vld [vmem:[#allocation2 + $0x28] sm:$0xff]
      %v985 = vld [vmem:[#allocation2 + $0x30] sm:$0xff]
      %v986 = vld [vmem:[#allocation2 + $0x38] sm:$0xff]
      %v987 = vld [vmem:[#allocation2 + $0x40] sm:$0xff]
      %v988 = vld [vmem:[#allocation2 + $0x48] sm:$0xff]
      %v989 = vld [vmem:[#allocation2 + $0x50] sm:$0xff]
      %v990 = vld [vmem:[#allocation2 + $0x58] sm:$0xff]
      %v991 = vld [vmem:[#allocation2 + $0x60] sm:$0xff]
      %v992 = vld [vmem:[#allocation2 + $0x68] sm:$0xff]
      %v993 = vld [vmem:[#allocation2 + $0x70] sm:$0xff]
      %v994 = vld [vmem:[#allocation2 + $0x78] sm:$0xff]
      %v995 = vld [vmem:[#allocation2 + $0x80] sm:$0xff]
      %v996 = vld [vmem:[#allocation2 + $0x88] sm:$0xff]
      %v997 = vld [vmem:[#allocation2 + $0x90] sm:$0xff]
      %v998 = vld [vmem:[#allocation2 + $0x98] sm:$0xff]
      %v999 = vld [vmem:[#allocation2 + $0xa0] sm:$0xff]
      %v1000 = vld [vmem:[#allocation2 + $0xa8] sm:$0xff]
      %v1001 = vld [vmem:[#allocation2 + $0xb0] sm:$0xff]
      %v1002 = vld [vmem:[#allocation2 + $0xb8] sm:$0xff]
      %v1003 = vld [vmem:[#allocation2 + $0xc0] sm:$0xff]
      %v1004 = vld [vmem:[#allocation2 + $0xc8] sm:$0xff]
      %v1005 = vld [vmem:[#allocation2 + $0xd0] sm:$0xff]
      %v1006 = vld [vmem:[#allocation2 + $0xd8] sm:$0xff]
      %v1007 = vld [vmem:[#allocation2 + $0xe0] sm:$0xff]
      %v1008 = vld [vmem:[#allocation2 + $0xe8] sm:$0xff]
      %v1009 = vld [vmem:[#allocation2 + $0xf0] sm:$0xff]
      %v1010 = vld [vmem:[#allocation2 + $0xf8] sm:$0xff]
      %v1011 = vld [vmem:[%s3] sm:$0xff]
      %v1012 = vld [vmem:[%s3 + $0x8] sm:$0xff]
      %v1013 = vld [vmem:[%s3 + $0x10] sm:$0xff]
      %v1014 = vld [vmem:[%s3 + $0x18] sm:$0xff]
      %v1015 = vld [vmem:[%s3 + $0x20] sm:$0xff]
      %v1016 = vld [vmem:[%s3 + $0x28] sm:$0xff]
      %v1017 = vld [vmem:[%s3 + $0x30] sm:$0xff]
      %v1018 = vld [vmem:[%s3 + $0x38] sm:$0xff]
      %v1019 = vld [vmem:[%s3 + $0x40] sm:$0xff]
      %v1020 = vld [vmem:[%s3 + $0x48] sm:$0xff]
      %v1021 = vld [vmem:[%s3 + $0x50] sm:$0xff]
      %v1022 = vld [vmem:[%s3 + $0x58] sm:$0xff]
      %v1023 = vld [vmem:[%s3 + $0x60] sm:$0xff]
      %v1024 = vld [vmem:[%s3 + $0x68] sm:$0xff]
      %v1025 = vld [vmem:[%s3 + $0x70] sm:$0xff]
      %v1026 = vld [vmem:[%s3 + $0x78] sm:$0xff]
      %v1027 = vld [vmem:[%s3 + $0x80] sm:$0xff]
      %v1028 = vld [vmem:[%s3 + $0x88] sm:$0xff]
      %v1029 = vld [vmem:[%s3 + $0x90] sm:$0xff]
      %v1030 = vld [vmem:[%s3 + $0x98] sm:$0xff]
      %v1031 = vld [vmem:[%s3 + $0xa0] sm:$0xff]
      %v1032 = vld [vmem:[%s3 + $0xa8] sm:$0xff]
      %v1033 = vld [vmem:[%s3 + $0xb0] sm:$0xff]
      %v1034 = vld [vmem:[%s3 + $0xb8] sm:$0xff]
      %v1035 = vld [vmem:[%s3 + $0xc0] sm:$0xff]
      %v1036 = vld [vmem:[%s3 + $0xc8] sm:$0xff]
      %v1037 = vld [vmem:[%s3 + $0xd0] sm:$0xff]
      %v1038 = vld [vmem:[%s3 + $0xd8] sm:$0xff]
      %v1039 = vld [vmem:[%s3 + $0xe0] sm:$0xff]
      %v1040 = vld [vmem:[%s3 + $0xe8] sm:$0xff]
      %v1041 = vld [vmem:[%s3 + $0xf0] sm:$0xff]
      %v1042 = vld [vmem:[%s3 + $0xf8] sm:$0xff]
      %1044 = vset.pattern.permute.xlu0 0
      %1045 = vperm.xlu0 %1044, %v1011
      %v1046 = vpop.permute.xlu0 %1045
      %1049 = vset.pattern.permute.xlu0 0
      %1050 = vperm.xlu0 %1049, %v1012
      %v1051 = vpop.permute.xlu0 %1050
      %1054 = vset.pattern.permute.xlu0 0
      %1055 = vperm.xlu0 %1054, %v1013
      %v1056 = vpop.permute.xlu0 %1055
      %1059 = vset.pattern.permute.xlu0 0
      %1060 = vperm.xlu0 %1059, %v1014
      %v1061 = vpop.permute.xlu0 %1060
      %1064 = vset.pattern.permute.xlu0 0
      %1065 = vperm.xlu0 %1064, %v1015
      %v1066 = vpop.permute.xlu0 %1065
      %1069 = vset.pattern.permute.xlu0 0
      %1070 = vperm.xlu0 %1069, %v1016
      %v1071 = vpop.permute.xlu0 %1070
      %1074 = vset.pattern.permute.xlu0 0
      %1075 = vperm.xlu0 %1074, %v1017
      %v1076 = vpop.permute.xlu0 %1075
      %1079 = vset.pattern.permute.xlu0 0
      %1080 = vperm.xlu0 %1079, %v1018
      %v1081 = vpop.permute.xlu0 %1080
      %1084 = vset.pattern.permute.xlu0 0
      %1085 = vperm.xlu0 %1084, %v1019
      %v1086 = vpop.permute.xlu0 %1085
      %1089 = vset.pattern.permute.xlu0 0
      %1090 = vperm.xlu0 %1089, %v1020
      %v1091 = vpop.permute.xlu0 %1090
      %1094 = vset.pattern.permute.xlu0 0
      %1095 = vperm.xlu0 %1094, %v1021
      %v1096 = vpop.permute.xlu0 %1095
      %1099 = vset.pattern.permute.xlu0 0
      %1100 = vperm.xlu0 %1099, %v1022
      %v1101 = vpop.permute.xlu0 %1100
      %1104 = vset.pattern.permute.xlu0 0
      %1105 = vperm.xlu0 %1104, %v1023
      %v1106 = vpop.permute.xlu0 %1105
      %1109 = vset.pattern.permute.xlu0 0
      %1110 = vperm.xlu0 %1109, %v1024
      %v1111 = vpop.permute.xlu0 %1110
      %1114 = vset.pattern.permute.xlu0 0
      %1115 = vperm.xlu0 %1114, %v1025
      %v1116 = vpop.permute.xlu0 %1115
      %1119 = vset.pattern.permute.xlu0 0
      %1120 = vperm.xlu0 %1119, %v1026
      %v1121 = vpop.permute.xlu0 %1120
      %1124 = vset.pattern.permute.xlu0 0
      %1125 = vperm.xlu0 %1124, %v1027
      %v1126 = vpop.permute.xlu0 %1125
      %1129 = vset.pattern.permute.xlu0 0
      %1130 = vperm.xlu0 %1129, %v1028
      %v1131 = vpop.permute.xlu0 %1130
      %1134 = vset.pattern.permute.xlu0 0
      %1135 = vperm.xlu0 %1134, %v1029
      %v1136 = vpop.permute.xlu0 %1135
      %1139 = vset.pattern.permute.xlu0 0
      %1140 = vperm.xlu0 %1139, %v1030
      %v1141 = vpop.permute.xlu0 %1140
      %1144 = vset.pattern.permute.xlu0 0
      %1145 = vperm.xlu0 %1144, %v1031
      %v1146 = vpop.permute.xlu0 %1145
      %1149 = vset.pattern.permute.xlu0 0
      %1150 = vperm.xlu0 %1149, %v1032
      %v1151 = vpop.permute.xlu0 %1150
      %1154 = vset.pattern.permute.xlu0 0
      %1155 = vperm.xlu0 %1154, %v1033
      %v1156 = vpop.permute.xlu0 %1155
      %1159 = vset.pattern.permute.xlu0 0
      %1160 = vperm.xlu0 %1159, %v1034
      %v1161 = vpop.permute.xlu0 %1160
      %1164 = vset.pattern.permute.xlu0 0
      %1165 = vperm.xlu0 %1164, %v1035
      %v1166 = vpop.permute.xlu0 %1165
      %1169 = vset.pattern.permute.xlu0 0
      %1170 = vperm.xlu0 %1169, %v1036
      %v1171 = vpop.permute.xlu0 %1170
      %1174 = vset.pattern.permute.xlu0 0
      %1175 = vperm.xlu0 %1174, %v1037
      %v1176 = vpop.permute.xlu0 %1175
      %1179 = vset.pattern.permute.xlu0 0
      %1180 = vperm.xlu0 %1179, %v1038
      %v1181 = vpop.permute.xlu0 %1180
      %1184 = vset.pattern.permute.xlu0 0
      %1185 = vperm.xlu0 %1184, %v1039
      %v1186 = vpop.permute.xlu0 %1185
      %1189 = vset.pattern.permute.xlu0 0
      %1190 = vperm.xlu0 %1189, %v1040
      %v1191 = vpop.permute.xlu0 %1190
      %1194 = vset.pattern.permute.xlu0 0
      %1195 = vperm.xlu0 %1194, %v1041
      %v1196 = vpop.permute.xlu0 %1195
      %1199 = vset.pattern.permute.xlu0 0
      %1200 = vperm.xlu0 %1199, %v1042
      %v1201 = vpop.permute.xlu0 %1200
      %v1203 = vmul.f32 %v979, %v1046
      %v1204 = vmul.f32 %v980, %v1051
      %v1205 = vmul.f32 %v981, %v1056
      %v1206 = vmul.f32 %v982, %v1061
      %v1207 = vmul.f32 %v983, %v1066
      %v1208 = vmul.f32 %v984, %v1071
      %v1209 = vmul.f32 %v985, %v1076
      %v1210 = vmul.f32 %v986, %v1081
      %v1211 = vmul.f32 %v987, %v1086
      %v1212 = vmul.f32 %v988, %v1091
      %v1213 = vmul.f32 %v989, %v1096
      %v1214 = vmul.f32 %v990, %v1101
      %v1215 = vmul.f32 %v991, %v1106
      %v1216 = vmul.f32 %v992, %v1111
      %v1217 = vmul.f32 %v993, %v1116
      %v1218 = vmul.f32 %v994, %v1121
      %v1219 = vmul.f32 %v995, %v1126
      %v1220 = vmul.f32 %v996, %v1131
      %v1221 = vmul.f32 %v997, %v1136
      %v1222 = vmul.f32 %v998, %v1141
      %v1223 = vmul.f32 %v999, %v1146
      %v1224 = vmul.f32 %v1000, %v1151
      %v1225 = vmul.f32 %v1001, %v1156
      %v1226 = vmul.f32 %v1002, %v1161
      %v1227 = vmul.f32 %v1003, %v1166
      %v1228 = vmul.f32 %v1004, %v1171
      %v1229 = vmul.f32 %v1005, %v1176
      %v1230 = vmul.f32 %v1006, %v1181
      %v1231 = vmul.f32 %v1007, %v1186
      %v1232 = vmul.f32 %v1008, %v1191
      %v1233 = vmul.f32 %v1009, %v1196
      %v1234 = vmul.f32 %v1010, %v1201
      %v1235 = vld [vmem:[#allocation4] sm:$0xf]
      %v1236 = vld [vmem:[#allocation4 + $0x4] sm:$0xf]
      %v1237 = vld [vmem:[#allocation4 + $0x8] sm:$0xf]
      %v1238 = vld [vmem:[#allocation4 + $0xc] sm:$0xf]
      %v1239 = vld [vmem:[#allocation4 + $0x10] sm:$0xf]
      %v1240 = vld [vmem:[#allocation4 + $0x14] sm:$0xf]
      %v1241 = vld [vmem:[#allocation4 + $0x18] sm:$0xf]
      %v1242 = vld [vmem:[#allocation4 + $0x1c] sm:$0xf]
      %v1243 = vld [vmem:[#allocation4 + $0x20] sm:$0xf]
      %v1244 = vld [vmem:[#allocation4 + $0x24] sm:$0xf]
      %v1245 = vld [vmem:[#allocation4 + $0x28] sm:$0xf]
      %v1246 = vld [vmem:[#allocation4 + $0x2c] sm:$0xf]
      %v1247 = vld [vmem:[#allocation4 + $0x30] sm:$0xf]
      %v1248 = vld [vmem:[#allocation4 + $0x34] sm:$0xf]
      %v1249 = vld [vmem:[#allocation4 + $0x38] sm:$0xf]
      %v1250 = vld [vmem:[#allocation4 + $0x3c] sm:$0xf]
      %v1251 = vld [vmem:[#allocation4 + $0x40] sm:$0xf]
      %v1252 = vld [vmem:[#allocation4 + $0x44] sm:$0xf]
      %v1253 = vld [vmem:[#allocation4 + $0x48] sm:$0xf]
      %v1254 = vld [vmem:[#allocation4 + $0x4c] sm:$0xf]
      %v1255 = vld [vmem:[#allocation4 + $0x50] sm:$0xf]
      %v1256 = vld [vmem:[#allocation4 + $0x54] sm:$0xf]
      %v1257 = vld [vmem:[#allocation4 + $0x58] sm:$0xf]
      %v1258 = vld [vmem:[#allocation4 + $0x5c] sm:$0xf]
      %v1259 = vld [vmem:[#allocation4 + $0x60] sm:$0xf]
      %v1260 = vld [vmem:[#allocation4 + $0x64] sm:$0xf]
      %v1261 = vld [vmem:[#allocation4 + $0x68] sm:$0xf]
      %v1262 = vld [vmem:[#allocation4 + $0x6c] sm:$0xf]
      %v1263 = vld [vmem:[#allocation4 + $0x70] sm:$0xf]
      %v1264 = vld [vmem:[#allocation4 + $0x74] sm:$0xf]
      %v1265 = vld [vmem:[#allocation4 + $0x78] sm:$0xf]
      %v1266 = vld [vmem:[#allocation4 + $0x7c] sm:$0xf]
      %v1267 = vunpack.c.l.bf16 %v1235
      %v1268 = vunpack.c.l.bf16 %v1236
      %v1269 = vunpack.c.l.bf16 %v1237
      %v1270 = vunpack.c.l.bf16 %v1238
      %v1271 = vunpack.c.l.bf16 %v1239
      %v1272 = vunpack.c.l.bf16 %v1240
      %v1273 = vunpack.c.l.bf16 %v1241
      %v1274 = vunpack.c.l.bf16 %v1242
      %v1275 = vunpack.c.l.bf16 %v1243
      %v1276 = vunpack.c.l.bf16 %v1244
      %v1277 = vunpack.c.l.bf16 %v1245
      %v1278 = vunpack.c.l.bf16 %v1246
      %v1279 = vunpack.c.l.bf16 %v1247
      %v1280 = vunpack.c.l.bf16 %v1248
      %v1281 = vunpack.c.l.bf16 %v1249
      %v1282 = vunpack.c.l.bf16 %v1250
      %v1283 = vunpack.c.l.bf16 %v1251
      %v1284 = vunpack.c.l.bf16 %v1252
      %v1285 = vunpack.c.l.bf16 %v1253
      %v1286 = vunpack.c.l.bf16 %v1254
      %v1287 = vunpack.c.l.bf16 %v1255
      %v1288 = vunpack.c.l.bf16 %v1256
      %v1289 = vunpack.c.l.bf16 %v1257
      %v1290 = vunpack.c.l.bf16 %v1258
      %v1291 = vunpack.c.l.bf16 %v1259
      %v1292 = vunpack.c.l.bf16 %v1260
      %v1293 = vunpack.c.l.bf16 %v1261
      %v1294 = vunpack.c.l.bf16 %v1262
      %v1295 = vunpack.c.l.bf16 %v1263
      %v1296 = vunpack.c.l.bf16 %v1264
      %v1297 = vunpack.c.l.bf16 %v1265
      %v1298 = vunpack.c.l.bf16 %v1266
      %v1299 = vadd.f32 %v1203, %v1267
      %v1300 = vadd.f32 %v1204, %v1268
      %v1301 = vadd.f32 %v1205, %v1269
      %v1302 = vadd.f32 %v1206, %v1270
      %v1303 = vadd.f32 %v1207, %v1271
      %v1304 = vadd.f32 %v1208, %v1272
      %v1305 = vadd.f32 %v1209, %v1273
      %v1306 = vadd.f32 %v1210, %v1274
      %v1307 = vadd.f32 %v1211, %v1275
      %v1308 = vadd.f32 %v1212, %v1276
      %v1309 = vadd.f32 %v1213, %v1277
      %v1310 = vadd.f32 %v1214, %v1278
      %v1311 = vadd.f32 %v1215, %v1279
      %v1312 = vadd.f32 %v1216, %v1280
      %v1313 = vadd.f32 %v1217, %v1281
      %v1314 = vadd.f32 %v1218, %v1282
      %v1315 = vadd.f32 %v1219, %v1283
      %v1316 = vadd.f32 %v1220, %v1284
      %v1317 = vadd.f32 %v1221, %v1285
      %v1318 = vadd.f32 %v1222, %v1286
      %v1319 = vadd.f32 %v1223, %v1287
      %v1320 = vadd.f32 %v1224, %v1288
      %v1321 = vadd.f32 %v1225, %v1289
      %v1322 = vadd.f32 %v1226, %v1290
      %v1323 = vadd.f32 %v1227, %v1291
      %v1324 = vadd.f32 %v1228, %v1292
      %v1325 = vadd.f32 %v1229, %v1293
      %v1326 = vadd.f32 %v1230, %v1294
      %v1327 = vadd.f32 %v1231, %v1295
      %v1328 = vadd.f32 %v1232, %v1296
      %v1329 = vadd.f32 %v1233, %v1297
      %v1330 = vadd.f32 %v1234, %v1298
      %v1331 = vld [vmem:[%s4] sm:$0x1]
      %v1333 = vlaneseq
      %v1334 = vshrl.u32 %v1333, 7
      %v1335 = vsub.s32 0, %v1334
      %v1336 = vrot.slane %v1331, %v1335
      %v1338 = vadd.f32 %v1299, %v1336
      %v1339 = vadd.f32 %v1300, %v1336
      %v1340 = vadd.f32 %v1301, %v1336
      %v1341 = vadd.f32 %v1302, %v1336
      %v1342 = vadd.f32 %v1303, %v1336
      %v1343 = vadd.f32 %v1304, %v1336
      %v1344 = vadd.f32 %v1305, %v1336
      %v1345 = vadd.f32 %v1306, %v1336
      %v1346 = vadd.f32 %v1307, %v1336
      %v1347 = vadd.f32 %v1308, %v1336
      %v1348 = vadd.f32 %v1309, %v1336
      %v1349 = vadd.f32 %v1310, %v1336
      %v1350 = vadd.f32 %v1311, %v1336
      %v1351 = vadd.f32 %v1312, %v1336
      %v1352 = vadd.f32 %v1313, %v1336
      %v1353 = vadd.f32 %v1314, %v1336
      %v1354 = vadd.f32 %v1315, %v1336
      %v1355 = vadd.f32 %v1316, %v1336
      %v1356 = vadd.f32 %v1317, %v1336
      %v1357 = vadd.f32 %v1318, %v1336
      %v1358 = vadd.f32 %v1319, %v1336
      %v1359 = vadd.f32 %v1320, %v1336
      %v1360 = vadd.f32 %v1321, %v1336
      %v1361 = vadd.f32 %v1322, %v1336
      %v1362 = vadd.f32 %v1323, %v1336
      %v1363 = vadd.f32 %v1324, %v1336
      %v1364 = vadd.f32 %v1325, %v1336
      %v1365 = vadd.f32 %v1326, %v1336
      %v1366 = vadd.f32 %v1327, %v1336
      %v1367 = vadd.f32 %v1328, %v1336
      %v1368 = vadd.f32 %v1329, %v1336
      %v1369 = vadd.f32 %v1330, %v1336
      %v1370 = vmax.f32 %v1338, 0.0
      %v1371 = vmax.f32 %v1339, 0.0
      %v1372 = vmax.f32 %v1340, 0.0
      %v1373 = vmax.f32 %v1341, 0.0
      %v1374 = vmax.f32 %v1342, 0.0
      %v1375 = vmax.f32 %v1343, 0.0
      %v1376 = vmax.f32 %v1344, 0.0
      %v1377 = vmax.f32 %v1345, 0.0
      %v1378 = vmax.f32 %v1346, 0.0
      %v1379 = vmax.f32 %v1347, 0.0
      %v1380 = vmax.f32 %v1348, 0.0
      %v1381 = vmax.f32 %v1349, 0.0
      %v1382 = vmax.f32 %v1350, 0.0
      %v1383 = vmax.f32 %v1351, 0.0
      %v1384 = vmax.f32 %v1352, 0.0
      %v1385 = vmax.f32 %v1353, 0.0
      %v1386 = vmax.f32 %v1354, 0.0
      %v1387 = vmax.f32 %v1355, 0.0
      %v1388 = vmax.f32 %v1356, 0.0
      %v1389 = vmax.f32 %v1357, 0.0
      %v1390 = vmax.f32 %v1358, 0.0
      %v1391 = vmax.f32 %v1359, 0.0
      %v1392 = vmax.f32 %v1360, 0.0
      %v1393 = vmax.f32 %v1361, 0.0
      %v1394 = vmax.f32 %v1362, 0.0
      %v1395 = vmax.f32 %v1363, 0.0
      %v1396 = vmax.f32 %v1364, 0.0
      %v1397 = vmax.f32 %v1365, 0.0
      %v1398 = vmax.f32 %v1366, 0.0
      %v1399 = vmax.f32 %v1367, 0.0
      %v1400 = vmax.f32 %v1368, 0.0
      %v1401 = vmax.f32 %v1369, 0.0
      %v1402 = vpack.c.bf16 %v1371, %v1370
      %v1403 = vpack.c.bf16 %v1373, %v1372
      %v1404 = vpack.c.bf16 %v1375, %v1374
      %v1405 = vpack.c.bf16 %v1377, %v1376
      %v1406 = vpack.c.bf16 %v1379, %v1378
      %v1407 = vpack.c.bf16 %v1381, %v1380
      %v1408 = vpack.c.bf16 %v1383, %v1382
      %v1409 = vpack.c.bf16 %v1385, %v1384
      %v1410 = vpack.c.bf16 %v1387, %v1386
      %v1411 = vpack.c.bf16 %v1389, %v1388
      %v1412 = vpack.c.bf16 %v1391, %v1390
      %v1413 = vpack.c.bf16 %v1393, %v1392
      %v1414 = vpack.c.bf16 %v1395, %v1394
      %v1415 = vpack.c.bf16 %v1397, %v1396
      %v1416 = vpack.c.bf16 %v1399, %v1398
      %v1417 = vpack.c.bf16 %v1401, %v1400
      %v1418 = vld [vmem:[%s5] sm:$0xff]
      %v1419 = vld [vmem:[%s5 + $0x8] sm:$0xff]
      %v1420 = vld [vmem:[%s5 + $0x10] sm:$0xff]
      %v1421 = vld [vmem:[%s5 + $0x18] sm:$0xff]
      %v1422 = vld [vmem:[%s5 + $0x20] sm:$0xff]
      %v1423 = vld [vmem:[%s5 + $0x28] sm:$0xff]
      %v1424 = vld [vmem:[%s5 + $0x30] sm:$0xff]
      %v1425 = vld [vmem:[%s5 + $0x38] sm:$0xff]
      %v1426 = vld [vmem:[%s5 + $0x40] sm:$0xff]
      %v1427 = vld [vmem:[%s5 + $0x48] sm:$0xff]
      %v1428 = vld [vmem:[%s5 + $0x50] sm:$0xff]
      %v1429 = vld [vmem:[%s5 + $0x58] sm:$0xff]
      %v1430 = vld [vmem:[%s5 + $0x60] sm:$0xff]
      %v1431 = vld [vmem:[%s5 + $0x68] sm:$0xff]
      %v1432 = vld [vmem:[%s5 + $0x70] sm:$0xff]
      %v1433 = vld [vmem:[%s5 + $0x78] sm:$0xff]
      %v1434 = vld [vmem:[%s6] sm:$0x3]
      %v1436 = vlaneseq
      %v1437 = vshrl.u32 %v1436, 7
      %v1438 = vsub.s32 0, %v1437
      %v1439 = vrot.slane %v1434, %v1438
      %v1440 = vlaneseq
      %v1441 = vshrl.u32 %v1440, 7
      %v1442 = vsub.s32 1, %v1441
      %v1443 = vrot.slane %v1434, %v1442
      %v1462 = vunpack.c.l.b16 %v1418
      %v1463 = vunpack.c.h.b16 %v1418
      %v1464 = vunpack.c.l.b16 %v1419
      %v1465 = vunpack.c.h.b16 %v1419
      %v1466 = vunpack.c.l.b16 %v1420
      %v1467 = vunpack.c.h.b16 %v1420
      %v1468 = vunpack.c.l.b16 %v1421
      %v1469 = vunpack.c.h.b16 %v1421
      %v1470 = vunpack.c.l.b16 %v1422
      %v1471 = vunpack.c.h.b16 %v1422
      %v1472 = vunpack.c.l.b16 %v1423
      %v1473 = vunpack.c.h.b16 %v1423
      %v1474 = vunpack.c.l.b16 %v1424
      %v1475 = vunpack.c.h.b16 %v1424
      %v1476 = vunpack.c.l.b16 %v1425
      %v1477 = vunpack.c.h.b16 %v1425
      %v1478 = vunpack.c.l.b16 %v1426
      %v1479 = vunpack.c.h.b16 %v1426
      %v1480 = vunpack.c.l.b16 %v1427
      %v1481 = vunpack.c.h.b16 %v1427
      %v1482 = vunpack.c.l.b16 %v1428
      %v1483 = vunpack.c.h.b16 %v1428
      %v1484 = vunpack.c.l.b16 %v1429
      %v1485 = vunpack.c.h.b16 %v1429
      %v1486 = vunpack.c.l.b16 %v1430
      %v1487 = vunpack.c.h.b16 %v1430
      %v1488 = vunpack.c.l.b16 %v1431
      %v1489 = vunpack.c.h.b16 %v1431
      %v1490 = vunpack.c.l.b16 %v1432
      %v1491 = vunpack.c.h.b16 %v1432
      %v1492 = vunpack.c.l.b16 %v1433
      %v1493 = vunpack.c.h.b16 %v1433
      %v1494 = vpack.c.b16 %v1464, %v1462
      %v1495 = vpack.c.b16 %v1465, %v1463
      %v1496 = vpack.c.b16 %v1468, %v1466
      %v1497 = vpack.c.b16 %v1469, %v1467
      %v1498 = vpack.c.b16 %v1472, %v1470
      %v1499 = vpack.c.b16 %v1473, %v1471
      %v1500 = vpack.c.b16 %v1476, %v1474
      %v1501 = vpack.c.b16 %v1477, %v1475
      %v1502 = vpack.c.b16 %v1480, %v1478
      %v1503 = vpack.c.b16 %v1481, %v1479
      %v1504 = vpack.c.b16 %v1484, %v1482
      %v1505 = vpack.c.b16 %v1485, %v1483
      %v1506 = vpack.c.b16 %v1488, %v1486
      %v1507 = vpack.c.b16 %v1489, %v1487
      %v1508 = vpack.c.b16 %v1492, %v1490
      %v1509 = vpack.c.b16 %v1493, %v1491
      %1526 = vmatprep.subr.bf16.mxu0 %v1495
      %1527 = vmatpush1.bf16.msra.mxu0 %v1494
      %1528 = vmatprep.subr.bf16.mxu0 %v1497
      %1529 = vmatpush1.bf16.msra.mxu0 %v1496
      %1530 = vmatprep.subr.bf16.mxu0 %v1499
      %1531 = vmatpush1.bf16.msra.mxu0 %v1498
      %1532 = vmatprep.subr.bf16.mxu0 %v1501
      %1533 = vmatpush1.bf16.msra.mxu0 %v1500
      %1534 = vmatprep.subr.bf16.mxu0 %v1503
      %1535 = vmatpush1.bf16.msra.mxu0 %v1502
      %1536 = vmatprep.subr.bf16.mxu0 %v1505
      %1537 = vmatpush1.bf16.msra.mxu0 %v1504
      %1538 = vmatprep.subr.bf16.mxu0 %v1507
      %1539 = vmatpush1.bf16.msra.mxu0 %v1506
      %1540 = vmatprep.subr.bf16.mxu0 %v1509
      %1541 = vmatpush1.bf16.msra.mxu0 %v1508
      %1542 = vmatprep.subr.bf16.mxu0 0
      %1543 = vmatpush1.bf16.msra.mxu0 0
      %1544 = vmatprep.subr.bf16.mxu0 0
      %1545 = vmatpush1.bf16.msra.mxu0 0
      %1546 = vmatprep.subr.bf16.mxu0 0
      %1547 = vmatpush1.bf16.msra.mxu0 0
      %1548 = vmatprep.subr.bf16.mxu0 0
      %1549 = vmatpush1.bf16.msra.mxu0 0
      %1550 = vmatprep.subr.bf16.mxu0 0
      %1551 = vmatpush1.bf16.msra.mxu0 0
      %1552 = vmatprep.subr.bf16.mxu0 0
      %1553 = vmatpush1.bf16.msra.mxu0 0
      %1554 = vmatprep.subr.bf16.mxu0 0
      %1555 = vmatpush1.bf16.msra.mxu0 0
      %1556 = vmatprep.subr.bf16.mxu0 0
      %1557 = vmatpush1.bf16.msra.mxu0 0
      %1558 = vmatprep.mubr.bf16.mxu0 0
      %1559 = vmatmul.mubr.bf16.gmra.mrb[0].mxu0 %v1402
      %v1560 = vpop.f32.mrb[0].mxu0
      %v1561 = vadd.f32 %v1439, %v1560
      %v1562 = vpop.f32.mrb[0].mxu0
      %v1563 = vadd.f32 %v1443, %v1562
      %v1564 = vpop.f32.mrb[0].mxu0
      %v1565 = vadd.f32 %v1439, %v1564
      %v1566 = vpop.f32.mrb[0].mxu0
      %v1567 = vadd.f32 %v1443, %v1566
      %1568 = vmatprep.mubr.bf16.mxu0 0
      %1569 = vmatmul.mubr.bf16.gmra.mrb[0].mxu0 %v1403
      %v1570 = vpop.f32.mrb[0].mxu0
      %v1571 = vadd.f32 %v1439, %v1570
      %v1572 = vpop.f32.mrb[0].mxu0
      %v1573 = vadd.f32 %v1443, %v1572
      %v1574 = vpop.f32.mrb[0].mxu0
      %v1575 = vadd.f32 %v1439, %v1574
      %v1576 = vpop.f32.mrb[0].mxu0
      %v1577 = vadd.f32 %v1443, %v1576
      %1578 = vmatprep.mubr.bf16.mxu0 0
      %1579 = vmatmul.mubr.bf16.gmra.mrb[0].mxu0 %v1404
      %v1580 = vpop.f32.mrb[0].mxu0
      %v1581 = vadd.f32 %v1439, %v1580
      %v1582 = vpop.f32.mrb[0].mxu0
      %v1583 = vadd.f32 %v1443, %v1582
      %v1584 = vpop.f32.mrb[0].mxu0
      %v1585 = vadd.f32 %v1439, %v1584
      %v1586 = vpop.f32.mrb[0].mxu0
      %v1587 = vadd.f32 %v1443, %v1586
      %1588 = vmatprep.mubr.bf16.mxu0 0
      %1589 = vmatmul.mubr.bf16.gmra.mrb[0].mxu0 %v1405
      %v1590 = vpop.f32.mrb[0].mxu0
      %v1591 = vadd.f32 %v1439, %v1590
      %v1592 = vpop.f32.mrb[0].mxu0
      %v1593 = vadd.f32 %v1443, %v1592
      %v1594 = vpop.f32.mrb[0].mxu0
      %v1595 = vadd.f32 %v1439, %v1594
      %v1596 = vpop.f32.mrb[0].mxu0
      %v1597 = vadd.f32 %v1443, %v1596
      %1598 = vmatprep.mubr.bf16.mxu0 0
      %1599 = vmatmul.mubr.bf16.gmra.mrb[0].mxu0 %v1406
      %v1600 = vpop.f32.mrb[0].mxu0
      %v1601 = vadd.f32 %v1439, %v1600
      %v1602 = vpop.f32.mrb[0].mxu0
      %v1603 = vadd.f32 %v1443, %v1602
      %v1604 = vpop.f32.mrb[0].mxu0
      %v1605 = vadd.f32 %v1439, %v1604
      %v1606 = vpop.f32.mrb[0].mxu0
      %v1607 = vadd.f32 %v1443, %v1606
      %1608 = vmatprep.mubr.bf16.mxu0 0
      %1609 = vmatmul.mubr.bf16.gmra.mrb[0].mxu0 %v1407
      %v1610 = vpop.f32.mrb[0].mxu0
      %v1611 = vadd.f32 %v1439, %v1610
      %v1612 = vpop.f32.mrb[0].mxu0
      %v1613 = vadd.f32 %v1443, %v1612
      %v1614 = vpop.f32.mrb[0].mxu0
      %v1615 = vadd.f32 %v1439, %v1614
      %v1616 = vpop.f32.mrb[0].mxu0
      %v1617 = vadd.f32 %v1443, %v1616
      %1618 = vmatprep.mubr.bf16.mxu0 0
      %1619 = vmatmul.mubr.bf16.gmra.mrb[0].mxu0 %v1408
      %v1620 = vpop.f32.mrb[0].mxu0
      %v1621 = vadd.f32 %v1439, %v1620
      %v1622 = vpop.f32.mrb[0].mxu0
      %v1623 = vadd.f32 %v1443, %v1622
      %v1624 = vpop.f32.mrb[0].mxu0
      %v1625 = vadd.f32 %v1439, %v1624
      %v1626 = vpop.f32.mrb[0].mxu0
      %v1627 = vadd.f32 %v1443, %v1626
      %1628 = vmatprep.mubr.bf16.mxu0 0
      %1629 = vmatmul.mubr.bf16.gmra.mrb[0].mxu0 %v1409
      %v1630 = vpop.f32.mrb[0].mxu0
      %v1631 = vadd.f32 %v1439, %v1630
      %v1632 = vpop.f32.mrb[0].mxu0
      %v1633 = vadd.f32 %v1443, %v1632
      %v1634 = vpop.f32.mrb[0].mxu0
      %v1635 = vadd.f32 %v1439, %v1634
      %v1636 = vpop.f32.mrb[0].mxu0
      %v1637 = vadd.f32 %v1443, %v1636
      %1638 = vmatprep.mubr.bf16.mxu0 0
      %1639 = vmatmul.mubr.bf16.gmra.mrb[0].mxu0 %v1410
      %v1640 = vpop.f32.mrb[0].mxu0
      %v1641 = vadd.f32 %v1439, %v1640
      %v1642 = vpop.f32.mrb[0].mxu0
      %v1643 = vadd.f32 %v1443, %v1642
      %v1644 = vpop.f32.mrb[0].mxu0
      %v1645 = vadd.f32 %v1439, %v1644
      %v1646 = vpop.f32.mrb[0].mxu0
      %v1647 = vadd.f32 %v1443, %v1646
      %1648 = vmatprep.mubr.bf16.mxu0 0
      %1649 = vmatmul.mubr.bf16.gmra.mrb[0].mxu0 %v1411
      %v1650 = vpop.f32.mrb[0].mxu0
      %v1651 = vadd.f32 %v1439, %v1650
      %v1652 = vpop.f32.mrb[0].mxu0
      %v1653 = vadd.f32 %v1443, %v1652
      %v1654 = vpop.f32.mrb[0].mxu0
      %v1655 = vadd.f32 %v1439, %v1654
      %v1656 = vpop.f32.mrb[0].mxu0
      %v1657 = vadd.f32 %v1443, %v1656
      %1658 = vmatprep.mubr.bf16.mxu0 0
      %1659 = vmatmul.mubr.bf16.gmra.mrb[0].mxu0 %v1412
      %v1660 = vpop.f32.mrb[0].mxu0
      %v1661 = vadd.f32 %v1439, %v1660
      %v1662 = vpop.f32.mrb[0].mxu0
      %v1663 = vadd.f32 %v1443, %v1662
      %v1664 = vpop.f32.mrb[0].mxu0
      %v1665 = vadd.f32 %v1439, %v1664
      %v1666 = vpop.f32.mrb[0].mxu0
      %v1667 = vadd.f32 %v1443, %v1666
      %1668 = vmatprep.mubr.bf16.mxu0 0
      %1669 = vmatmul.mubr.bf16.gmra.mrb[0].mxu0 %v1413
      %v1670 = vpop.f32.mrb[0].mxu0
      %v1671 = vadd.f32 %v1439, %v1670
      %v1672 = vpop.f32.mrb[0].mxu0
      %v1673 = vadd.f32 %v1443, %v1672
      %v1674 = vpop.f32.mrb[0].mxu0
      %v1675 = vadd.f32 %v1439, %v1674
      %v1676 = vpop.f32.mrb[0].mxu0
      %v1677 = vadd.f32 %v1443, %v1676
      %1678 = vmatprep.mubr.bf16.mxu0 0
      %1679 = vmatmul.mubr.bf16.gmra.mrb[0].mxu0 %v1414
      %v1680 = vpop.f32.mrb[0].mxu0
      %v1681 = vadd.f32 %v1439, %v1680
      %v1682 = vpop.f32.mrb[0].mxu0
      %v1683 = vadd.f32 %v1443, %v1682
      %v1684 = vpop.f32.mrb[0].mxu0
      %v1685 = vadd.f32 %v1439, %v1684
      %v1686 = vpop.f32.mrb[0].mxu0
      %v1687 = vadd.f32 %v1443, %v1686
      %1688 = vmatprep.mubr.bf16.mxu0 0
      %1689 = vmatmul.mubr.bf16.gmra.mrb[0].mxu0 %v1415
      %v1690 = vpop.f32.mrb[0].mxu0
      %v1691 = vadd.f32 %v1439, %v1690
      %v1692 = vpop.f32.mrb[0].mxu0
      %v1693 = vadd.f32 %v1443, %v1692
      %v1694 = vpop.f32.mrb[0].mxu0
      %v1695 = vadd.f32 %v1439, %v1694
      %v1696 = vpop.f32.mrb[0].mxu0
      %v1697 = vadd.f32 %v1443, %v1696
      %1698 = vmatprep.mubr.bf16.mxu0 0
      %1699 = vmatmul.mubr.bf16.gmra.mrb[0].mxu0 %v1416
      %v1700 = vpop.f32.mrb[0].mxu0
      %v1701 = vadd.f32 %v1439, %v1700
      %v1702 = vpop.f32.mrb[0].mxu0
      %v1703 = vadd.f32 %v1443, %v1702
      %v1704 = vpop.f32.mrb[0].mxu0
      %v1705 = vadd.f32 %v1439, %v1704
      %v1706 = vpop.f32.mrb[0].mxu0
      %v1707 = vadd.f32 %v1443, %v1706
      %1708 = vmatprep.mubr.bf16.mxu0 0
      %1709 = vmatmul.mubr.bf16.gmra.mrb[0].mxu0 %v1417
      %v1710 = vpop.f32.mrb[0].mxu0
      %v1711 = vadd.f32 %v1439, %v1710
      %v1712 = vpop.f32.mrb[0].mxu0
      %v1713 = vadd.f32 %v1443, %v1712
      %v1714 = vpop.f32.mrb[0].mxu0
      %v1715 = vadd.f32 %v1439, %v1714
      %v1716 = vpop.f32.mrb[0].mxu0
      %v1717 = vadd.f32 %v1443, %v1716
      %1718 = vdwg.mxu0
      %v1719 = vpack.c.bf16 %v1565, %v1561
      %v1720 = vpack.c.bf16 %v1567, %v1563
      %v1721 = vpack.c.bf16 %v1575, %v1571
      %v1722 = vpack.c.bf16 %v1577, %v1573
      %v1723 = vpack.c.bf16 %v1585, %v1581
      %v1724 = vpack.c.bf16 %v1587, %v1583
      %v1725 = vpack.c.bf16 %v1595, %v1591
      %v1726 = vpack.c.bf16 %v1597, %v1593
      %v1727 = vpack.c.bf16 %v1605, %v1601
      %v1728 = vpack.c.bf16 %v1607, %v1603
      %v1729 = vpack.c.bf16 %v1615, %v1611
      %v1730 = vpack.c.bf16 %v1617, %v1613
      %v1731 = vpack.c.bf16 %v1625, %v1621
      %v1732 = vpack.c.bf16 %v1627, %v1623
      %v1733 = vpack.c.bf16 %v1635, %v1631
      %v1734 = vpack.c.bf16 %v1637, %v1633
      %v1735 = vpack.c.bf16 %v1645, %v1641
      %v1736 = vpack.c.bf16 %v1647, %v1643
      %v1737 = vpack.c.bf16 %v1655, %v1651
      %v1738 = vpack.c.bf16 %v1657, %v1653
      %v1739 = vpack.c.bf16 %v1665, %v1661
      %v1740 = vpack.c.bf16 %v1667, %v1663
      %v1741 = vpack.c.bf16 %v1675, %v1671
      %v1742 = vpack.c.bf16 %v1677, %v1673
      %v1743 = vpack.c.bf16 %v1685, %v1681
      %v1744 = vpack.c.bf16 %v1687, %v1683
      %v1745 = vpack.c.bf16 %v1695, %v1691
      %v1746 = vpack.c.bf16 %v1697, %v1693
      %v1747 = vpack.c.bf16 %v1705, %v1701
      %v1748 = vpack.c.bf16 %v1707, %v1703
      %v1749 = vpack.c.bf16 %v1715, %v1711
      %v1750 = vpack.c.bf16 %v1717, %v1713
      %v1783 = vunpack.c.l.b16 %v1719
      %v1784 = vunpack.c.l.b16 %v1720
      %v1785 = vunpack.c.h.b16 %v1719
      %v1786 = vunpack.c.h.b16 %v1720
      %v1787 = vunpack.c.l.b16 %v1721
      %v1788 = vunpack.c.l.b16 %v1722
      %v1789 = vunpack.c.h.b16 %v1721
      %v1790 = vunpack.c.h.b16 %v1722
      %v1791 = vunpack.c.l.b16 %v1723
      %v1792 = vunpack.c.l.b16 %v1724
      %v1793 = vunpack.c.h.b16 %v1723
      %v1794 = vunpack.c.h.b16 %v1724
      %v1795 = vunpack.c.l.b16 %v1725
      %v1796 = vunpack.c.l.b16 %v1726
      %v1797 = vunpack.c.h.b16 %v1725
      %v1798 = vunpack.c.h.b16 %v1726
      %v1799 = vunpack.c.l.b16 %v1727
      %v1800 = vunpack.c.l.b16 %v1728
      %v1801 = vunpack.c.h.b16 %v1727
      %v1802 = vunpack.c.h.b16 %v1728
      %v1803 = vunpack.c.l.b16 %v1729
      %v1804 = vunpack.c.l.b16 %v1730
      %v1805 = vunpack.c.h.b16 %v1729
      %v1806 = vunpack.c.h.b16 %v1730
      %v1807 = vunpack.c.l.b16 %v1731
      %v1808 = vunpack.c.l.b16 %v1732
      %v1809 = vunpack.c.h.b16 %v1731
      %v1810 = vunpack.c.h.b16 %v1732
      %v1811 = vunpack.c.l.b16 %v1733
      %v1812 = vunpack.c.l.b16 %v1734
      %v1813 = vunpack.c.h.b16 %v1733
      %v1814 = vunpack.c.h.b16 %v1734
      %v1815 = vunpack.c.l.b16 %v1735
      %v1816 = vunpack.c.l.b16 %v1736
      %v1817 = vunpack.c.h.b16 %v1735
      %v1818 = vunpack.c.h.b16 %v1736
      %v1819 = vunpack.c.l.b16 %v1737
      %v1820 = vunpack.c.l.b16 %v1738
      %v1821 = vunpack.c.h.b16 %v1737
      %v1822 = vunpack.c.h.b16 %v1738
      %v1823 = vunpack.c.l.b16 %v1739
      %v1824 = vunpack.c.l.b16 %v1740
      %v1825 = vunpack.c.h.b16 %v1739
      %v1826 = vunpack.c.h.b16 %v1740
      %v1827 = vunpack.c.l.b16 %v1741
      %v1828 = vunpack.c.l.b16 %v1742
      %v1829 = vunpack.c.h.b16 %v1741
      %v1830 = vunpack.c.h.b16 %v1742
      %v1831 = vunpack.c.l.b16 %v1743
      %v1832 = vunpack.c.l.b16 %v1744
      %v1833 = vunpack.c.h.b16 %v1743
      %v1834 = vunpack.c.h.b16 %v1744
      %v1835 = vunpack.c.l.b16 %v1745
      %v1836 = vunpack.c.l.b16 %v1746
      %v1837 = vunpack.c.h.b16 %v1745
      %v1838 = vunpack.c.h.b16 %v1746
      %v1839 = vunpack.c.l.b16 %v1747
      %v1840 = vunpack.c.l.b16 %v1748
      %v1841 = vunpack.c.h.b16 %v1747
      %v1842 = vunpack.c.h.b16 %v1748
      %v1843 = vunpack.c.l.b16 %v1749
      %v1844 = vunpack.c.l.b16 %v1750
      %v1845 = vunpack.c.h.b16 %v1749
      %v1846 = vunpack.c.h.b16 %v1750
      %v1847 = vpack.c.b16 %v1784, %v1783
      %v1848 = vpack.c.b16 %v1786, %v1785
      %v1849 = vpack.c.b16 %v1788, %v1787
      %v1850 = vpack.c.b16 %v1790, %v1789
      %v1851 = vpack.c.b16 %v1792, %v1791
      %v1852 = vpack.c.b16 %v1794, %v1793
      %v1853 = vpack.c.b16 %v1796, %v1795
      %v1854 = vpack.c.b16 %v1798, %v1797
      %v1855 = vpack.c.b16 %v1800, %v1799
      %v1856 = vpack.c.b16 %v1802, %v1801
      %v1857 = vpack.c.b16 %v1804, %v1803
      %v1858 = vpack.c.b16 %v1806, %v1805
      %v1859 = vpack.c.b16 %v1808, %v1807
      %v1860 = vpack.c.b16 %v1810, %v1809
      %v1861 = vpack.c.b16 %v1812, %v1811
      %v1862 = vpack.c.b16 %v1814, %v1813
      %v1863 = vpack.c.b16 %v1816, %v1815
      %v1864 = vpack.c.b16 %v1818, %v1817
      %v1865 = vpack.c.b16 %v1820, %v1819
      %v1866 = vpack.c.b16 %v1822, %v1821
      %v1867 = vpack.c.b16 %v1824, %v1823
      %v1868 = vpack.c.b16 %v1826, %v1825
      %v1869 = vpack.c.b16 %v1828, %v1827
      %v1870 = vpack.c.b16 %v1830, %v1829
      %v1871 = vpack.c.b16 %v1832, %v1831
      %v1872 = vpack.c.b16 %v1834, %v1833
      %v1873 = vpack.c.b16 %v1836, %v1835
      %v1874 = vpack.c.b16 %v1838, %v1837
      %v1875 = vpack.c.b16 %v1840, %v1839
      %v1876 = vpack.c.b16 %v1842, %v1841
      %v1877 = vpack.c.b16 %v1844, %v1843
      %v1878 = vpack.c.b16 %v1846, %v1845
      %1911 = vst [vmem:[%s7] sm:$0xff] %v1847
      %1912 = vst [vmem:[%s7 + $0x8] sm:$0xff] %v1848
      %1913 = vst [vmem:[%s7 + $0x10] sm:$0xff] %v1849
      %1914 = vst [vmem:[%s7 + $0x18] sm:$0xff] %v1850
      %1915 = vst [vmem:[%s7 + $0x20] sm:$0xff] %v1851
      %1916 = vst [vmem:[%s7 + $0x28] sm:$0xff] %v1852
      %1917 = vst [vmem:[%s7 + $0x30] sm:$0xff] %v1853
      %1918 = vst [vmem:[%s7 + $0x38] sm:$0xff] %v1854
      %1919 = vst [vmem:[%s7 + $0x40] sm:$0xff] %v1855
      %1920 = vst [vmem:[%s7 + $0x48] sm:$0xff] %v1856
      %1921 = vst [vmem:[%s7 + $0x50] sm:$0xff] %v1857
      %1922 = vst [vmem:[%s7 + $0x58] sm:$0xff] %v1858
      %1923 = vst [vmem:[%s7 + $0x60] sm:$0xff] %v1859
      %1924 = vst [vmem:[%s7 + $0x68] sm:$0xff] %v1860
      %1925 = vst [vmem:[%s7 + $0x70] sm:$0xff] %v1861
      %1926 = vst [vmem:[%s7 + $0x78] sm:$0xff] %v1862
      %1927 = vst [vmem:[%s7 + $0x80] sm:$0xff] %v1863
      %1928 = vst [vmem:[%s7 + $0x88] sm:$0xff] %v1864
      %1929 = vst [vmem:[%s7 + $0x90] sm:$0xff] %v1865
      %1930 = vst [vmem:[%s7 + $0x98] sm:$0xff] %v1866
      %1931 = vst [vmem:[%s7 + $0xa0] sm:$0xff] %v1867
      %1932 = vst [vmem:[%s7 + $0xa8] sm:$0xff] %v1868
      %1933 = vst [vmem:[%s7 + $0xb0] sm:$0xff] %v1869
      %1934 = vst [vmem:[%s7 + $0xb8] sm:$0xff] %v1870
      %1935 = vst [vmem:[%s7 + $0xc0] sm:$0xff] %v1871
      %1936 = vst [vmem:[%s7 + $0xc8] sm:$0xff] %v1872
      %1937 = vst [vmem:[%s7 + $0xd0] sm:$0xff] %v1873
      %1938 = vst [vmem:[%s7 + $0xd8] sm:$0xff] %v1874
      %1939 = vst [vmem:[%s7 + $0xe0] sm:$0xff] %v1875
      %1940 = vst [vmem:[%s7 + $0xe8] sm:$0xff] %v1876
      %1941 = vst [vmem:[%s7 + $0xf0] sm:$0xff] %v1877
      %1942 = vst [vmem:[%s7 + $0xf8] sm:$0xff] %v1878
    $region119: #{gnn_sage_forward.4} parent=1 // pred_fallthru
      _
    // Predicated region
    $region120: #{gnn_sage_forward.4} parent=1 // pred_check
      _
    $region121: #{gnn_sage_forward.4} parent=1 // pred_check_branch
      %1944 = sbr.rel (0) target = $region123
    $region122: #{gnn_sage_forward.4} parent=1 // pred_region
      _
    $region123: #{gnn_sage_forward.4} parent=1 // pred_fallthru
      _
    // Predicated region
    $region124: #{gnn_sage_forward.4} parent=1 // pred_check
      _
    $region125: #{gnn_sage_forward.4} parent=1 // pred_check_branch
      %1946 = sbr.rel (0) target = $region127
    $region126: #{gnn_sage_forward.4} parent=1 // pred_region
      _
    $region127: #{gnn_sage_forward.4} parent=1 // pred_fallthru
      _

</llo_original>
